<compile_context>
chip_gen: v6e
topology: v6e:2x2x1
jax: 0.10.0
libtpu: 0.0.40
codegen_flags: <defaults>
</compile_context>

<pallas_src>
import functools

import jax
import jax.numpy as jnp
from jax.experimental import pallas as pl
from jax.experimental.pallas import tpu as pltpu

_LANE = 128
_SUBLANE = 8


def _round_up(n, m):
    return ((n + m - 1) // m) * m


def _fused_lstm_fc_kernel(num_layers, seq_len, b_pad, h_pad, *refs):
    """Whole forward pass (all LSTM layers + FC) in one kernel invocation.

    refs layout:
      inputs : x_ref (T*Bp, Dp),
               [wih_l (D_l, 4Hp), whh_l (Hp, 4Hp), b_l (1, 4Hp)] * num_layers,
               wfc (Hp, Op), bfc (1, Op)
      outputs: out_ref (Bp, Op)                      -- lane-dense
      scratch: act_ref (T*Bp, Hp)   -- inter-layer hidden states (VMEM only)
               xg_ref  (T*Bp, 4Hp)  -- hoisted input projection of one layer
    """
    idx = 0
    x_ref = refs[idx]; idx += 1
    layer_refs = []
    for _ in range(num_layers):
        layer_refs.append((refs[idx], refs[idx + 1], refs[idx + 2]))
        idx += 3
    wfc_ref = refs[idx]; idx += 1
    bfc_ref = refs[idx]; idx += 1
    out_ref = refs[idx]; idx += 1
    act_ref = refs[idx]; idx += 1
    xg_ref = refs[idx]; idx += 1

    h = None
    for layer in range(num_layers):
        wih_ref, whh_ref, b_ref = layer_refs[layer]
        src_ref = x_ref if layer == 0 else act_ref

        # Hoisted input projection for every timestep at once (+ fused bias):
        # one big MXU GEMM off the serial critical path.
        xg_ref[...] = (
            jnp.dot(src_ref[...], wih_ref[...],
                    preferred_element_type=jnp.float32)
            + b_ref[...]
        )

        h = jnp.zeros((b_pad, h_pad), jnp.float32)
        c = jnp.zeros((b_pad, h_pad), jnp.float32)

        # Fully unrolled recurrence (T is small and static); only the
        # (Bp, Hp) @ (Hp, 4Hp) matmul remains serial per step.
        for t in range(seq_len):
            gates = xg_ref[t * b_pad:(t + 1) * b_pad, :] + jnp.dot(
                h, whh_ref[...], preferred_element_type=jnp.float32)
            # PyTorch gate order: input, forget, cell(g), output.
            # Slices are 128-lane-aligned because Hp is a multiple of 128.
            i = jax.nn.sigmoid(gates[:, 0 * h_pad:1 * h_pad])
            f = jax.nn.sigmoid(gates[:, 1 * h_pad:2 * h_pad])
            g = jnp.tanh(gates[:, 2 * h_pad:3 * h_pad])
            o = jax.nn.sigmoid(gates[:, 3 * h_pad:4 * h_pad])
            c = f * c + i * g
            h = o * jnp.tanh(c)
            if layer < num_layers - 1:
                # Hidden state feeds the next layer; stays resident in VMEM.
                act_ref[t * b_pad:(t + 1) * b_pad, :] = h
        # After the last layer, `h` is h_{T-1} == out[:, -1, :].

    out_ref[...] = (
        jnp.dot(h, wfc_ref[...], preferred_element_type=jnp.float32)
        + bfc_ref[...]
    )


def init_params(key, input_dim, hidden_dim, num_layers, output_dim):
    """Deterministic init mimicking PyTorch's U(-1/sqrt(H), 1/sqrt(H))."""
    params = {"lstm": [], "fc": None}
    k = 1.0 / jnp.sqrt(hidden_dim)
    keys = jax.random.split(key, num_layers * 4 + 2)
    ki = 0
    for layer in range(num_layers):
        d_in = input_dim if layer == 0 else hidden_dim
        w_ih = jax.random.uniform(keys[ki + 0], (4 * hidden_dim, d_in),
                                  jnp.float32, -k, k)
        w_hh = jax.random.uniform(keys[ki + 1], (4 * hidden_dim, hidden_dim),
                                  jnp.float32, -k, k)
        b_ih = jax.random.uniform(keys[ki + 2], (4 * hidden_dim,),
                                  jnp.float32, -k, k)
        b_hh = jax.random.uniform(keys[ki + 3], (4 * hidden_dim,),
                                  jnp.float32, -k, k)
        ki += 4
        params["lstm"].append((w_ih, w_hh, b_ih, b_hh))
    w_fc = jax.random.uniform(keys[ki + 0], (output_dim, hidden_dim),
                              jnp.float32, -k, k)
    b_fc = jax.random.uniform(keys[ki + 1], (output_dim,),
                              jnp.float32, -k, k)
    params["fc"] = (w_fc, b_fc)
    return params


def prepare_params(params_lstm, params_fc, input_dim, hidden_dim, output_dim):
    """One-time padding / transposition / bias fusion (outside the jit graph).

    Weights are padded per-gate so that in-kernel gate slices are 128-lane
    aligned; padded bias lanes are zero so padded h/c lanes stay exactly zero.
    """
    h_pad = _round_up(hidden_dim, _LANE)
    o_pad = _round_up(output_dim, _LANE)
    H = hidden_dim
    prepared_layers = []
    for layer, (w_ih, w_hh, b_ih, b_hh) in enumerate(params_lstm):
        d_in = input_dim if layer == 0 else hidden_dim
        d_pad = _round_up(d_in, _LANE) if layer == 0 else h_pad
        # (4H, D) -> per-gate pad -> transpose -> (Dp, 4Hp)
        w_ih4 = jnp.pad(w_ih.reshape(4, H, d_in),
                        ((0, 0), (0, h_pad - H), (0, d_pad - d_in)))
        wih_t = jnp.transpose(w_ih4.reshape(4 * h_pad, d_pad))
        w_hh4 = jnp.pad(w_hh.reshape(4, H, hidden_dim),
                        ((0, 0), (0, h_pad - H), (0, h_pad - hidden_dim)))
        whh_t = jnp.transpose(w_hh4.reshape(4 * h_pad, h_pad))
        b = jnp.pad((b_ih + b_hh).reshape(4, H), ((0, 0), (0, h_pad - H)))
        b = b.reshape(1, 4 * h_pad)
        prepared_layers.append((wih_t, whh_t, b))
    w_fc, b_fc = params_fc
    wfc_t = jnp.transpose(jnp.pad(
        w_fc, ((0, o_pad - output_dim), (0, h_pad - hidden_dim))))
    bfc = jnp.pad(b_fc, (0, o_pad - output_dim)).reshape(1, o_pad)
    return prepared_layers, (wfc_t, bfc)


@functools.partial(jax.jit, static_argnames=("output_dim",))
def lstm_forward(x_btd, prepared_layers, prepared_fc, *, output_dim):
    """Forward pass matching LSTM_w5ekck5.forward. x_btd: (B, T, D)."""
    x = x_btd.astype(jnp.float32)
    B, T, D = x.shape
    b_pad = _round_up(B, _SUBLANE)
    num_layers = len(prepared_layers)
    d_pad = prepared_layers[0][0].shape[0]     # Wih_0: (Dp, 4Hp)
    h_pad = prepared_layers[0][1].shape[0]     # Whh:   (Hp, 4Hp)
    o_pad = prepared_fc[0].shape[1]            # Wfc:   (Hp, Op)

    # (B, T, D) -> time-major, pad batch to sublanes and features to lanes,
    # flatten time into rows: (T*Bp, Dp).
    x_t = jnp.transpose(x, (1, 0, 2))
    x_t = jnp.pad(x_t, ((0, 0), (0, b_pad - B), (0, d_pad - D)))
    x_flat = x_t.reshape(T * b_pad, d_pad)

    flat_inputs = [x_flat]
    for (wih_t, whh_t, b) in prepared_layers:
        flat_inputs += [wih_t, whh_t, b]
    flat_inputs += [prepared_fc[0], prepared_fc[1]]

    vmem = pl.BlockSpec(memory_space=pltpu.MemorySpace.VMEM)
    kernel = functools.partial(_fused_lstm_fc_kernel,
                               num_layers, T, b_pad, h_pad)
    out_pad = pl.pallas_call(
        kernel,
        out_shape=jax.ShapeDtypeStruct((b_pad, o_pad), jnp.float32),
        in_specs=[vmem] * len(flat_inputs),
        out_specs=vmem,
        scratch_shapes=[
            pltpu.VMEM((T * b_pad, h_pad), jnp.float32),      # inter-layer acts
            pltpu.VMEM((T * b_pad, 4 * h_pad), jnp.float32),  # hoisted x @ Wih
        ],
    )(*flat_inputs)
    return out_pad[:B, :output_dim]


def _reference_forward(x_btd, params_lstm, params_fc):
    """Pure-JAX reference (unpadded) for a correctness check."""
    B, T, _ = x_btd.shape
    layer_in = x_btd.astype(jnp.float32)
    for (w_ih, w_hh, b_ih, b_hh) in params_lstm:
        H = w_hh.shape[1]
        h = jnp.zeros((B, H), jnp.float32)
        c = jnp.zeros((B, H), jnp.float32)
        outs = []
        for t in range(T):
            gates = layer_in[:, t, :] @ w_ih.T + h @ w_hh.T + b_ih + b_hh
            i = jax.nn.sigmoid(gates[:, 0 * H:1 * H])
            f = jax.nn.sigmoid(gates[:, 1 * H:2 * H])
            g = jnp.tanh(gates[:, 2 * H:3 * H])
            o = jax.nn.sigmoid(gates[:, 3 * H:4 * H])
            c = f * c + i * g
            h = o * jnp.tanh(c)
            outs.append(h)
        layer_in = jnp.stack(outs, axis=1)
    w_fc, b_fc = params_fc
    return layer_in[:, -1, :] @ w_fc.T + b_fc


if __name__ == "__main__":
    # Small shapes consistent with the module: batch=2, seq=8, input=16,
    # hidden=32, num_layers=2, output=4.
    B, T, INPUT_DIM, HIDDEN_DIM, NUM_LAYERS, OUTPUT_DIM = 2, 8, 16, 32, 2, 4

    key = jax.random.PRNGKey(0)
    k_x, k_p = jax.random.split(key)
    x = jax.random.normal(k_x, (B, T, INPUT_DIM), jnp.float32)
    params = init_params(k_p, INPUT_DIM, HIDDEN_DIM, NUM_LAYERS, OUTPUT_DIM)
    prepared_layers, prepared_fc = prepare_params(
        params["lstm"], params["fc"], INPUT_DIM, HIDDEN_DIM, OUTPUT_DIM)

    out = lstm_forward(x, prepared_layers, prepared_fc, output_dim=OUTPUT_DIM)
    out = jax.block_until_ready(out)
    assert out.shape == (B, OUTPUT_DIM)

    ref = _reference_forward(x, params["lstm"], params["fc"])
    assert jnp.allclose(out, ref, atol=1e-4, rtol=1e-4), \
        float(jnp.max(jnp.abs(out - ref)))

    print("KERNEL_OK")
</pallas_src>

<mosaic_0001>
module attributes {stable_mosaic.version = 11 : i64} {
  func.func @_fused_lstm_fc_kernel(%arg0: memref<64x128xf32, #tpu.memory_space<vmem>>, %arg1: memref<128x512xf32, #tpu.memory_space<vmem>>, %arg2: memref<128x512xf32, #tpu.memory_space<vmem>>, %arg3: memref<1x512xf32, #tpu.memory_space<vmem>>, %arg4: memref<128x512xf32, #tpu.memory_space<vmem>>, %arg5: memref<128x512xf32, #tpu.memory_space<vmem>>, %arg6: memref<1x512xf32, #tpu.memory_space<vmem>>, %arg7: memref<128x128xf32, #tpu.memory_space<vmem>>, %arg8: memref<1x128xf32, #tpu.memory_space<vmem>>, %arg9: memref<8x128xf32, #tpu.memory_space<vmem>>, %arg10: memref<64x128xf32, #tpu.memory_space<vmem>>, %arg11: memref<64x512xf32, #tpu.memory_space<vmem>>) attributes {dimension_semantics = [], scalar_prefetch = 0 : i64, scratch_operands = 2 : i64, tpu.core_type = #tpu.core_type<tc>} {
    %c0 = arith.constant 0 : index
    %c0_0 = arith.constant 0 : index
    %0 = vector.load %arg0[%c0, %c0_0] : memref<64x128xf32, #tpu.memory_space<vmem>>, vector<64x128xf32>
    %c0_1 = arith.constant 0 : index
    %c0_2 = arith.constant 0 : index
    %1 = vector.load %arg1[%c0_1, %c0_2] : memref<128x512xf32, #tpu.memory_space<vmem>>, vector<128x512xf32>
    %cst = arith.constant dense<0.000000e+00> : vector<64x512xf32>
    %2 = tpu.matmul %0, %1, %cst {dimension_numbers = #tpu.dot_dimension_numbers<[1], [0], [0], [1], [0, 0, 1, 1], [], []>} : vector<64x128xf32>, vector<128x512xf32>, vector<64x512xf32> -> vector<64x512xf32>
    %c0_3 = arith.constant 0 : index
    %c0_4 = arith.constant 0 : index
    %3 = vector.load %arg3[%c0_3, %c0_4] : memref<1x512xf32, #tpu.memory_space<vmem>>, vector<1x512xf32>
    %4 = vector.broadcast %3 : vector<1x512xf32> to vector<64x512xf32>
    %5 = arith.addf %2, %4 : vector<64x512xf32>
    %c0_5 = arith.constant 0 : index
    %c0_6 = arith.constant 0 : index
    %6 = vector.load %arg11[%c0_5, %c0_6] : memref<64x512xf32, #tpu.memory_space<vmem>>, vector<64x512xf32>
    tpu.vector_store %arg11[%c0_5, %c0_6], %5 {strides = array<i32>} : memref<64x512xf32, #tpu.memory_space<vmem>>, vector<64x512xf32>,
    %cst_7 = arith.constant 0.000000e+00 : f32
    %7 = vector.broadcast %cst_7 : f32 to vector<8x128xf32>
    %cst_8 = arith.constant 0.000000e+00 : f32
    %8 = vector.broadcast %cst_8 : f32 to vector<8x128xf32>
    %c0_9 = arith.constant 0 : index
    %c0_10 = arith.constant 0 : index
    %9 = vector.load %arg11[%c0_9, %c0_10] : memref<64x512xf32, #tpu.memory_space<vmem>>, vector<8x512xf32>
    %c0_11 = arith.constant 0 : index
    %c0_12 = arith.constant 0 : index
    %10 = vector.load %arg2[%c0_11, %c0_12] : memref<128x512xf32, #tpu.memory_space<vmem>>, vector<128x512xf32>
    %cst_13 = arith.constant dense<0.000000e+00> : vector<8x512xf32>
    %11 = tpu.matmul %7, %10, %cst_13 {dimension_numbers = #tpu.dot_dimension_numbers<[1], [0], [0], [1], [0, 0, 1, 1], [], []>} : vector<8x128xf32>, vector<128x512xf32>, vector<8x512xf32> -> vector<8x512xf32>
    %12 = arith.addf %9, %11 : vector<8x512xf32>
    %13 = vector.extract_strided_slice %12 {offsets = [0, 0], sizes = [8, 128], strides = [1, 1]} : vector<8x512xf32> to vector<8x128xf32>
    %14 = arith.negf %13 : vector<8x128xf32>
    %15 = math.exp %14 : vector<8x128xf32>
    %cst_14 = arith.constant 1.000000e+00 : f32
    %16 = vector.broadcast %cst_14 : f32 to vector<8x128xf32>
    %17 = arith.addf %16, %15 : vector<8x128xf32>
    %18 = arith.divf %16, %17 : vector<8x128xf32>
    %19 = vector.extract_strided_slice %12 {offsets = [0, 128], sizes = [8, 128], strides = [1, 1]} : vector<8x512xf32> to vector<8x128xf32>
    %20 = arith.negf %19 : vector<8x128xf32>
    %21 = math.exp %20 : vector<8x128xf32>
    %cst_15 = arith.constant 1.000000e+00 : f32
    %22 = vector.broadcast %cst_15 : f32 to vector<8x128xf32>
    %23 = arith.addf %22, %21 : vector<8x128xf32>
    %24 = arith.divf %22, %23 : vector<8x128xf32>
    %25 = vector.extract_strided_slice %12 {offsets = [0, 256], sizes = [8, 128], strides = [1, 1]} : vector<8x512xf32> to vector<8x128xf32>
    %26 = math.tanh %25 : vector<8x128xf32>
    %27 = vector.extract_strided_slice %12 {offsets = [0, 384], sizes = [8, 128], strides = [1, 1]} : vector<8x512xf32> to vector<8x128xf32>
    %28 = arith.negf %27 : vector<8x128xf32>
    %29 = math.exp %28 : vector<8x128xf32>
    %cst_16 = arith.constant 1.000000e+00 : f32
    %30 = vector.broadcast %cst_16 : f32 to vector<8x128xf32>
    %31 = arith.addf %30, %29 : vector<8x128xf32>
    %32 = arith.divf %30, %31 : vector<8x128xf32>
    %33 = arith.mulf %24, %8 : vector<8x128xf32>
    %34 = arith.mulf %18, %26 : vector<8x128xf32>
    %35 = arith.addf %33, %34 : vector<8x128xf32>
    %36 = math.tanh %35 : vector<8x128xf32>
    %37 = arith.mulf %32, %36 : vector<8x128xf32>
    %c0_17 = arith.constant 0 : index
    %c0_18 = arith.constant 0 : index
    %38 = vector.load %arg10[%c0_17, %c0_18] : memref<64x128xf32, #tpu.memory_space<vmem>>, vector<8x128xf32>
    tpu.vector_store %arg10[%c0_17, %c0_18], %37 {strides = array<i32>} : memref<64x128xf32, #tpu.memory_space<vmem>>, vector<8x128xf32>,
    %c8 = arith.constant 8 : index
    %c0_19 = arith.constant 0 : index
    %39 = vector.load %arg11[%c8, %c0_19] : memref<64x512xf32, #tpu.memory_space<vmem>>, vector<8x512xf32>
    %c0_20 = arith.constant 0 : index
    %c0_21 = arith.constant 0 : index
    %40 = vector.load %arg2[%c0_20, %c0_21] : memref<128x512xf32, #tpu.memory_space<vmem>>, vector<128x512xf32>
    %cst_22 = arith.constant dense<0.000000e+00> : vector<8x512xf32>
    %41 = tpu.matmul %37, %40, %cst_22 {dimension_numbers = #tpu.dot_dimension_numbers<[1], [0], [0], [1], [0, 0, 1, 1], [], []>} : vector<8x128xf32>, vector<128x512xf32>, vector<8x512xf32> -> vector<8x512xf32>
    %42 = arith.addf %39, %41 : vector<8x512xf32>
    %43 = vector.extract_strided_slice %42 {offsets = [0, 0], sizes = [8, 128], strides = [1, 1]} : vector<8x512xf32> to vector<8x128xf32>
    %44 = arith.negf %43 : vector<8x128xf32>
    %45 = math.exp %44 : vector<8x128xf32>
    %cst_23 = arith.constant 1.000000e+00 : f32
    %46 = vector.broadcast %cst_23 : f32 to vector<8x128xf32>
    %47 = arith.addf %46, %45 : vector<8x128xf32>
    %48 = arith.divf %46, %47 : vector<8x128xf32>
    %49 = vector.extract_strided_slice %42 {offsets = [0, 128], sizes = [8, 128], strides = [1, 1]} : vector<8x512xf32> to vector<8x128xf32>
    %50 = arith.negf %49 : vector<8x128xf32>
    %51 = math.exp %50 : vector<8x128xf32>
    %cst_24 = arith.constant 1.000000e+00 : f32
    %52 = vector.broadcast %cst_24 : f32 to vector<8x128xf32>
    %53 = arith.addf %52, %51 : vector<8x128xf32>
    %54 = arith.divf %52, %53 : vector<8x128xf32>
    %55 = vector.extract_strided_slice %42 {offsets = [0, 256], sizes = [8, 128], strides = [1, 1]} : vector<8x512xf32> to vector<8x128xf32>
    %56 = math.tanh %55 : vector<8x128xf32>
    %57 = vector.extract_strided_slice %42 {offsets = [0, 384], sizes = [8, 128], strides = [1, 1]} : vector<8x512xf32> to vector<8x128xf32>
    %58 = arith.negf %57 : vector<8x128xf32>
    %59 = math.exp %58 : vector<8x128xf32>
    %cst_25 = arith.constant 1.000000e+00 : f32
    %60 = vector.broadcast %cst_25 : f32 to vector<8x128xf32>
    %61 = arith.addf %60, %59 : vector<8x128xf32>
    %62 = arith.divf %60, %61 : vector<8x128xf32>
    %63 = arith.mulf %54, %35 : vector<8x128xf32>
    %64 = arith.mulf %48, %56 : vector<8x128xf32>
    %65 = arith.addf %63, %64 : vector<8x128xf32>
    %66 = math.tanh %65 : vector<8x128xf32>
    %67 = arith.mulf %62, %66 : vector<8x128xf32>
    %c8_26 = arith.constant 8 : index
    %c0_27 = arith.constant 0 : index
    %68 = vector.load %arg10[%c8_26, %c0_27] : memref<64x128xf32, #tpu.memory_space<vmem>>, vector<8x128xf32>
    tpu.vector_store %arg10[%c8_26, %c0_27], %67 {strides = array<i32>} : memref<64x128xf32, #tpu.memory_space<vmem>>, vector<8x128xf32>,
    %c16 = arith.constant 16 : index
    %c0_28 = arith.constant 0 : index
    %69 = vector.load %arg11[%c16, %c0_28] : memref<64x512xf32, #tpu.memory_space<vmem>>, vector<8x512xf32>
    %c0_29 = arith.constant 0 : index
    %c0_30 = arith.constant 0 : index
    %70 = vector.load %arg2[%c0_29, %c0_30] : memref<128x512xf32, #tpu.memory_space<vmem>>, vector<128x512xf32>
    %cst_31 = arith.constant dense<0.000000e+00> : vector<8x512xf32>
    %71 = tpu.matmul %67, %70, %cst_31 {dimension_numbers = #tpu.dot_dimension_numbers<[1], [0], [0], [1], [0, 0, 1, 1], [], []>} : vector<8x128xf32>, vector<128x512xf32>, vector<8x512xf32> -> vector<8x512xf32>
    %72 = arith.addf %69, %71 : vector<8x512xf32>
    %73 = vector.extract_strided_slice %72 {offsets = [0, 0], sizes = [8, 128], strides = [1, 1]} : vector<8x512xf32> to vector<8x128xf32>
    %74 = arith.negf %73 : vector<8x128xf32>
    %75 = math.exp %74 : vector<8x128xf32>
    %cst_32 = arith.constant 1.000000e+00 : f32
    %76 = vector.broadcast %cst_32 : f32 to vector<8x128xf32>
    %77 = arith.addf %76, %75 : vector<8x128xf32>
    %78 = arith.divf %76, %77 : vector<8x128xf32>
    %79 = vector.extract_strided_slice %72 {offsets = [0, 128], sizes = [8, 128], strides = [1, 1]} : vector<8x512xf32> to vector<8x128xf32>
    %80 = arith.negf %79 : vector<8x128xf32>
    %81 = math.exp %80 : vector<8x128xf32>
    %cst_33 = arith.constant 1.000000e+00 : f32
    %82 = vector.broadcast %cst_33 : f32 to vector<8x128xf32>
    %83 = arith.addf %82, %81 : vector<8x128xf32>
    %84 = arith.divf %82, %83 : vector<8x128xf32>
    %85 = vector.extract_strided_slice %72 {offsets = [0, 256], sizes = [8, 128], strides = [1, 1]} : vector<8x512xf32> to vector<8x128xf32>
    %86 = math.tanh %85 : vector<8x128xf32>
    %87 = vector.extract_strided_slice %72 {offsets = [0, 384], sizes = [8, 128], strides = [1, 1]} : vector<8x512xf32> to vector<8x128xf32>
    %88 = arith.negf %87 : vector<8x128xf32>
    %89 = math.exp %88 : vector<8x128xf32>
    %cst_34 = arith.constant 1.000000e+00 : f32
    %90 = vector.broadcast %cst_34 : f32 to vector<8x128xf32>
    %91 = arith.addf %90, %89 : vector<8x128xf32>
    %92 = arith.divf %90, %91 : vector<8x128xf32>
    %93 = arith.mulf %84, %65 : vector<8x128xf32>
    %94 = arith.mulf %78, %86 : vector<8x128xf32>
    %95 = arith.addf %93, %94 : vector<8x128xf32>
    %96 = math.tanh %95 : vector<8x128xf32>
    %97 = arith.mulf %92, %96 : vector<8x128xf32>
    %c16_35 = arith.constant 16 : index
    %c0_36 = arith.constant 0 : index
    %98 = vector.load %arg10[%c16_35, %c0_36] : memref<64x128xf32, #tpu.memory_space<vmem>>, vector<8x128xf32>
    tpu.vector_store %arg10[%c16_35, %c0_36], %97 {strides = array<i32>} : memref<64x128xf32, #tpu.memory_space<vmem>>, vector<8x128xf32>,
    %c24 = arith.constant 24 : index
    %c0_37 = arith.constant 0 : index
    %99 = vector.load %arg11[%c24, %c0_37] : memref<64x512xf32, #tpu.memory_space<vmem>>, vector<8x512xf32>
    %c0_38 = arith.constant 0 : index
    %c0_39 = arith.constant 0 : index
    %100 = vector.load %arg2[%c0_38, %c0_39] : memref<128x512xf32, #tpu.memory_space<vmem>>, vector<128x512xf32>
    %cst_40 = arith.constant dense<0.000000e+00> : vector<8x512xf32>
    %101 = tpu.matmul %97, %100, %cst_40 {dimension_numbers = #tpu.dot_dimension_numbers<[1], [0], [0], [1], [0, 0, 1, 1], [], []>} : vector<8x128xf32>, vector<128x512xf32>, vector<8x512xf32> -> vector<8x512xf32>
    %102 = arith.addf %99, %101 : vector<8x512xf32>
    %103 = vector.extract_strided_slice %102 {offsets = [0, 0], sizes = [8, 128], strides = [1, 1]} : vector<8x512xf32> to vector<8x128xf32>
    %104 = arith.negf %103 : vector<8x128xf32>
    %105 = math.exp %104 : vector<8x128xf32>
    %cst_41 = arith.constant 1.000000e+00 : f32
    %106 = vector.broadcast %cst_41 : f32 to vector<8x128xf32>
    %107 = arith.addf %106, %105 : vector<8x128xf32>
    %108 = arith.divf %106, %107 : vector<8x128xf32>
    %109 = vector.extract_strided_slice %102 {offsets = [0, 128], sizes = [8, 128], strides = [1, 1]} : vector<8x512xf32> to vector<8x128xf32>
    %110 = arith.negf %109 : vector<8x128xf32>
    %111 = math.exp %110 : vector<8x128xf32>
    %cst_42 = arith.constant 1.000000e+00 : f32
    %112 = vector.broadcast %cst_42 : f32 to vector<8x128xf32>
    %113 = arith.addf %112, %111 : vector<8x128xf32>
    %114 = arith.divf %112, %113 : vector<8x128xf32>
    %115 = vector.extract_strided_slice %102 {offsets = [0, 256], sizes = [8, 128], strides = [1, 1]} : vector<8x512xf32> to vector<8x128xf32>
    %116 = math.tanh %115 : vector<8x128xf32>
    %117 = vector.extract_strided_slice %102 {offsets = [0, 384], sizes = [8, 128], strides = [1, 1]} : vector<8x512xf32> to vector<8x128xf32>
    %118 = arith.negf %117 : vector<8x128xf32>
    %119 = math.exp %118 : vector<8x128xf32>
    %cst_43 = arith.constant 1.000000e+00 : f32
    %120 = vector.broadcast %cst_43 : f32 to vector<8x128xf32>
    %121 = arith.addf %120, %119 : vector<8x128xf32>
    %122 = arith.divf %120, %121 : vector<8x128xf32>
    %123 = arith.mulf %114, %95 : vector<8x128xf32>
    %124 = arith.mulf %108, %116 : vector<8x128xf32>
    %125 = arith.addf %123, %124 : vector<8x128xf32>
    %126 = math.tanh %125 : vector<8x128xf32>
    %127 = arith.mulf %122, %126 : vector<8x128xf32>
    %c24_44 = arith.constant 24 : index
    %c0_45 = arith.constant 0 : index
    %128 = vector.load %arg10[%c24_44, %c0_45] : memref<64x128xf32, #tpu.memory_space<vmem>>, vector<8x128xf32>
    tpu.vector_store %arg10[%c24_44, %c0_45], %127 {strides = array<i32>} : memref<64x128xf32, #tpu.memory_space<vmem>>, vector<8x128xf32>,
    %c32 = arith.constant 32 : index
    %c0_46 = arith.constant 0 : index
    %129 = vector.load %arg11[%c32, %c0_46] : memref<64x512xf32, #tpu.memory_space<vmem>>, vector<8x512xf32>
    %c0_47 = arith.constant 0 : index
    %c0_48 = arith.constant 0 : index
    %130 = vector.load %arg2[%c0_47, %c0_48] : memref<128x512xf32, #tpu.memory_space<vmem>>, vector<128x512xf32>
    %cst_49 = arith.constant dense<0.000000e+00> : vector<8x512xf32>
    %131 = tpu.matmul %127, %130, %cst_49 {dimension_numbers = #tpu.dot_dimension_numbers<[1], [0], [0], [1], [0, 0, 1, 1], [], []>} : vector<8x128xf32>, vector<128x512xf32>, vector<8x512xf32> -> vector<8x512xf32>
    %132 = arith.addf %129, %131 : vector<8x512xf32>
    %133 = vector.extract_strided_slice %132 {offsets = [0, 0], sizes = [8, 128], strides = [1, 1]} : vector<8x512xf32> to vector<8x128xf32>
    %134 = arith.negf %133 : vector<8x128xf32>
    %135 = math.exp %134 : vector<8x128xf32>
    %cst_50 = arith.constant 1.000000e+00 : f32
    %136 = vector.broadcast %cst_50 : f32 to vector<8x128xf32>
    %137 = arith.addf %136, %135 : vector<8x128xf32>
    %138 = arith.divf %136, %137 : vector<8x128xf32>
    %139 = vector.extract_strided_slice %132 {offsets = [0, 128], sizes = [8, 128], strides = [1, 1]} : vector<8x512xf32> to vector<8x128xf32>
    %140 = arith.negf %139 : vector<8x128xf32>
    %141 = math.exp %140 : vector<8x128xf32>
    %cst_51 = arith.constant 1.000000e+00 : f32
    %142 = vector.broadcast %cst_51 : f32 to vector<8x128xf32>
    %143 = arith.addf %142, %141 : vector<8x128xf32>
    %144 = arith.divf %142, %143 : vector<8x128xf32>
    %145 = vector.extract_strided_slice %132 {offsets = [0, 256], sizes = [8, 128], strides = [1, 1]} : vector<8x512xf32> to vector<8x128xf32>
    %146 = math.tanh %145 : vector<8x128xf32>
    %147 = vector.extract_strided_slice %132 {offsets = [0, 384], sizes = [8, 128], strides = [1, 1]} : vector<8x512xf32> to vector<8x128xf32>
    %148 = arith.negf %147 : vector<8x128xf32>
    %149 = math.exp %148 : vector<8x128xf32>
    %cst_52 = arith.constant 1.000000e+00 : f32
    %150 = vector.broadcast %cst_52 : f32 to vector<8x128xf32>
    %151 = arith.addf %150, %149 : vector<8x128xf32>
    %152 = arith.divf %150, %151 : vector<8x128xf32>
    %153 = arith.mulf %144, %125 : vector<8x128xf32>
    %154 = arith.mulf %138, %146 : vector<8x128xf32>
    %155 = arith.addf %153, %154 : vector<8x128xf32>
    %156 = math.tanh %155 : vector<8x128xf32>
    %157 = arith.mulf %152, %156 : vector<8x128xf32>
    %c32_53 = arith.constant 32 : index
    %c0_54 = arith.constant 0 : index
    %158 = vector.load %arg10[%c32_53, %c0_54] : memref<64x128xf32, #tpu.memory_space<vmem>>, vector<8x128xf32>
    tpu.vector_store %arg10[%c32_53, %c0_54], %157 {strides = array<i32>} : memref<64x128xf32, #tpu.memory_space<vmem>>, vector<8x128xf32>,
    %c40 = arith.constant 40 : index
    %c0_55 = arith.constant 0 : index
    %159 = vector.load %arg11[%c40, %c0_55] : memref<64x512xf32, #tpu.memory_space<vmem>>, vector<8x512xf32>
    %c0_56 = arith.constant 0 : index
    %c0_57 = arith.constant 0 : index
    %160 = vector.load %arg2[%c0_56, %c0_57] : memref<128x512xf32, #tpu.memory_space<vmem>>, vector<128x512xf32>
    %cst_58 = arith.constant dense<0.000000e+00> : vector<8x512xf32>
    %161 = tpu.matmul %157, %160, %cst_58 {dimension_numbers = #tpu.dot_dimension_numbers<[1], [0], [0], [1], [0, 0, 1, 1], [], []>} : vector<8x128xf32>, vector<128x512xf32>, vector<8x512xf32> -> vector<8x512xf32>
    %162 = arith.addf %159, %161 : vector<8x512xf32>
    %163 = vector.extract_strided_slice %162 {offsets = [0, 0], sizes = [8, 128], strides = [1, 1]} : vector<8x512xf32> to vector<8x128xf32>
    %164 = arith.negf %163 : vector<8x128xf32>
    %165 = math.exp %164 : vector<8x128xf32>
    %cst_59 = arith.constant 1.000000e+00 : f32
    %166 = vector.broadcast %cst_59 : f32 to vector<8x128xf32>
    %167 = arith.addf %166, %165 : vector<8x128xf32>
    %168 = arith.divf %166, %167 : vector<8x128xf32>
    %169 = vector.extract_strided_slice %162 {offsets = [0, 128], sizes = [8, 128], strides = [1, 1]} : vector<8x512xf32> to vector<8x128xf32>
    %170 = arith.negf %169 : vector<8x128xf32>
    %171 = math.exp %170 : vector<8x128xf32>
    %cst_60 = arith.constant 1.000000e+00 : f32
    %172 = vector.broadcast %cst_60 : f32 to vector<8x128xf32>
    %173 = arith.addf %172, %171 : vector<8x128xf32>
    %174 = arith.divf %172, %173 : vector<8x128xf32>
    %175 = vector.extract_strided_slice %162 {offsets = [0, 256], sizes = [8, 128], strides = [1, 1]} : vector<8x512xf32> to vector<8x128xf32>
    %176 = math.tanh %175 : vector<8x128xf32>
    %177 = vector.extract_strided_slice %162 {offsets = [0, 384], sizes = [8, 128], strides = [1, 1]} : vector<8x512xf32> to vector<8x128xf32>
    %178 = arith.negf %177 : vector<8x128xf32>
    %179 = math.exp %178 : vector<8x128xf32>
    %cst_61 = arith.constant 1.000000e+00 : f32
    %180 = vector.broadcast %cst_61 : f32 to vector<8x128xf32>
    %181 = arith.addf %180, %179 : vector<8x128xf32>
    %182 = arith.divf %180, %181 : vector<8x128xf32>
    %183 = arith.mulf %174, %155 : vector<8x128xf32>
    %184 = arith.mulf %168, %176 : vector<8x128xf32>
    %185 = arith.addf %183, %184 : vector<8x128xf32>
    %186 = math.tanh %185 : vector<8x128xf32>
    %187 = arith.mulf %182, %186 : vector<8x128xf32>
    %c40_62 = arith.constant 40 : index
    %c0_63 = arith.constant 0 : index
    %188 = vector.load %arg10[%c40_62, %c0_63] : memref<64x128xf32, #tpu.memory_space<vmem>>, vector<8x128xf32>
    tpu.vector_store %arg10[%c40_62, %c0_63], %187 {strides = array<i32>} : memref<64x128xf32, #tpu.memory_space<vmem>>, vector<8x128xf32>,
    %c48 = arith.constant 48 : index
    %c0_64 = arith.constant 0 : index
    %189 = vector.load %arg11[%c48, %c0_64] : memref<64x512xf32, #tpu.memory_space<vmem>>, vector<8x512xf32>
    %c0_65 = arith.constant 0 : index
    %c0_66 = arith.constant 0 : index
    %190 = vector.load %arg2[%c0_65, %c0_66] : memref<128x512xf32, #tpu.memory_space<vmem>>, vector<128x512xf32>
    %cst_67 = arith.constant dense<0.000000e+00> : vector<8x512xf32>
    %191 = tpu.matmul %187, %190, %cst_67 {dimension_numbers = #tpu.dot_dimension_numbers<[1], [0], [0], [1], [0, 0, 1, 1], [], []>} : vector<8x128xf32>, vector<128x512xf32>, vector<8x512xf32> -> vector<8x512xf32>
    %192 = arith.addf %189, %191 : vector<8x512xf32>
    %193 = vector.extract_strided_slice %192 {offsets = [0, 0], sizes = [8, 128], strides = [1, 1]} : vector<8x512xf32> to vector<8x128xf32>
    %194 = arith.negf %193 : vector<8x128xf32>
    %195 = math.exp %194 : vector<8x128xf32>
    %cst_68 = arith.constant 1.000000e+00 : f32
    %196 = vector.broadcast %cst_68 : f32 to vector<8x128xf32>
    %197 = arith.addf %196, %195 : vector<8x128xf32>
    %198 = arith.divf %196, %197 : vector<8x128xf32>
    %199 = vector.extract_strided_slice %192 {offsets = [0, 128], sizes = [8, 128], strides = [1, 1]} : vector<8x512xf32> to vector<8x128xf32>
    %200 = arith.negf %199 : vector<8x128xf32>
    %201 = math.exp %200 : vector<8x128xf32>
    %cst_69 = arith.constant 1.000000e+00 : f32
    %202 = vector.broadcast %cst_69 : f32 to vector<8x128xf32>
    %203 = arith.addf %202, %201 : vector<8x128xf32>
    %204 = arith.divf %202, %203 : vector<8x128xf32>
    %205 = vector.extract_strided_slice %192 {offsets = [0, 256], sizes = [8, 128], strides = [1, 1]} : vector<8x512xf32> to vector<8x128xf32>
    %206 = math.tanh %205 : vector<8x128xf32>
    %207 = vector.extract_strided_slice %192 {offsets = [0, 384], sizes = [8, 128], strides = [1, 1]} : vector<8x512xf32> to vector<8x128xf32>
    %208 = arith.negf %207 : vector<8x128xf32>
    %209 = math.exp %208 : vector<8x128xf32>
    %cst_70 = arith.constant 1.000000e+00 : f32
    %210 = vector.broadcast %cst_70 : f32 to vector<8x128xf32>
    %211 = arith.addf %210, %209 : vector<8x128xf32>
    %212 = arith.divf %210, %211 : vector<8x128xf32>
    %213 = arith.mulf %204, %185 : vector<8x128xf32>
    %214 = arith.mulf %198, %206 : vector<8x128xf32>
    %215 = arith.addf %213, %214 : vector<8x128xf32>
    %216 = math.tanh %215 : vector<8x128xf32>
    %217 = arith.mulf %212, %216 : vector<8x128xf32>
    %c48_71 = arith.constant 48 : index
    %c0_72 = arith.constant 0 : index
    %218 = vector.load %arg10[%c48_71, %c0_72] : memref<64x128xf32, #tpu.memory_space<vmem>>, vector<8x128xf32>
    tpu.vector_store %arg10[%c48_71, %c0_72], %217 {strides = array<i32>} : memref<64x128xf32, #tpu.memory_space<vmem>>, vector<8x128xf32>,
    %c56 = arith.constant 56 : index
    %c0_73 = arith.constant 0 : index
    %219 = vector.load %arg11[%c56, %c0_73] : memref<64x512xf32, #tpu.memory_space<vmem>>, vector<8x512xf32>
    %c0_74 = arith.constant 0 : index
    %c0_75 = arith.constant 0 : index
    %220 = vector.load %arg2[%c0_74, %c0_75] : memref<128x512xf32, #tpu.memory_space<vmem>>, vector<128x512xf32>
    %cst_76 = arith.constant dense<0.000000e+00> : vector<8x512xf32>
    %221 = tpu.matmul %217, %220, %cst_76 {dimension_numbers = #tpu.dot_dimension_numbers<[1], [0], [0], [1], [0, 0, 1, 1], [], []>} : vector<8x128xf32>, vector<128x512xf32>, vector<8x512xf32> -> vector<8x512xf32>
    %222 = arith.addf %219, %221 : vector<8x512xf32>
    %223 = vector.extract_strided_slice %222 {offsets = [0, 0], sizes = [8, 128], strides = [1, 1]} : vector<8x512xf32> to vector<8x128xf32>
    %224 = arith.negf %223 : vector<8x128xf32>
    %225 = math.exp %224 : vector<8x128xf32>
    %cst_77 = arith.constant 1.000000e+00 : f32
    %226 = vector.broadcast %cst_77 : f32 to vector<8x128xf32>
    %227 = arith.addf %226, %225 : vector<8x128xf32>
    %228 = arith.divf %226, %227 : vector<8x128xf32>
    %229 = vector.extract_strided_slice %222 {offsets = [0, 128], sizes = [8, 128], strides = [1, 1]} : vector<8x512xf32> to vector<8x128xf32>
    %230 = arith.negf %229 : vector<8x128xf32>
    %231 = math.exp %230 : vector<8x128xf32>
    %cst_78 = arith.constant 1.000000e+00 : f32
    %232 = vector.broadcast %cst_78 : f32 to vector<8x128xf32>
    %233 = arith.addf %232, %231 : vector<8x128xf32>
    %234 = arith.divf %232, %233 : vector<8x128xf32>
    %235 = vector.extract_strided_slice %222 {offsets = [0, 256], sizes = [8, 128], strides = [1, 1]} : vector<8x512xf32> to vector<8x128xf32>
    %236 = math.tanh %235 : vector<8x128xf32>
    %237 = vector.extract_strided_slice %222 {offsets = [0, 384], sizes = [8, 128], strides = [1, 1]} : vector<8x512xf32> to vector<8x128xf32>
    %238 = arith.negf %237 : vector<8x128xf32>
    %239 = math.exp %238 : vector<8x128xf32>
    %cst_79 = arith.constant 1.000000e+00 : f32
    %240 = vector.broadcast %cst_79 : f32 to vector<8x128xf32>
    %241 = arith.addf %240, %239 : vector<8x128xf32>
    %242 = arith.divf %240, %241 : vector<8x128xf32>
    %243 = arith.mulf %234, %215 : vector<8x128xf32>
    %244 = arith.mulf %228, %236 : vector<8x128xf32>
    %245 = arith.addf %243, %244 : vector<8x128xf32>
    %246 = math.tanh %245 : vector<8x128xf32>
    %247 = arith.mulf %242, %246 : vector<8x128xf32>
    %c56_80 = arith.constant 56 : index
    %c0_81 = arith.constant 0 : index
    %248 = vector.load %arg10[%c56_80, %c0_81] : memref<64x128xf32, #tpu.memory_space<vmem>>, vector<8x128xf32>
    tpu.vector_store %arg10[%c56_80, %c0_81], %247 {strides = array<i32>} : memref<64x128xf32, #tpu.memory_space<vmem>>, vector<8x128xf32>,
    %c0_82 = arith.constant 0 : index
    %c0_83 = arith.constant 0 : index
    %249 = vector.load %arg10[%c0_82, %c0_83] : memref<64x128xf32, #tpu.memory_space<vmem>>, vector<64x128xf32>
    %c0_84 = arith.constant 0 : index
    %c0_85 = arith.constant 0 : index
    %250 = vector.load %arg4[%c0_84, %c0_85] : memref<128x512xf32, #tpu.memory_space<vmem>>, vector<128x512xf32>
    %cst_86 = arith.constant dense<0.000000e+00> : vector<64x512xf32>
    %251 = tpu.matmul %249, %250, %cst_86 {dimension_numbers = #tpu.dot_dimension_numbers<[1], [0], [0], [1], [0, 0, 1, 1], [], []>} : vector<64x128xf32>, vector<128x512xf32>, vector<64x512xf32> -> vector<64x512xf32>
    %c0_87 = arith.constant 0 : index
    %c0_88 = arith.constant 0 : index
    %252 = vector.load %arg6[%c0_87, %c0_88] : memref<1x512xf32, #tpu.memory_space<vmem>>, vector<1x512xf32>
    %253 = vector.broadcast %252 : vector<1x512xf32> to vector<64x512xf32>
    %254 = arith.addf %251, %253 : vector<64x512xf32>
    %c0_89 = arith.constant 0 : index
    %c0_90 = arith.constant 0 : index
    %255 = vector.load %arg11[%c0_89, %c0_90] : memref<64x512xf32, #tpu.memory_space<vmem>>, vector<64x512xf32>
    tpu.vector_store %arg11[%c0_89, %c0_90], %254 {strides = array<i32>} : memref<64x512xf32, #tpu.memory_space<vmem>>, vector<64x512xf32>,
    %cst_91 = arith.constant 0.000000e+00 : f32
    %256 = vector.broadcast %cst_91 : f32 to vector<8x128xf32>
    %cst_92 = arith.constant 0.000000e+00 : f32
    %257 = vector.broadcast %cst_92 : f32 to vector<8x128xf32>
    %c0_93 = arith.constant 0 : index
    %c0_94 = arith.constant 0 : index
    %258 = vector.load %arg11[%c0_93, %c0_94] : memref<64x512xf32, #tpu.memory_space<vmem>>, vector<8x512xf32>
    %c0_95 = arith.constant 0 : index
    %c0_96 = arith.constant 0 : index
    %259 = vector.load %arg5[%c0_95, %c0_96] : memref<128x512xf32, #tpu.memory_space<vmem>>, vector<128x512xf32>
    %cst_97 = arith.constant dense<0.000000e+00> : vector<8x512xf32>
    %260 = tpu.matmul %256, %259, %cst_97 {dimension_numbers = #tpu.dot_dimension_numbers<[1], [0], [0], [1], [0, 0, 1, 1], [], []>} : vector<8x128xf32>, vector<128x512xf32>, vector<8x512xf32> -> vector<8x512xf32>
    %261 = arith.addf %258, %260 : vector<8x512xf32>
    %262 = vector.extract_strided_slice %261 {offsets = [0, 0], sizes = [8, 128], strides = [1, 1]} : vector<8x512xf32> to vector<8x128xf32>
    %263 = arith.negf %262 : vector<8x128xf32>
    %264 = math.exp %263 : vector<8x128xf32>
    %cst_98 = arith.constant 1.000000e+00 : f32
    %265 = vector.broadcast %cst_98 : f32 to vector<8x128xf32>
    %266 = arith.addf %265, %264 : vector<8x128xf32>
    %267 = arith.divf %265, %266 : vector<8x128xf32>
    %268 = vector.extract_strided_slice %261 {offsets = [0, 128], sizes = [8, 128], strides = [1, 1]} : vector<8x512xf32> to vector<8x128xf32>
    %269 = arith.negf %268 : vector<8x128xf32>
    %270 = math.exp %269 : vector<8x128xf32>
    %cst_99 = arith.constant 1.000000e+00 : f32
    %271 = vector.broadcast %cst_99 : f32 to vector<8x128xf32>
    %272 = arith.addf %271, %270 : vector<8x128xf32>
    %273 = arith.divf %271, %272 : vector<8x128xf32>
    %274 = vector.extract_strided_slice %261 {offsets = [0, 256], sizes = [8, 128], strides = [1, 1]} : vector<8x512xf32> to vector<8x128xf32>
    %275 = math.tanh %274 : vector<8x128xf32>
    %276 = vector.extract_strided_slice %261 {offsets = [0, 384], sizes = [8, 128], strides = [1, 1]} : vector<8x512xf32> to vector<8x128xf32>
    %277 = arith.negf %276 : vector<8x128xf32>
    %278 = math.exp %277 : vector<8x128xf32>
    %cst_100 = arith.constant 1.000000e+00 : f32
    %279 = vector.broadcast %cst_100 : f32 to vector<8x128xf32>
    %280 = arith.addf %279, %278 : vector<8x128xf32>
    %281 = arith.divf %279, %280 : vector<8x128xf32>
    %282 = arith.mulf %273, %257 : vector<8x128xf32>
    %283 = arith.mulf %267, %275 : vector<8x128xf32>
    %284 = arith.addf %282, %283 : vector<8x128xf32>
    %285 = math.tanh %284 : vector<8x128xf32>
    %286 = arith.mulf %281, %285 : vector<8x128xf32>
    %c8_101 = arith.constant 8 : index
    %c0_102 = arith.constant 0 : index
    %287 = vector.load %arg11[%c8_101, %c0_102] : memref<64x512xf32, #tpu.memory_space<vmem>>, vector<8x512xf32>
    %c0_103 = arith.constant 0 : index
    %c0_104 = arith.constant 0 : index
    %288 = vector.load %arg5[%c0_103, %c0_104] : memref<128x512xf32, #tpu.memory_space<vmem>>, vector<128x512xf32>
    %cst_105 = arith.constant dense<0.000000e+00> : vector<8x512xf32>
    %289 = tpu.matmul %286, %288, %cst_105 {dimension_numbers = #tpu.dot_dimension_numbers<[1], [0], [0], [1], [0, 0, 1, 1], [], []>} : vector<8x128xf32>, vector<128x512xf32>, vector<8x512xf32> -> vector<8x512xf32>
    %290 = arith.addf %287, %289 : vector<8x512xf32>
    %291 = vector.extract_strided_slice %290 {offsets = [0, 0], sizes = [8, 128], strides = [1, 1]} : vector<8x512xf32> to vector<8x128xf32>
    %292 = arith.negf %291 : vector<8x128xf32>
    %293 = math.exp %292 : vector<8x128xf32>
    %cst_106 = arith.constant 1.000000e+00 : f32
    %294 = vector.broadcast %cst_106 : f32 to vector<8x128xf32>
    %295 = arith.addf %294, %293 : vector<8x128xf32>
    %296 = arith.divf %294, %295 : vector<8x128xf32>
    %297 = vector.extract_strided_slice %290 {offsets = [0, 128], sizes = [8, 128], strides = [1, 1]} : vector<8x512xf32> to vector<8x128xf32>
    %298 = arith.negf %297 : vector<8x128xf32>
    %299 = math.exp %298 : vector<8x128xf32>
    %cst_107 = arith.constant 1.000000e+00 : f32
    %300 = vector.broadcast %cst_107 : f32 to vector<8x128xf32>
    %301 = arith.addf %300, %299 : vector<8x128xf32>
    %302 = arith.divf %300, %301 : vector<8x128xf32>
    %303 = vector.extract_strided_slice %290 {offsets = [0, 256], sizes = [8, 128], strides = [1, 1]} : vector<8x512xf32> to vector<8x128xf32>
    %304 = math.tanh %303 : vector<8x128xf32>
    %305 = vector.extract_strided_slice %290 {offsets = [0, 384], sizes = [8, 128], strides = [1, 1]} : vector<8x512xf32> to vector<8x128xf32>
    %306 = arith.negf %305 : vector<8x128xf32>
    %307 = math.exp %306 : vector<8x128xf32>
    %cst_108 = arith.constant 1.000000e+00 : f32
    %308 = vector.broadcast %cst_108 : f32 to vector<8x128xf32>
    %309 = arith.addf %308, %307 : vector<8x128xf32>
    %310 = arith.divf %308, %309 : vector<8x128xf32>
    %311 = arith.mulf %302, %284 : vector<8x128xf32>
    %312 = arith.mulf %296, %304 : vector<8x128xf32>
    %313 = arith.addf %311, %312 : vector<8x128xf32>
    %314 = math.tanh %313 : vector<8x128xf32>
    %315 = arith.mulf %310, %314 : vector<8x128xf32>
    %c16_109 = arith.constant 16 : index
    %c0_110 = arith.constant 0 : index
    %316 = vector.load %arg11[%c16_109, %c0_110] : memref<64x512xf32, #tpu.memory_space<vmem>>, vector<8x512xf32>
    %c0_111 = arith.constant 0 : index
    %c0_112 = arith.constant 0 : index
    %317 = vector.load %arg5[%c0_111, %c0_112] : memref<128x512xf32, #tpu.memory_space<vmem>>, vector<128x512xf32>
    %cst_113 = arith.constant dense<0.000000e+00> : vector<8x512xf32>
    %318 = tpu.matmul %315, %317, %cst_113 {dimension_numbers = #tpu.dot_dimension_numbers<[1], [0], [0], [1], [0, 0, 1, 1], [], []>} : vector<8x128xf32>, vector<128x512xf32>, vector<8x512xf32> -> vector<8x512xf32>
    %319 = arith.addf %316, %318 : vector<8x512xf32>
    %320 = vector.extract_strided_slice %319 {offsets = [0, 0], sizes = [8, 128], strides = [1, 1]} : vector<8x512xf32> to vector<8x128xf32>
    %321 = arith.negf %320 : vector<8x128xf32>
    %322 = math.exp %321 : vector<8x128xf32>
    %cst_114 = arith.constant 1.000000e+00 : f32
    %323 = vector.broadcast %cst_114 : f32 to vector<8x128xf32>
    %324 = arith.addf %323, %322 : vector<8x128xf32>
    %325 = arith.divf %323, %324 : vector<8x128xf32>
    %326 = vector.extract_strided_slice %319 {offsets = [0, 128], sizes = [8, 128], strides = [1, 1]} : vector<8x512xf32> to vector<8x128xf32>
    %327 = arith.negf %326 : vector<8x128xf32>
    %328 = math.exp %327 : vector<8x128xf32>
    %cst_115 = arith.constant 1.000000e+00 : f32
    %329 = vector.broadcast %cst_115 : f32 to vector<8x128xf32>
    %330 = arith.addf %329, %328 : vector<8x128xf32>
    %331 = arith.divf %329, %330 : vector<8x128xf32>
    %332 = vector.extract_strided_slice %319 {offsets = [0, 256], sizes = [8, 128], strides = [1, 1]} : vector<8x512xf32> to vector<8x128xf32>
    %333 = math.tanh %332 : vector<8x128xf32>
    %334 = vector.extract_strided_slice %319 {offsets = [0, 384], sizes = [8, 128], strides = [1, 1]} : vector<8x512xf32> to vector<8x128xf32>
    %335 = arith.negf %334 : vector<8x128xf32>
    %336 = math.exp %335 : vector<8x128xf32>
    %cst_116 = arith.constant 1.000000e+00 : f32
    %337 = vector.broadcast %cst_116 : f32 to vector<8x128xf32>
    %338 = arith.addf %337, %336 : vector<8x128xf32>
    %339 = arith.divf %337, %338 : vector<8x128xf32>
    %340 = arith.mulf %331, %313 : vector<8x128xf32>
    %341 = arith.mulf %325, %333 : vector<8x128xf32>
    %342 = arith.addf %340, %341 : vector<8x128xf32>
    %343 = math.tanh %342 : vector<8x128xf32>
    %344 = arith.mulf %339, %343 : vector<8x128xf32>
    %c24_117 = arith.constant 24 : index
    %c0_118 = arith.constant 0 : index
    %345 = vector.load %arg11[%c24_117, %c0_118] : memref<64x512xf32, #tpu.memory_space<vmem>>, vector<8x512xf32>
    %c0_119 = arith.constant 0 : index
    %c0_120 = arith.constant 0 : index
    %346 = vector.load %arg5[%c0_119, %c0_120] : memref<128x512xf32, #tpu.memory_space<vmem>>, vector<128x512xf32>
    %cst_121 = arith.constant dense<0.000000e+00> : vector<8x512xf32>
    %347 = tpu.matmul %344, %346, %cst_121 {dimension_numbers = #tpu.dot_dimension_numbers<[1], [0], [0], [1], [0, 0, 1, 1], [], []>} : vector<8x128xf32>, vector<128x512xf32>, vector<8x512xf32> -> vector<8x512xf32>
    %348 = arith.addf %345, %347 : vector<8x512xf32>
    %349 = vector.extract_strided_slice %348 {offsets = [0, 0], sizes = [8, 128], strides = [1, 1]} : vector<8x512xf32> to vector<8x128xf32>
    %350 = arith.negf %349 : vector<8x128xf32>
    %351 = math.exp %350 : vector<8x128xf32>
    %cst_122 = arith.constant 1.000000e+00 : f32
    %352 = vector.broadcast %cst_122 : f32 to vector<8x128xf32>
    %353 = arith.addf %352, %351 : vector<8x128xf32>
    %354 = arith.divf %352, %353 : vector<8x128xf32>
    %355 = vector.extract_strided_slice %348 {offsets = [0, 128], sizes = [8, 128], strides = [1, 1]} : vector<8x512xf32> to vector<8x128xf32>
    %356 = arith.negf %355 : vector<8x128xf32>
    %357 = math.exp %356 : vector<8x128xf32>
    %cst_123 = arith.constant 1.000000e+00 : f32
    %358 = vector.broadcast %cst_123 : f32 to vector<8x128xf32>
    %359 = arith.addf %358, %357 : vector<8x128xf32>
    %360 = arith.divf %358, %359 : vector<8x128xf32>
    %361 = vector.extract_strided_slice %348 {offsets = [0, 256], sizes = [8, 128], strides = [1, 1]} : vector<8x512xf32> to vector<8x128xf32>
    %362 = math.tanh %361 : vector<8x128xf32>
    %363 = vector.extract_strided_slice %348 {offsets = [0, 384], sizes = [8, 128], strides = [1, 1]} : vector<8x512xf32> to vector<8x128xf32>
    %364 = arith.negf %363 : vector<8x128xf32>
    %365 = math.exp %364 : vector<8x128xf32>
    %cst_124 = arith.constant 1.000000e+00 : f32
    %366 = vector.broadcast %cst_124 : f32 to vector<8x128xf32>
    %367 = arith.addf %366, %365 : vector<8x128xf32>
    %368 = arith.divf %366, %367 : vector<8x128xf32>
    %369 = arith.mulf %360, %342 : vector<8x128xf32>
    %370 = arith.mulf %354, %362 : vector<8x128xf32>
    %371 = arith.addf %369, %370 : vector<8x128xf32>
    %372 = math.tanh %371 : vector<8x128xf32>
    %373 = arith.mulf %368, %372 : vector<8x128xf32>
    %c32_125 = arith.constant 32 : index
    %c0_126 = arith.constant 0 : index
    %374 = vector.load %arg11[%c32_125, %c0_126] : memref<64x512xf32, #tpu.memory_space<vmem>>, vector<8x512xf32>
    %c0_127 = arith.constant 0 : index
    %c0_128 = arith.constant 0 : index
    %375 = vector.load %arg5[%c0_127, %c0_128] : memref<128x512xf32, #tpu.memory_space<vmem>>, vector<128x512xf32>
    %cst_129 = arith.constant dense<0.000000e+00> : vector<8x512xf32>
    %376 = tpu.matmul %373, %375, %cst_129 {dimension_numbers = #tpu.dot_dimension_numbers<[1], [0], [0], [1], [0, 0, 1, 1], [], []>} : vector<8x128xf32>, vector<128x512xf32>, vector<8x512xf32> -> vector<8x512xf32>
    %377 = arith.addf %374, %376 : vector<8x512xf32>
    %378 = vector.extract_strided_slice %377 {offsets = [0, 0], sizes = [8, 128], strides = [1, 1]} : vector<8x512xf32> to vector<8x128xf32>
    %379 = arith.negf %378 : vector<8x128xf32>
    %380 = math.exp %379 : vector<8x128xf32>
    %cst_130 = arith.constant 1.000000e+00 : f32
    %381 = vector.broadcast %cst_130 : f32 to vector<8x128xf32>
    %382 = arith.addf %381, %380 : vector<8x128xf32>
    %383 = arith.divf %381, %382 : vector<8x128xf32>
    %384 = vector.extract_strided_slice %377 {offsets = [0, 128], sizes = [8, 128], strides = [1, 1]} : vector<8x512xf32> to vector<8x128xf32>
    %385 = arith.negf %384 : vector<8x128xf32>
    %386 = math.exp %385 : vector<8x128xf32>
    %cst_131 = arith.constant 1.000000e+00 : f32
    %387 = vector.broadcast %cst_131 : f32 to vector<8x128xf32>
    %388 = arith.addf %387, %386 : vector<8x128xf32>
    %389 = arith.divf %387, %388 : vector<8x128xf32>
    %390 = vector.extract_strided_slice %377 {offsets = [0, 256], sizes = [8, 128], strides = [1, 1]} : vector<8x512xf32> to vector<8x128xf32>
    %391 = math.tanh %390 : vector<8x128xf32>
    %392 = vector.extract_strided_slice %377 {offsets = [0, 384], sizes = [8, 128], strides = [1, 1]} : vector<8x512xf32> to vector<8x128xf32>
    %393 = arith.negf %392 : vector<8x128xf32>
    %394 = math.exp %393 : vector<8x128xf32>
    %cst_132 = arith.constant 1.000000e+00 : f32
    %395 = vector.broadcast %cst_132 : f32 to vector<8x128xf32>
    %396 = arith.addf %395, %394 : vector<8x128xf32>
    %397 = arith.divf %395, %396 : vector<8x128xf32>
    %398 = arith.mulf %389, %371 : vector<8x128xf32>
    %399 = arith.mulf %383, %391 : vector<8x128xf32>
    %400 = arith.addf %398, %399 : vector<8x128xf32>
    %401 = math.tanh %400 : vector<8x128xf32>
    %402 = arith.mulf %397, %401 : vector<8x128xf32>
    %c40_133 = arith.constant 40 : index
    %c0_134 = arith.constant 0 : index
    %403 = vector.load %arg11[%c40_133, %c0_134] : memref<64x512xf32, #tpu.memory_space<vmem>>, vector<8x512xf32>
    %c0_135 = arith.constant 0 : index
    %c0_136 = arith.constant 0 : index
    %404 = vector.load %arg5[%c0_135, %c0_136] : memref<128x512xf32, #tpu.memory_space<vmem>>, vector<128x512xf32>
    %cst_137 = arith.constant dense<0.000000e+00> : vector<8x512xf32>
    %405 = tpu.matmul %402, %404, %cst_137 {dimension_numbers = #tpu.dot_dimension_numbers<[1], [0], [0], [1], [0, 0, 1, 1], [], []>} : vector<8x128xf32>, vector<128x512xf32>, vector<8x512xf32> -> vector<8x512xf32>
    %406 = arith.addf %403, %405 : vector<8x512xf32>
    %407 = vector.extract_strided_slice %406 {offsets = [0, 0], sizes = [8, 128], strides = [1, 1]} : vector<8x512xf32> to vector<8x128xf32>
    %408 = arith.negf %407 : vector<8x128xf32>
    %409 = math.exp %408 : vector<8x128xf32>
    %cst_138 = arith.constant 1.000000e+00 : f32
    %410 = vector.broadcast %cst_138 : f32 to vector<8x128xf32>
    %411 = arith.addf %410, %409 : vector<8x128xf32>
    %412 = arith.divf %410, %411 : vector<8x128xf32>
    %413 = vector.extract_strided_slice %406 {offsets = [0, 128], sizes = [8, 128], strides = [1, 1]} : vector<8x512xf32> to vector<8x128xf32>
    %414 = arith.negf %413 : vector<8x128xf32>
    %415 = math.exp %414 : vector<8x128xf32>
    %cst_139 = arith.constant 1.000000e+00 : f32
    %416 = vector.broadcast %cst_139 : f32 to vector<8x128xf32>
    %417 = arith.addf %416, %415 : vector<8x128xf32>
    %418 = arith.divf %416, %417 : vector<8x128xf32>
    %419 = vector.extract_strided_slice %406 {offsets = [0, 256], sizes = [8, 128], strides = [1, 1]} : vector<8x512xf32> to vector<8x128xf32>
    %420 = math.tanh %419 : vector<8x128xf32>
    %421 = vector.extract_strided_slice %406 {offsets = [0, 384], sizes = [8, 128], strides = [1, 1]} : vector<8x512xf32> to vector<8x128xf32>
    %422 = arith.negf %421 : vector<8x128xf32>
    %423 = math.exp %422 : vector<8x128xf32>
    %cst_140 = arith.constant 1.000000e+00 : f32
    %424 = vector.broadcast %cst_140 : f32 to vector<8x128xf32>
    %425 = arith.addf %424, %423 : vector<8x128xf32>
    %426 = arith.divf %424, %425 : vector<8x128xf32>
    %427 = arith.mulf %418, %400 : vector<8x128xf32>
    %428 = arith.mulf %412, %420 : vector<8x128xf32>
    %429 = arith.addf %427, %428 : vector<8x128xf32>
    %430 = math.tanh %429 : vector<8x128xf32>
    %431 = arith.mulf %426, %430 : vector<8x128xf32>
    %c48_141 = arith.constant 48 : index
    %c0_142 = arith.constant 0 : index
    %432 = vector.load %arg11[%c48_141, %c0_142] : memref<64x512xf32, #tpu.memory_space<vmem>>, vector<8x512xf32>
    %c0_143 = arith.constant 0 : index
    %c0_144 = arith.constant 0 : index
    %433 = vector.load %arg5[%c0_143, %c0_144] : memref<128x512xf32, #tpu.memory_space<vmem>>, vector<128x512xf32>
    %cst_145 = arith.constant dense<0.000000e+00> : vector<8x512xf32>
    %434 = tpu.matmul %431, %433, %cst_145 {dimension_numbers = #tpu.dot_dimension_numbers<[1], [0], [0], [1], [0, 0, 1, 1], [], []>} : vector<8x128xf32>, vector<128x512xf32>, vector<8x512xf32> -> vector<8x512xf32>
    %435 = arith.addf %432, %434 : vector<8x512xf32>
    %436 = vector.extract_strided_slice %435 {offsets = [0, 0], sizes = [8, 128], strides = [1, 1]} : vector<8x512xf32> to vector<8x128xf32>
    %437 = arith.negf %436 : vector<8x128xf32>
    %438 = math.exp %437 : vector<8x128xf32>
    %cst_146 = arith.constant 1.000000e+00 : f32
    %439 = vector.broadcast %cst_146 : f32 to vector<8x128xf32>
    %440 = arith.addf %439, %438 : vector<8x128xf32>
    %441 = arith.divf %439, %440 : vector<8x128xf32>
    %442 = vector.extract_strided_slice %435 {offsets = [0, 128], sizes = [8, 128], strides = [1, 1]} : vector<8x512xf32> to vector<8x128xf32>
    %443 = arith.negf %442 : vector<8x128xf32>
    %444 = math.exp %443 : vector<8x128xf32>
    %cst_147 = arith.constant 1.000000e+00 : f32
    %445 = vector.broadcast %cst_147 : f32 to vector<8x128xf32>
    %446 = arith.addf %445, %444 : vector<8x128xf32>
    %447 = arith.divf %445, %446 : vector<8x128xf32>
    %448 = vector.extract_strided_slice %435 {offsets = [0, 256], sizes = [8, 128], strides = [1, 1]} : vector<8x512xf32> to vector<8x128xf32>
    %449 = math.tanh %448 : vector<8x128xf32>
    %450 = vector.extract_strided_slice %435 {offsets = [0, 384], sizes = [8, 128], strides = [1, 1]} : vector<8x512xf32> to vector<8x128xf32>
    %451 = arith.negf %450 : vector<8x128xf32>
    %452 = math.exp %451 : vector<8x128xf32>
    %cst_148 = arith.constant 1.000000e+00 : f32
    %453 = vector.broadcast %cst_148 : f32 to vector<8x128xf32>
    %454 = arith.addf %453, %452 : vector<8x128xf32>
    %455 = arith.divf %453, %454 : vector<8x128xf32>
    %456 = arith.mulf %447, %429 : vector<8x128xf32>
    %457 = arith.mulf %441, %449 : vector<8x128xf32>
    %458 = arith.addf %456, %457 : vector<8x128xf32>
    %459 = math.tanh %458 : vector<8x128xf32>
    %460 = arith.mulf %455, %459 : vector<8x128xf32>
    %c56_149 = arith.constant 56 : index
    %c0_150 = arith.constant 0 : index
    %461 = vector.load %arg11[%c56_149, %c0_150] : memref<64x512xf32, #tpu.memory_space<vmem>>, vector<8x512xf32>
    %c0_151 = arith.constant 0 : index
    %c0_152 = arith.constant 0 : index
    %462 = vector.load %arg5[%c0_151, %c0_152] : memref<128x512xf32, #tpu.memory_space<vmem>>, vector<128x512xf32>
    %cst_153 = arith.constant dense<0.000000e+00> : vector<8x512xf32>
    %463 = tpu.matmul %460, %462, %cst_153 {dimension_numbers = #tpu.dot_dimension_numbers<[1], [0], [0], [1], [0, 0, 1, 1], [], []>} : vector<8x128xf32>, vector<128x512xf32>, vector<8x512xf32> -> vector<8x512xf32>
    %464 = arith.addf %461, %463 : vector<8x512xf32>
    %465 = vector.extract_strided_slice %464 {offsets = [0, 0], sizes = [8, 128], strides = [1, 1]} : vector<8x512xf32> to vector<8x128xf32>
    %466 = arith.negf %465 : vector<8x128xf32>
    %467 = math.exp %466 : vector<8x128xf32>
    %cst_154 = arith.constant 1.000000e+00 : f32
    %468 = vector.broadcast %cst_154 : f32 to vector<8x128xf32>
    %469 = arith.addf %468, %467 : vector<8x128xf32>
    %470 = arith.divf %468, %469 : vector<8x128xf32>
    %471 = vector.extract_strided_slice %464 {offsets = [0, 128], sizes = [8, 128], strides = [1, 1]} : vector<8x512xf32> to vector<8x128xf32>
    %472 = arith.negf %471 : vector<8x128xf32>
    %473 = math.exp %472 : vector<8x128xf32>
    %cst_155 = arith.constant 1.000000e+00 : f32
    %474 = vector.broadcast %cst_155 : f32 to vector<8x128xf32>
    %475 = arith.addf %474, %473 : vector<8x128xf32>
    %476 = arith.divf %474, %475 : vector<8x128xf32>
    %477 = vector.extract_strided_slice %464 {offsets = [0, 256], sizes = [8, 128], strides = [1, 1]} : vector<8x512xf32> to vector<8x128xf32>
    %478 = math.tanh %477 : vector<8x128xf32>
    %479 = vector.extract_strided_slice %464 {offsets = [0, 384], sizes = [8, 128], strides = [1, 1]} : vector<8x512xf32> to vector<8x128xf32>
    %480 = arith.negf %479 : vector<8x128xf32>
    %481 = math.exp %480 : vector<8x128xf32>
    %cst_156 = arith.constant 1.000000e+00 : f32
    %482 = vector.broadcast %cst_156 : f32 to vector<8x128xf32>
    %483 = arith.addf %482, %481 : vector<8x128xf32>
    %484 = arith.divf %482, %483 : vector<8x128xf32>
    %485 = arith.mulf %476, %458 : vector<8x128xf32>
    %486 = arith.mulf %470, %478 : vector<8x128xf32>
    %487 = arith.addf %485, %486 : vector<8x128xf32>
    %488 = math.tanh %487 : vector<8x128xf32>
    %489 = arith.mulf %484, %488 : vector<8x128xf32>
    %c0_157 = arith.constant 0 : index
    %c0_158 = arith.constant 0 : index
    %490 = vector.load %arg7[%c0_157, %c0_158] : memref<128x128xf32, #tpu.memory_space<vmem>>, vector<128x128xf32>
    %cst_159 = arith.constant dense<0.000000e+00> : vector<8x128xf32>
    %491 = tpu.matmul %489, %490, %cst_159 {dimension_numbers = #tpu.dot_dimension_numbers<[1], [0], [0], [1], [0, 0, 1, 1], [], []>} : vector<8x128xf32>, vector<128x128xf32>, vector<8x128xf32> -> vector<8x128xf32>
    %c0_160 = arith.constant 0 : index
    %c0_161 = arith.constant 0 : index
    %492 = vector.load %arg8[%c0_160, %c0_161] : memref<1x128xf32, #tpu.memory_space<vmem>>, vector<1x128xf32>
    %493 = vector.broadcast %492 : vector<1x128xf32> to vector<8x128xf32>
    %494 = arith.addf %491, %493 : vector<8x128xf32>
    %c0_162 = arith.constant 0 : index
    %c0_163 = arith.constant 0 : index
    %495 = vector.load %arg9[%c0_162, %c0_163] : memref<8x128xf32, #tpu.memory_space<vmem>>, vector<8x128xf32>
    tpu.vector_store %arg9[%c0_162, %c0_163], %494 {strides = array<i32>} : memref<8x128xf32, #tpu.memory_space<vmem>>, vector<8x128xf32>,
    return
  }
}

</mosaic_0001>

<llo_original>
// kernel: lstm_forward.1
$region0: #{lstm_forward.1}
  #allocation0 [shape = 'u32[]', space=smem, size = 0x4, offset = 0x4, fixed_abs, tag = 'smem constant byte address 0x4 - core index']
  #allocation1 [shape = 'u32[144,128]{1,0:T(1,128)}', space=vmem, size = 0x12000, scoped, tag = 'internal scratch']
  #allocation2 [shape = 'f32[64,128]{1,0:T(8,128)}', space=vmem, size = 0x8000, scoped, tag = 'scratch operand']
  #allocation3 [shape = 'f32[64,512]{1,0:T(8,128)}', space=vmem, size = 0x20000, scoped, tag = 'scratch operand']
  %s0 = inlined_call_operand.vmem [shape: f32[64,128], index: 0, kind: input, shape index: {}]
  %s1 = inlined_call_operand.hbm [shape: f32[128,512], index: 1, kind: input, shape index: {}]
  %s2 = inlined_call_operand.hbm [shape: f32[128,512], index: 2, kind: input, shape index: {}]
  %s3 = inlined_call_operand.vmem [shape: f32[1,512], index: 3, kind: input, shape index: {}]
  %s4 = inlined_call_operand.hbm [shape: f32[128,512], index: 4, kind: input, shape index: {}]
  %s5 = inlined_call_operand.hbm [shape: f32[128,512], index: 5, kind: input, shape index: {}]
  %s6 = inlined_call_operand.vmem [shape: f32[1,512], index: 6, kind: input, shape index: {}]
  %s7 = inlined_call_operand.hbm [shape: f32[128,128], index: 7, kind: input, shape index: {}]
  %s8 = inlined_call_operand.vmem [shape: f32[1,128], index: 8, kind: input, shape index: {}]
  %s9 = inlined_call_operand.vmem [shape: f32[8,128], index: 9, kind: output, shape index: {}]
  %s10 = sld [smem:[#allocation0]]
  $region66: #{lstm_forward.1} parent=0
    _
  %s12 = ssub.s32 1, %s10
  %s13 = scalar_select 0, %s12, %s10
  $region1: #{lstm_forward.1} parent=0
    #allocation4 [shape = 'u8[262144]{0}', space=vmem, size = 0x40000, scoped, tag = 'input window, operand 1, single buffered']
    #allocation5 [shape = 's32[1]{0}', space=sflag, size = 0x4, scoped, tag = 'scoped memory for lstm_forward.1']
    #allocation6 [shape = 'u8[262144]{0}', space=vmem, size = 0x40000, scoped, tag = 'input window, operand 2, single buffered']
    #allocation7 [shape = 's32[1]{0}', space=sflag, size = 0x4, scoped, tag = 'scoped memory for lstm_forward.1']
    #allocation8 [shape = 'u8[262144]{0}', space=vmem, size = 0x40000, scoped, tag = 'input window, operand 4, single buffered']
    #allocation9 [shape = 'u8[262144]{0}', space=vmem, size = 0x40000, scoped, tag = 'input window, operand 5, single buffered']
    #allocation10 [shape = 's32[1]{0}', space=sflag, size = 0x4, scoped, tag = 'scoped memory for lstm_forward.1']
    #allocation11 [shape = 'u8[65536]{0}', space=vmem, size = 0x10000, scoped, tag = 'input window, operand 7, single buffered']
    %14 = vsyncpa [#allocation5], 0
    %15 = vsyncpa [#allocation7], 0
    %16 = vsyncpa [#allocation10], 0
    // Predicated region
    $region2: #{lstm_forward.1} parent=1 // pred_check
      _
    $region3: #{lstm_forward.1} parent=1 // pred_check_branch
      %18 = sbr.rel (0) target = $region5
    $region4: #{lstm_forward.1} parent=1 // pred_region
      _
    $region5: #{lstm_forward.1} parent=1 // pred_fallthru
      _
    // Predicated region
    $region6: #{lstm_forward.1} parent=1 // pred_check
      _
    $region7: #{lstm_forward.1} parent=1 // pred_check_branch
      %20 = sbr.rel (0) target = $region9
    $region8: #{lstm_forward.1} parent=1 // pred_region
      %s22 = ssub.s32 8192, 8192
      %23 = vsyncadd [#allocation5], %s22
      %s24 = sshll.u32 [#allocation4], 4
      %s25 = int_to_ptr.vmem [resolvable:$true] %s24
      %30 = dma.hbm_to_vmem [thread:$0]  %s1, 8192, %s25, [#allocation5], 512, 512, 32
    $region9: #{lstm_forward.1} parent=1 // pred_fallthru
      _
    // Predicated region
    $region10: #{lstm_forward.1} parent=1 // pred_check
      _
    $region11: #{lstm_forward.1} parent=1 // pred_check_branch
      %32 = sbr.rel (0) target = $region13
    $region12: #{lstm_forward.1} parent=1 // pred_region
      %s34 = ssub.s32 8192, 8192
      %35 = vsyncadd [#allocation7], %s34
      %s36 = sshll.u32 [#allocation6], 4
      %s37 = int_to_ptr.vmem [resolvable:$true] %s36
      %42 = dma.hbm_to_vmem [thread:$0]  %s2, 8192, %s37, [#allocation7], 512, 512, 32
    $region13: #{lstm_forward.1} parent=1 // pred_fallthru
      _
    // Predicated region
    $region14: #{lstm_forward.1} parent=1 // pred_check
      _
    $region15: #{lstm_forward.1} parent=1 // pred_check_branch
      %44 = sbr.rel (0) target = $region17
    $region16: #{lstm_forward.1} parent=1 // pred_region
      _
    $region17: #{lstm_forward.1} parent=1 // pred_fallthru
      _
    // Predicated region
    $region18: #{lstm_forward.1} parent=1 // pred_check
      _
    $region19: #{lstm_forward.1} parent=1 // pred_check_branch
      %46 = sbr.rel (0) target = $region21
    $region20: #{lstm_forward.1} parent=1 // pred_region
      %s48 = ssub.s32 8192, 8192
      %49 = vsyncadd [#allocation7], %s48
      %s50 = sshll.u32 [#allocation8], 4
      %s51 = int_to_ptr.vmem [resolvable:$true] %s50
      %56 = dma.hbm_to_vmem [thread:$0]  %s4, 8192, %s51, [#allocation7], 512, 512, 32
    $region21: #{lstm_forward.1} parent=1 // pred_fallthru
      _
    // Predicated region
    $region22: #{lstm_forward.1} parent=1 // pred_check
      _
    $region23: #{lstm_forward.1} parent=1 // pred_check_branch
      %58 = sbr.rel (0) target = $region25
    $region24: #{lstm_forward.1} parent=1 // pred_region
      %s60 = ssub.s32 8192, 8192
      %61 = vsyncadd [#allocation10], %s60
      %s62 = sshll.u32 [#allocation9], 4
      %s63 = int_to_ptr.vmem [resolvable:$true] %s62
      %68 = dma.hbm_to_vmem [thread:$0]  %s5, 8192, %s63, [#allocation10], 512, 512, 32
    $region25: #{lstm_forward.1} parent=1 // pred_fallthru
      _
    // Predicated region
    $region26: #{lstm_forward.1} parent=1 // pred_check
      _
    $region27: #{lstm_forward.1} parent=1 // pred_check_branch
      %70 = sbr.rel (0) target = $region29
    $region28: #{lstm_forward.1} parent=1 // pred_region
      _
    $region29: #{lstm_forward.1} parent=1 // pred_fallthru
      _
    // Predicated region
    $region30: #{lstm_forward.1} parent=1 // pred_check
      _
    $region31: #{lstm_forward.1} parent=1 // pred_check_branch
      %72 = sbr.rel (0) target = $region33
    $region32: #{lstm_forward.1} parent=1 // pred_region
      %s74 = ssub.s32 2048, 2048
      %75 = vsyncadd [#allocation10], %s74
      %s76 = sshll.u32 [#allocation11], 4
      %s77 = int_to_ptr.vmem [resolvable:$true] %s76
      %82 = dma.hbm_to_vmem [thread:$0]  %s7, 2048, %s77, [#allocation10], 128, 128, 8
    $region33: #{lstm_forward.1} parent=1 // pred_fallthru
      _
    // Predicated region
    $region34: #{lstm_forward.1} parent=1 // pred_check
      _
    $region35: #{lstm_forward.1} parent=1 // pred_check_branch
      %84 = sbr.rel (0) target = $region37
    $region36: #{lstm_forward.1} parent=1 // pred_region
      _
    $region37: #{lstm_forward.1} parent=1 // pred_fallthru
      _
    // Predicated region
    $region38: #{lstm_forward.1} parent=1 // pred_check
      _
    $region39: #{lstm_forward.1} parent=1 // pred_check_branch
      %86 = sbr.rel (0) target = $region41
    $region40: #{lstm_forward.1} parent=1 // pred_region
      %87 = dma.done [#allocation5], 8192
    $region41: #{lstm_forward.1} parent=1 // pred_fallthru
      _
    // Predicated region
    $region42: #{lstm_forward.1} parent=1 // pred_check
      _
    $region43: #{lstm_forward.1} parent=1 // pred_check_branch
      %89 = sbr.rel (0) target = $region45
    $region44: #{lstm_forward.1} parent=1 // pred_region
      %90 = dma.done [#allocation7], 8192
    $region45: #{lstm_forward.1} parent=1 // pred_fallthru
      _
    // Predicated region
    $region46: #{lstm_forward.1} parent=1 // pred_check
      _
    $region47: #{lstm_forward.1} parent=1 // pred_check_branch
      %92 = sbr.rel (0) target = $region49
    $region48: #{lstm_forward.1} parent=1 // pred_region
      %93 = dma.done [#allocation7], 8192
    $region49: #{lstm_forward.1} parent=1 // pred_fallthru
      _
    // Predicated region
    $region50: #{lstm_forward.1} parent=1 // pred_check
      _
    $region51: #{lstm_forward.1} parent=1 // pred_check_branch
      %95 = sbr.rel (0) target = $region53
    $region52: #{lstm_forward.1} parent=1 // pred_region
      %96 = dma.done [#allocation10], 8192
    $region53: #{lstm_forward.1} parent=1 // pred_fallthru
      _
    // Predicated region
    $region54: #{lstm_forward.1} parent=1 // pred_check
      _
    $region55: #{lstm_forward.1} parent=1 // pred_check_branch
      %98 = sbr.rel (0) target = $region57
    $region56: #{lstm_forward.1} parent=1 // pred_region
      %99 = dma.done [#allocation10], 2048
    $region57: #{lstm_forward.1} parent=1 // pred_fallthru
      _
    %v100 = vld [vmem:[%s0] sm:$0xff]
    %v101 = vld [vmem:[%s0 + $0x8] sm:$0xff]
    %v102 = vld [vmem:[%s0 + $0x10] sm:$0xff]
    %v103 = vld [vmem:[%s0 + $0x18] sm:$0xff]
    %v104 = vld [vmem:[%s0 + $0x20] sm:$0xff]
    %v105 = vld [vmem:[%s0 + $0x28] sm:$0xff]
    %v106 = vld [vmem:[%s0 + $0x30] sm:$0xff]
    %v107 = vld [vmem:[%s0 + $0x38] sm:$0xff]
    %v108 = vld [vmem:[#allocation4] sm:$0xff]
    %v109 = vld [vmem:[#allocation4 + $0x8] sm:$0xff]
    %v110 = vld [vmem:[#allocation4 + $0x10] sm:$0xff]
    %v111 = vld [vmem:[#allocation4 + $0x18] sm:$0xff]
    %v112 = vld [vmem:[#allocation4 + $0x20] sm:$0xff]
    %v113 = vld [vmem:[#allocation4 + $0x28] sm:$0xff]
    %v114 = vld [vmem:[#allocation4 + $0x30] sm:$0xff]
    %v115 = vld [vmem:[#allocation4 + $0x38] sm:$0xff]
    %v116 = vld [vmem:[#allocation4 + $0x40] sm:$0xff]
    %v117 = vld [vmem:[#allocation4 + $0x48] sm:$0xff]
    %v118 = vld [vmem:[#allocation4 + $0x50] sm:$0xff]
    %v119 = vld [vmem:[#allocation4 + $0x58] sm:$0xff]
    %v120 = vld [vmem:[#allocation4 + $0x60] sm:$0xff]
    %v121 = vld [vmem:[#allocation4 + $0x68] sm:$0xff]
    %v122 = vld [vmem:[#allocation4 + $0x70] sm:$0xff]
    %v123 = vld [vmem:[#allocation4 + $0x78] sm:$0xff]
    %v124 = vld [vmem:[#allocation4 + $0x80] sm:$0xff]
    %v125 = vld [vmem:[#allocation4 + $0x88] sm:$0xff]
    %v126 = vld [vmem:[#allocation4 + $0x90] sm:$0xff]
    %v127 = vld [vmem:[#allocation4 + $0x98] sm:$0xff]
    %v128 = vld [vmem:[#allocation4 + $0xa0] sm:$0xff]
    %v129 = vld [vmem:[#allocation4 + $0xa8] sm:$0xff]
    %v130 = vld [vmem:[#allocation4 + $0xb0] sm:$0xff]
    %v131 = vld [vmem:[#allocation4 + $0xb8] sm:$0xff]
    %v132 = vld [vmem:[#allocation4 + $0xc0] sm:$0xff]
    %v133 = vld [vmem:[#allocation4 + $0xc8] sm:$0xff]
    %v134 = vld [vmem:[#allocation4 + $0xd0] sm:$0xff]
    %v135 = vld [vmem:[#allocation4 + $0xd8] sm:$0xff]
    %v136 = vld [vmem:[#allocation4 + $0xe0] sm:$0xff]
    %v137 = vld [vmem:[#allocation4 + $0xe8] sm:$0xff]
    %v138 = vld [vmem:[#allocation4 + $0xf0] sm:$0xff]
    %v139 = vld [vmem:[#allocation4 + $0xf8] sm:$0xff]
    %v140 = vld [vmem:[#allocation4 + $0x100] sm:$0xff]
    %v141 = vld [vmem:[#allocation4 + $0x108] sm:$0xff]
    %v142 = vld [vmem:[#allocation4 + $0x110] sm:$0xff]
    %v143 = vld [vmem:[#allocation4 + $0x118] sm:$0xff]
    %v144 = vld [vmem:[#allocation4 + $0x120] sm:$0xff]
    %v145 = vld [vmem:[#allocation4 + $0x128] sm:$0xff]
    %v146 = vld [vmem:[#allocation4 + $0x130] sm:$0xff]
    %v147 = vld [vmem:[#allocation4 + $0x138] sm:$0xff]
    %v148 = vld [vmem:[#allocation4 + $0x140] sm:$0xff]
    %v149 = vld [vmem:[#allocation4 + $0x148] sm:$0xff]
    %v150 = vld [vmem:[#allocation4 + $0x150] sm:$0xff]
    %v151 = vld [vmem:[#allocation4 + $0x158] sm:$0xff]
    %v152 = vld [vmem:[#allocation4 + $0x160] sm:$0xff]
    %v153 = vld [vmem:[#allocation4 + $0x168] sm:$0xff]
    %v154 = vld [vmem:[#allocation4 + $0x170] sm:$0xff]
    %v155 = vld [vmem:[#allocation4 + $0x178] sm:$0xff]
    %v156 = vld [vmem:[#allocation4 + $0x180] sm:$0xff]
    %v157 = vld [vmem:[#allocation4 + $0x188] sm:$0xff]
    %v158 = vld [vmem:[#allocation4 + $0x190] sm:$0xff]
    %v159 = vld [vmem:[#allocation4 + $0x198] sm:$0xff]
    %v160 = vld [vmem:[#allocation4 + $0x1a0] sm:$0xff]
    %v161 = vld [vmem:[#allocation4 + $0x1a8] sm:$0xff]
    %v162 = vld [vmem:[#allocation4 + $0x1b0] sm:$0xff]
    %v163 = vld [vmem:[#allocation4 + $0x1b8] sm:$0xff]
    %v164 = vld [vmem:[#allocation4 + $0x1c0] sm:$0xff]
    %v165 = vld [vmem:[#allocation4 + $0x1c8] sm:$0xff]
    %v166 = vld [vmem:[#allocation4 + $0x1d0] sm:$0xff]
    %v167 = vld [vmem:[#allocation4 + $0x1d8] sm:$0xff]
    %v168 = vld [vmem:[#allocation4 + $0x1e0] sm:$0xff]
    %v169 = vld [vmem:[#allocation4 + $0x1e8] sm:$0xff]
    %v170 = vld [vmem:[#allocation4 + $0x1f0] sm:$0xff]
    %v171 = vld [vmem:[#allocation4 + $0x1f8] sm:$0xff]
    %v172 = vld [vmem:[%s3] sm:$0xf]
    %v174 = vlaneseq
    %v175 = vshrl.u32 %v174, 7
    %v176 = vsub.s32 0, %v175
    %v177 = vrot.slane %v172, %v176
    %v178 = vlaneseq
    %v179 = vshrl.u32 %v178, 7
    %v180 = vsub.s32 1, %v179
    %v181 = vrot.slane %v172, %v180
    %v182 = vlaneseq
    %v183 = vshrl.u32 %v182, 7
    %v184 = vsub.s32 2, %v183
    %v185 = vrot.slane %v172, %v184
    %v186 = vlaneseq
    %v187 = vshrl.u32 %v186, 7
    %v188 = vsub.s32 3, %v187
    %v189 = vrot.slane %v172, %v188
    %194 = vmatprep.subr.mxu0 %v169
    %195 = vmatpush1.msra.mxu0 %v168
    %196 = vmatprep.subr.mxu0 %v165
    %197 = vmatpush1.msra.mxu0 %v164
    %198 = vmatprep.subr.mxu0 %v161
    %199 = vmatpush1.msra.mxu0 %v160
    %200 = vmatprep.subr.mxu0 %v157
    %201 = vmatpush1.msra.mxu0 %v156
    %202 = vmatprep.subr.mxu0 %v153
    %203 = vmatpush1.msra.mxu0 %v152
    %204 = vmatprep.subr.mxu0 %v149
    %205 = vmatpush1.msra.mxu0 %v148
    %206 = vmatprep.subr.mxu0 %v145
    %207 = vmatpush1.msra.mxu0 %v144
    %208 = vmatprep.subr.mxu0 %v141
    %209 = vmatpush1.msra.mxu0 %v140
    %210 = vmatprep.subr.mxu0 %v137
    %211 = vmatpush1.msra.mxu0 %v136
    %212 = vmatprep.subr.mxu0 %v133
    %213 = vmatpush1.msra.mxu0 %v132
    %214 = vmatprep.subr.mxu0 %v129
    %215 = vmatpush1.msra.mxu0 %v128
    %216 = vmatprep.subr.mxu0 %v125
    %217 = vmatpush1.msra.mxu0 %v124
    %218 = vmatprep.subr.mxu0 %v121
    %219 = vmatpush1.msra.mxu0 %v120
    %220 = vmatprep.subr.mxu0 %v117
    %221 = vmatpush1.msra.mxu0 %v116
    %222 = vmatprep.subr.mxu0 %v113
    %223 = vmatpush1.msra.mxu0 %v112
    %224 = vmatprep.subr.mxu0 %v109
    %225 = vmatpush1.msra.mxu0 %v108
    %226 = vmatprep.subr.mxu0 0.0
    %227 = vmatpush2.msra.mxu0 0.0
    %228 = vmatprep.subr.mxu0 0.0
    %229 = vmatpush2.msra.mxu0 0.0
    %230 = vmatprep.subr.mxu0 0.0
    %231 = vmatpush2.msra.mxu0 0.0
    %232 = vmatprep.subr.mxu0 0.0
    %233 = vmatpush2.msra.mxu0 0.0
    %234 = vmatprep.subr.mxu0 0.0
    %235 = vmatpush2.msra.mxu0 0.0
    %236 = vmatprep.subr.mxu0 0.0
    %237 = vmatpush2.msra.mxu0 0.0
    %238 = vmatprep.subr.mxu0 0.0
    %239 = vmatpush2.msra.mxu0 0.0
    %240 = vmatprep.subr.mxu0 0.0
    %241 = vmatpush2.msra.mxu0 0.0
    %242 = vmatprep.subr.mxu0 0.0
    %243 = vmatpush2.msra.mxu0 0.0
    %244 = vmatprep.subr.mxu0 0.0
    %245 = vmatpush2.msra.mxu0 0.0
    %246 = vmatprep.subr.mxu0 0.0
    %247 = vmatpush2.msra.mxu0 0.0
    %248 = vmatprep.subr.mxu0 0.0
    %249 = vmatpush2.msra.mxu0 0.0
    %250 = vmatprep.subr.mxu0 0.0
    %251 = vmatpush2.msra.mxu0 0.0
    %252 = vmatprep.subr.mxu0 0.0
    %253 = vmatpush2.msra.mxu0 0.0
    %254 = vmatprep.subr.mxu0 0.0
    %255 = vmatpush2.msra.mxu0 0.0
    %256 = vmatprep.subr.mxu0 0.0
    %257 = vmatpush2.msra.mxu0 0.0
    %258 = vmatprep.mubr.f32.mxu0 0.0
    %259 = vmatmul.mubr.f32.gmra.mxu0 %v100
    %v260 = vpop.f32.mrf.mxu0
    %v261 = vadd.f32 %v177, %v260
    %v262 = vpop.f32.mrf.mxu0
    %v263 = vadd.f32 %v181, %v262
    %264 = vmatprep.mubr.f32.mxu0 0.0
    %265 = vmatmul.mubr.f32.gmra.mxu0 %v101
    %v266 = vpop.f32.mrf.mxu0
    %v267 = vadd.f32 %v177, %v266
    %v268 = vpop.f32.mrf.mxu0
    %v269 = vadd.f32 %v181, %v268
    %270 = vmatprep.mubr.f32.mxu0 0.0
    %271 = vmatmul.mubr.f32.gmra.mxu0 %v102
    %v272 = vpop.f32.mrf.mxu0
    %v273 = vadd.f32 %v177, %v272
    %v274 = vpop.f32.mrf.mxu0
    %v275 = vadd.f32 %v181, %v274
    %276 = vmatprep.mubr.f32.mxu0 0.0
    %277 = vmatmul.mubr.f32.gmra.mxu0 %v103
    %v278 = vpop.f32.mrf.mxu0
    %v279 = vadd.f32 %v177, %v278
    %v280 = vpop.f32.mrf.mxu0
    %v281 = vadd.f32 %v181, %v280
    %282 = vmatprep.mubr.f32.mxu0 0.0
    %283 = vmatmul.mubr.f32.gmra.mxu0 %v104
    %v284 = vpop.f32.mrf.mxu0
    %v285 = vadd.f32 %v177, %v284
    %v286 = vpop.f32.mrf.mxu0
    %v287 = vadd.f32 %v181, %v286
    %288 = vmatprep.mubr.f32.mxu0 0.0
    %289 = vmatmul.mubr.f32.gmra.mxu0 %v105
    %v290 = vpop.f32.mrf.mxu0
    %v291 = vadd.f32 %v177, %v290
    %v292 = vpop.f32.mrf.mxu0
    %v293 = vadd.f32 %v181, %v292
    %294 = vmatprep.mubr.f32.mxu0 0.0
    %295 = vmatmul.mubr.f32.gmra.mxu0 %v106
    %v296 = vpop.f32.mrf.mxu0
    %v297 = vadd.f32 %v177, %v296
    %v298 = vpop.f32.mrf.mxu0
    %v299 = vadd.f32 %v181, %v298
    %300 = vmatprep.mubr.f32.mxu0 0.0
    %301 = vmatmul.mubr.f32.gmra.mxu0 %v107
    %v302 = vpop.f32.mrf.mxu0
    %v303 = vadd.f32 %v177, %v302
    %v304 = vpop.f32.mrf.mxu0
    %v305 = vadd.f32 %v181, %v304
    %306 = vdwg.mxu0
    %307 = vmatprep.subr.mxu0 %v171
    %308 = vmatpush1.msra.mxu0 %v170
    %309 = vmatprep.subr.mxu0 %v167
    %310 = vmatpush1.msra.mxu0 %v166
    %311 = vmatprep.subr.mxu0 %v163
    %312 = vmatpush1.msra.mxu0 %v162
    %313 = vmatprep.subr.mxu0 %v159
    %314 = vmatpush1.msra.mxu0 %v158
    %315 = vmatprep.subr.mxu0 %v155
    %316 = vmatpush1.msra.mxu0 %v154
    %317 = vmatprep.subr.mxu0 %v151
    %318 = vmatpush1.msra.mxu0 %v150
    %319 = vmatprep.subr.mxu0 %v147
    %320 = vmatpush1.msra.mxu0 %v146
    %321 = vmatprep.subr.mxu0 %v143
    %322 = vmatpush1.msra.mxu0 %v142
    %323 = vmatprep.subr.mxu0 %v139
    %324 = vmatpush1.msra.mxu0 %v138
    %325 = vmatprep.subr.mxu0 %v135
    %326 = vmatpush1.msra.mxu0 %v134
    %327 = vmatprep.subr.mxu0 %v131
    %328 = vmatpush1.msra.mxu0 %v130
    %329 = vmatprep.subr.mxu0 %v127
    %330 = vmatpush1.msra.mxu0 %v126
    %331 = vmatprep.subr.mxu0 %v123
    %332 = vmatpush1.msra.mxu0 %v122
    %333 = vmatprep.subr.mxu0 %v119
    %334 = vmatpush1.msra.mxu0 %v118
    %335 = vmatprep.subr.mxu0 %v115
    %336 = vmatpush1.msra.mxu0 %v114
    %337 = vmatprep.subr.mxu0 %v111
    %338 = vmatpush1.msra.mxu0 %v110
    %339 = vmatprep.subr.mxu0 0.0
    %340 = vmatpush2.msra.mxu0 0.0
    %341 = vmatprep.subr.mxu0 0.0
    %342 = vmatpush2.msra.mxu0 0.0
    %343 = vmatprep.subr.mxu0 0.0
    %344 = vmatpush2.msra.mxu0 0.0
    %345 = vmatprep.subr.mxu0 0.0
    %346 = vmatpush2.msra.mxu0 0.0
    %347 = vmatprep.subr.mxu0 0.0
    %348 = vmatpush2.msra.mxu0 0.0
    %349 = vmatprep.subr.mxu0 0.0
    %350 = vmatpush2.msra.mxu0 0.0
    %351 = vmatprep.subr.mxu0 0.0
    %352 = vmatpush2.msra.mxu0 0.0
    %353 = vmatprep.subr.mxu0 0.0
    %354 = vmatpush2.msra.mxu0 0.0
    %355 = vmatprep.subr.mxu0 0.0
    %356 = vmatpush2.msra.mxu0 0.0
    %357 = vmatprep.subr.mxu0 0.0
    %358 = vmatpush2.msra.mxu0 0.0
    %359 = vmatprep.subr.mxu0 0.0
    %360 = vmatpush2.msra.mxu0 0.0
    %361 = vmatprep.subr.mxu0 0.0
    %362 = vmatpush2.msra.mxu0 0.0
    %363 = vmatprep.subr.mxu0 0.0
    %364 = vmatpush2.msra.mxu0 0.0
    %365 = vmatprep.subr.mxu0 0.0
    %366 = vmatpush2.msra.mxu0 0.0
    %367 = vmatprep.subr.mxu0 0.0
    %368 = vmatpush2.msra.mxu0 0.0
    %369 = vmatprep.subr.mxu0 0.0
    %370 = vmatpush2.msra.mxu0 0.0
    %371 = vmatprep.mubr.f32.mxu0 0.0
    %372 = vmatmul.mubr.f32.gmra.mxu0 %v100
    %v373 = vpop.f32.mrf.mxu0
    %v374 = vadd.f32 %v185, %v373
    %v375 = vpop.f32.mrf.mxu0
    %v376 = vadd.f32 %v189, %v375
    %377 = vmatprep.mubr.f32.mxu0 0.0
    %378 = vmatmul.mubr.f32.gmra.mxu0 %v101
    %v379 = vpop.f32.mrf.mxu0
    %v380 = vadd.f32 %v185, %v379
    %v381 = vpop.f32.mrf.mxu0
    %v382 = vadd.f32 %v189, %v381
    %383 = vmatprep.mubr.f32.mxu0 0.0
    %384 = vmatmul.mubr.f32.gmra.mxu0 %v102
    %v385 = vpop.f32.mrf.mxu0
    %v386 = vadd.f32 %v185, %v385
    %v387 = vpop.f32.mrf.mxu0
    %v388 = vadd.f32 %v189, %v387
    %389 = vmatprep.mubr.f32.mxu0 0.0
    %390 = vmatmul.mubr.f32.gmra.mxu0 %v103
    %v391 = vpop.f32.mrf.mxu0
    %v392 = vadd.f32 %v185, %v391
    %v393 = vpop.f32.mrf.mxu0
    %v394 = vadd.f32 %v189, %v393
    %395 = vmatprep.mubr.f32.mxu0 0.0
    %396 = vmatmul.mubr.f32.gmra.mxu0 %v104
    %v397 = vpop.f32.mrf.mxu0
    %v398 = vadd.f32 %v185, %v397
    %v399 = vpop.f32.mrf.mxu0
    %v400 = vadd.f32 %v189, %v399
    %401 = vmatprep.mubr.f32.mxu0 0.0
    %402 = vmatmul.mubr.f32.gmra.mxu0 %v105
    %v403 = vpop.f32.mrf.mxu0
    %v404 = vadd.f32 %v185, %v403
    %v405 = vpop.f32.mrf.mxu0
    %v406 = vadd.f32 %v189, %v405
    %407 = vmatprep.mubr.f32.mxu0 0.0
    %408 = vmatmul.mubr.f32.gmra.mxu0 %v106
    %v409 = vpop.f32.mrf.mxu0
    %v410 = vadd.f32 %v185, %v409
    %v411 = vpop.f32.mrf.mxu0
    %v412 = vadd.f32 %v189, %v411
    %413 = vmatprep.mubr.f32.mxu0 0.0
    %414 = vmatmul.mubr.f32.gmra.mxu0 %v107
    %v415 = vpop.f32.mrf.mxu0
    %v416 = vadd.f32 %v185, %v415
    %v417 = vpop.f32.mrf.mxu0
    %v418 = vadd.f32 %v189, %v417
    %419 = vdwg.mxu0
    %420 = vst [vmem:[#allocation3] sm:$0xff] %v261
    %421 = vst [vmem:[#allocation3 + $0x8] sm:$0xff] %v263
    %422 = vst [vmem:[#allocation3 + $0x10] sm:$0xff] %v374
    %423 = vst [vmem:[#allocation3 + $0x18] sm:$0xff] %v376
    %424 = vst [vmem:[#allocation3 + $0x20] sm:$0xff] %v267
    %425 = vst [vmem:[#allocation3 + $0x28] sm:$0xff] %v269
    %426 = vst [vmem:[#allocation3 + $0x30] sm:$0xff] %v380
    %427 = vst [vmem:[#allocation3 + $0x38] sm:$0xff] %v382
    %428 = vst [vmem:[#allocation3 + $0x40] sm:$0xff] %v273
    %429 = vst [vmem:[#allocation3 + $0x48] sm:$0xff] %v275
    %430 = vst [vmem:[#allocation3 + $0x50] sm:$0xff] %v386
    %431 = vst [vmem:[#allocation3 + $0x58] sm:$0xff] %v388
    %432 = vst [vmem:[#allocation3 + $0x60] sm:$0xff] %v279
    %433 = vst [vmem:[#allocation3 + $0x68] sm:$0xff] %v281
    %434 = vst [vmem:[#allocation3 + $0x70] sm:$0xff] %v392
    %435 = vst [vmem:[#allocation3 + $0x78] sm:$0xff] %v394
    %436 = vst [vmem:[#allocation3 + $0x80] sm:$0xff] %v285
    %437 = vst [vmem:[#allocation3 + $0x88] sm:$0xff] %v287
    %438 = vst [vmem:[#allocation3 + $0x90] sm:$0xff] %v398
    %439 = vst [vmem:[#allocation3 + $0x98] sm:$0xff] %v400
    %440 = vst [vmem:[#allocation3 + $0xa0] sm:$0xff] %v291
    %441 = vst [vmem:[#allocation3 + $0xa8] sm:$0xff] %v293
    %442 = vst [vmem:[#allocation3 + $0xb0] sm:$0xff] %v404
    %443 = vst [vmem:[#allocation3 + $0xb8] sm:$0xff] %v406
    %444 = vst [vmem:[#allocation3 + $0xc0] sm:$0xff] %v297
    %445 = vst [vmem:[#allocation3 + $0xc8] sm:$0xff] %v299
    %446 = vst [vmem:[#allocation3 + $0xd0] sm:$0xff] %v410
    %447 = vst [vmem:[#allocation3 + $0xd8] sm:$0xff] %v412
    %448 = vst [vmem:[#allocation3 + $0xe0] sm:$0xff] %v303
    %449 = vst [vmem:[#allocation3 + $0xe8] sm:$0xff] %v305
    %450 = vst [vmem:[#allocation3 + $0xf0] sm:$0xff] %v416
    %451 = vst [vmem:[#allocation3 + $0xf8] sm:$0xff] %v418
    %v452 = vld [vmem:[#allocation3] sm:$0xff]
    %v453 = vld [vmem:[#allocation3 + $0x8] sm:$0xff]
    %v454 = vld [vmem:[#allocation3 + $0x10] sm:$0xff]
    %v455 = vld [vmem:[#allocation3 + $0x18] sm:$0xff]
    %v456 = vld [vmem:[#allocation6] sm:$0xff]
    %v457 = vld [vmem:[#allocation6 + $0x8] sm:$0xff]
    %v458 = vld [vmem:[#allocation6 + $0x10] sm:$0xff]
    %v459 = vld [vmem:[#allocation6 + $0x18] sm:$0xff]
    %v460 = vld [vmem:[#allocation6 + $0x20] sm:$0xff]
    %v461 = vld [vmem:[#allocation6 + $0x28] sm:$0xff]
    %v462 = vld [vmem:[#allocation6 + $0x30] sm:$0xff]
    %v463 = vld [vmem:[#allocation6 + $0x38] sm:$0xff]
    %v464 = vld [vmem:[#allocation6 + $0x40] sm:$0xff]
    %v465 = vld [vmem:[#allocation6 + $0x48] sm:$0xff]
    %v466 = vld [vmem:[#allocation6 + $0x50] sm:$0xff]
    %v467 = vld [vmem:[#allocation6 + $0x58] sm:$0xff]
    %v468 = vld [vmem:[#allocation6 + $0x60] sm:$0xff]
    %v469 = vld [vmem:[#allocation6 + $0x68] sm:$0xff]
    %v470 = vld [vmem:[#allocation6 + $0x70] sm:$0xff]
    %v471 = vld [vmem:[#allocation6 + $0x78] sm:$0xff]
    %v472 = vld [vmem:[#allocation6 + $0x80] sm:$0xff]
    %v473 = vld [vmem:[#allocation6 + $0x88] sm:$0xff]
    %v474 = vld [vmem:[#allocation6 + $0x90] sm:$0xff]
    %v475 = vld [vmem:[#allocation6 + $0x98] sm:$0xff]
    %v476 = vld [vmem:[#allocation6 + $0xa0] sm:$0xff]
    %v477 = vld [vmem:[#allocation6 + $0xa8] sm:$0xff]
    %v478 = vld [vmem:[#allocation6 + $0xb0] sm:$0xff]
    %v479 = vld [vmem:[#allocation6 + $0xb8] sm:$0xff]
    %v480 = vld [vmem:[#allocation6 + $0xc0] sm:$0xff]
    %v481 = vld [vmem:[#allocation6 + $0xc8] sm:$0xff]
    %v482 = vld [vmem:[#allocation6 + $0xd0] sm:$0xff]
    %v483 = vld [vmem:[#allocation6 + $0xd8] sm:$0xff]
    %v484 = vld [vmem:[#allocation6 + $0xe0] sm:$0xff]
    %v485 = vld [vmem:[#allocation6 + $0xe8] sm:$0xff]
    %v486 = vld [vmem:[#allocation6 + $0xf0] sm:$0xff]
    %v487 = vld [vmem:[#allocation6 + $0xf8] sm:$0xff]
    %v488 = vld [vmem:[#allocation6 + $0x100] sm:$0xff]
    %v489 = vld [vmem:[#allocation6 + $0x108] sm:$0xff]
    %v490 = vld [vmem:[#allocation6 + $0x110] sm:$0xff]
    %v491 = vld [vmem:[#allocation6 + $0x118] sm:$0xff]
    %v492 = vld [vmem:[#allocation6 + $0x120] sm:$0xff]
    %v493 = vld [vmem:[#allocation6 + $0x128] sm:$0xff]
    %v494 = vld [vmem:[#allocation6 + $0x130] sm:$0xff]
    %v495 = vld [vmem:[#allocation6 + $0x138] sm:$0xff]
    %v496 = vld [vmem:[#allocation6 + $0x140] sm:$0xff]
    %v497 = vld [vmem:[#allocation6 + $0x148] sm:$0xff]
    %v498 = vld [vmem:[#allocation6 + $0x150] sm:$0xff]
    %v499 = vld [vmem:[#allocation6 + $0x158] sm:$0xff]
    %v500 = vld [vmem:[#allocation6 + $0x160] sm:$0xff]
    %v501 = vld [vmem:[#allocation6 + $0x168] sm:$0xff]
    %v502 = vld [vmem:[#allocation6 + $0x170] sm:$0xff]
    %v503 = vld [vmem:[#allocation6 + $0x178] sm:$0xff]
    %v504 = vld [vmem:[#allocation6 + $0x180] sm:$0xff]
    %v505 = vld [vmem:[#allocation6 + $0x188] sm:$0xff]
    %v506 = vld [vmem:[#allocation6 + $0x190] sm:$0xff]
    %v507 = vld [vmem:[#allocation6 + $0x198] sm:$0xff]
    %v508 = vld [vmem:[#allocation6 + $0x1a0] sm:$0xff]
    %v509 = vld [vmem:[#allocation6 + $0x1a8] sm:$0xff]
    %v510 = vld [vmem:[#allocation6 + $0x1b0] sm:$0xff]
    %v511 = vld [vmem:[#allocation6 + $0x1b8] sm:$0xff]
    %v512 = vld [vmem:[#allocation6 + $0x1c0] sm:$0xff]
    %v513 = vld [vmem:[#allocation6 + $0x1c8] sm:$0xff]
    %v514 = vld [vmem:[#allocation6 + $0x1d0] sm:$0xff]
    %v515 = vld [vmem:[#allocation6 + $0x1d8] sm:$0xff]
    %v516 = vld [vmem:[#allocation6 + $0x1e0] sm:$0xff]
    %v517 = vld [vmem:[#allocation6 + $0x1e8] sm:$0xff]
    %v518 = vld [vmem:[#allocation6 + $0x1f0] sm:$0xff]
    %v519 = vld [vmem:[#allocation6 + $0x1f8] sm:$0xff]
    %520 = vmatprep.subr.mxu0 %v517
    %521 = vmatpush1.msra.mxu0 %v516
    %522 = vmatprep.subr.mxu0 %v513
    %523 = vmatpush1.msra.mxu0 %v512
    %524 = vmatprep.subr.mxu0 %v509
    %525 = vmatpush1.msra.mxu0 %v508
    %526 = vmatprep.subr.mxu0 %v505
    %527 = vmatpush1.msra.mxu0 %v504
    %528 = vmatprep.subr.mxu0 %v501
    %529 = vmatpush1.msra.mxu0 %v500
    %530 = vmatprep.subr.mxu0 %v497
    %531 = vmatpush1.msra.mxu0 %v496
    %532 = vmatprep.subr.mxu0 %v493
    %533 = vmatpush1.msra.mxu0 %v492
    %534 = vmatprep.subr.mxu0 %v489
    %535 = vmatpush1.msra.mxu0 %v488
    %536 = vmatprep.subr.mxu0 %v485
    %537 = vmatpush1.msra.mxu0 %v484
    %538 = vmatprep.subr.mxu0 %v481
    %539 = vmatpush1.msra.mxu0 %v480
    %540 = vmatprep.subr.mxu0 %v477
    %541 = vmatpush1.msra.mxu0 %v476
    %542 = vmatprep.subr.mxu0 %v473
    %543 = vmatpush1.msra.mxu0 %v472
    %544 = vmatprep.subr.mxu0 %v469
    %545 = vmatpush1.msra.mxu0 %v468
    %546 = vmatprep.subr.mxu0 %v465
    %547 = vmatpush1.msra.mxu0 %v464
    %548 = vmatprep.subr.mxu0 %v461
    %549 = vmatpush1.msra.mxu0 %v460
    %550 = vmatprep.subr.mxu0 %v457
    %551 = vmatpush1.msra.mxu0 %v456
    %552 = vmatprep.subr.mxu0 0.0
    %553 = vmatpush2.msra.mxu0 0.0
    %554 = vmatprep.subr.mxu0 0.0
    %555 = vmatpush2.msra.mxu0 0.0
    %556 = vmatprep.subr.mxu0 0.0
    %557 = vmatpush2.msra.mxu0 0.0
    %558 = vmatprep.subr.mxu0 0.0
    %559 = vmatpush2.msra.mxu0 0.0
    %560 = vmatprep.subr.mxu0 0.0
    %561 = vmatpush2.msra.mxu0 0.0
    %562 = vmatprep.subr.mxu0 0.0
    %563 = vmatpush2.msra.mxu0 0.0
    %564 = vmatprep.subr.mxu0 0.0
    %565 = vmatpush2.msra.mxu0 0.0
    %566 = vmatprep.subr.mxu0 0.0
    %567 = vmatpush2.msra.mxu0 0.0
    %568 = vmatprep.subr.mxu0 0.0
    %569 = vmatpush2.msra.mxu0 0.0
    %570 = vmatprep.subr.mxu0 0.0
    %571 = vmatpush2.msra.mxu0 0.0
    %572 = vmatprep.subr.mxu0 0.0
    %573 = vmatpush2.msra.mxu0 0.0
    %574 = vmatprep.subr.mxu0 0.0
    %575 = vmatpush2.msra.mxu0 0.0
    %576 = vmatprep.subr.mxu0 0.0
    %577 = vmatpush2.msra.mxu0 0.0
    %578 = vmatprep.subr.mxu0 0.0
    %579 = vmatpush2.msra.mxu0 0.0
    %580 = vmatprep.subr.mxu0 0.0
    %581 = vmatpush2.msra.mxu0 0.0
    %582 = vmatprep.subr.mxu0 0.0
    %583 = vmatpush2.msra.mxu0 0.0
    %584 = vmatprep.mubr.f32.mxu0 0.0
    %585 = vmatmul.mubr.f32.gmra.mxu0 0.0
    %v586 = vpop.f32.mrf.mxu0
    %v587 = vadd.f32 0.0, %v586
    %v588 = vpop.f32.mrf.mxu0
    %v589 = vadd.f32 0.0, %v588
    %590 = vdwg.mxu0
    %591 = vmatprep.subr.mxu0 %v519
    %592 = vmatpush1.msra.mxu0 %v518
    %593 = vmatprep.subr.mxu0 %v515
    %594 = vmatpush1.msra.mxu0 %v514
    %595 = vmatprep.subr.mxu0 %v511
    %596 = vmatpush1.msra.mxu0 %v510
    %597 = vmatprep.subr.mxu0 %v507
    %598 = vmatpush1.msra.mxu0 %v506
    %599 = vmatprep.subr.mxu0 %v503
    %600 = vmatpush1.msra.mxu0 %v502
    %601 = vmatprep.subr.mxu0 %v499
    %602 = vmatpush1.msra.mxu0 %v498
    %603 = vmatprep.subr.mxu0 %v495
    %604 = vmatpush1.msra.mxu0 %v494
    %605 = vmatprep.subr.mxu0 %v491
    %606 = vmatpush1.msra.mxu0 %v490
    %607 = vmatprep.subr.mxu0 %v487
    %608 = vmatpush1.msra.mxu0 %v486
    %609 = vmatprep.subr.mxu0 %v483
    %610 = vmatpush1.msra.mxu0 %v482
    %611 = vmatprep.subr.mxu0 %v479
    %612 = vmatpush1.msra.mxu0 %v478
    %613 = vmatprep.subr.mxu0 %v475
    %614 = vmatpush1.msra.mxu0 %v474
    %615 = vmatprep.subr.mxu0 %v471
    %616 = vmatpush1.msra.mxu0 %v470
    %617 = vmatprep.subr.mxu0 %v467
    %618 = vmatpush1.msra.mxu0 %v466
    %619 = vmatprep.subr.mxu0 %v463
    %620 = vmatpush1.msra.mxu0 %v462
    %621 = vmatprep.subr.mxu0 %v459
    %622 = vmatpush1.msra.mxu0 %v458
    %623 = vmatprep.subr.mxu0 0.0
    %624 = vmatpush2.msra.mxu0 0.0
    %625 = vmatprep.subr.mxu0 0.0
    %626 = vmatpush2.msra.mxu0 0.0
    %627 = vmatprep.subr.mxu0 0.0
    %628 = vmatpush2.msra.mxu0 0.0
    %629 = vmatprep.subr.mxu0 0.0
    %630 = vmatpush2.msra.mxu0 0.0
    %631 = vmatprep.subr.mxu0 0.0
    %632 = vmatpush2.msra.mxu0 0.0
    %633 = vmatprep.subr.mxu0 0.0
    %634 = vmatpush2.msra.mxu0 0.0
    %635 = vmatprep.subr.mxu0 0.0
    %636 = vmatpush2.msra.mxu0 0.0
    %637 = vmatprep.subr.mxu0 0.0
    %638 = vmatpush2.msra.mxu0 0.0
    %639 = vmatprep.subr.mxu0 0.0
    %640 = vmatpush2.msra.mxu0 0.0
    %641 = vmatprep.subr.mxu0 0.0
    %642 = vmatpush2.msra.mxu0 0.0
    %643 = vmatprep.subr.mxu0 0.0
    %644 = vmatpush2.msra.mxu0 0.0
    %645 = vmatprep.subr.mxu0 0.0
    %646 = vmatpush2.msra.mxu0 0.0
    %647 = vmatprep.subr.mxu0 0.0
    %648 = vmatpush2.msra.mxu0 0.0
    %649 = vmatprep.subr.mxu0 0.0
    %650 = vmatpush2.msra.mxu0 0.0
    %651 = vmatprep.subr.mxu0 0.0
    %652 = vmatpush2.msra.mxu0 0.0
    %653 = vmatprep.subr.mxu0 0.0
    %654 = vmatpush2.msra.mxu0 0.0
    %655 = vmatprep.mubr.f32.mxu0 0.0
    %656 = vmatmul.mubr.f32.gmra.mxu0 0.0
    %v657 = vpop.f32.mrf.mxu0
    %v658 = vadd.f32 0.0, %v657
    %v659 = vpop.f32.mrf.mxu0
    %v660 = vadd.f32 0.0, %v659
    %661 = vdwg.mxu0
    %v662 = vadd.f32 %v452, %v587
    %v663 = vadd.f32 %v453, %v589
    %v664 = vadd.f32 %v454, %v658
    %v665 = vadd.f32 %v455, %v660
    %v666 = vxor.u32 %v662, 2147483648
    %v667 = vmul.f32 %v666, 1.442695
    %v668 = vpow.pop %v667
    %v669 = vadd.f32 %v668, 1.0
    %v670 = vrcp.pop %v669
    %v671 = vmul.f32 1.0, %v670
    %v672 = vxor.u32 %v663, 2147483648
    %v673 = vmul.f32 %v672, 1.442695
    %v674 = vpow.pop %v673
    %v675 = vadd.f32 %v674, 1.0
    %v676 = vrcp.pop %v675
    %v677 = vmul.f32 1.0, %v676
    %v678 = vtanh.pop %v664
    %v679 = vxor.u32 %v665, 2147483648
    %v680 = vmul.f32 %v679, 1.442695
    %v681 = vpow.pop %v680
    %v682 = vadd.f32 %v681, 1.0
    %v683 = vrcp.pop %v682
    %v684 = vmul.f32 1.0, %v683
    %v685 = vmul.f32 %v677, 0.0
    %v686 = vmul.f32 %v671, %v678
    %v687 = vadd.f32 %v685, %v686
    %v688 = vtanh.pop %v687
    %v689 = vmul.f32 %v684, %v688
    %690 = vst [vmem:[#allocation2] sm:$0xff] %v689
    %v691 = vld [vmem:[#allocation3 + $0x20] sm:$0xff]
    %v692 = vld [vmem:[#allocation3 + $0x28] sm:$0xff]
    %v693 = vld [vmem:[#allocation3 + $0x30] sm:$0xff]
    %v694 = vld [vmem:[#allocation3 + $0x38] sm:$0xff]
    %v695 = vld [vmem:[#allocation6] sm:$0xff]
    %v696 = vld [vmem:[#allocation6 + $0x8] sm:$0xff]
    %v697 = vld [vmem:[#allocation6 + $0x10] sm:$0xff]
    %v698 = vld [vmem:[#allocation6 + $0x18] sm:$0xff]
    %v699 = vld [vmem:[#allocation6 + $0x20] sm:$0xff]
    %v700 = vld [vmem:[#allocation6 + $0x28] sm:$0xff]
    %v701 = vld [vmem:[#allocation6 + $0x30] sm:$0xff]
    %v702 = vld [vmem:[#allocation6 + $0x38] sm:$0xff]
    %v703 = vld [vmem:[#allocation6 + $0x40] sm:$0xff]
    %v704 = vld [vmem:[#allocation6 + $0x48] sm:$0xff]
    %v705 = vld [vmem:[#allocation6 + $0x50] sm:$0xff]
    %v706 = vld [vmem:[#allocation6 + $0x58] sm:$0xff]
    %v707 = vld [vmem:[#allocation6 + $0x60] sm:$0xff]
    %v708 = vld [vmem:[#allocation6 + $0x68] sm:$0xff]
    %v709 = vld [vmem:[#allocation6 + $0x70] sm:$0xff]
    %v710 = vld [vmem:[#allocation6 + $0x78] sm:$0xff]
    %v711 = vld [vmem:[#allocation6 + $0x80] sm:$0xff]
    %v712 = vld [vmem:[#allocation6 + $0x88] sm:$0xff]
    %v713 = vld [vmem:[#allocation6 + $0x90] sm:$0xff]
    %v714 = vld [vmem:[#allocation6 + $0x98] sm:$0xff]
    %v715 = vld [vmem:[#allocation6 + $0xa0] sm:$0xff]
    %v716 = vld [vmem:[#allocation6 + $0xa8] sm:$0xff]
    %v717 = vld [vmem:[#allocation6 + $0xb0] sm:$0xff]
    %v718 = vld [vmem:[#allocation6 + $0xb8] sm:$0xff]
    %v719 = vld [vmem:[#allocation6 + $0xc0] sm:$0xff]
    %v720 = vld [vmem:[#allocation6 + $0xc8] sm:$0xff]
    %v721 = vld [vmem:[#allocation6 + $0xd0] sm:$0xff]
    %v722 = vld [vmem:[#allocation6 + $0xd8] sm:$0xff]
    %v723 = vld [vmem:[#allocation6 + $0xe0] sm:$0xff]
    %v724 = vld [vmem:[#allocation6 + $0xe8] sm:$0xff]
    %v725 = vld [vmem:[#allocation6 + $0xf0] sm:$0xff]
    %v726 = vld [vmem:[#allocation6 + $0xf8] sm:$0xff]
    %v727 = vld [vmem:[#allocation6 + $0x100] sm:$0xff]
    %v728 = vld [vmem:[#allocation6 + $0x108] sm:$0xff]
    %v729 = vld [vmem:[#allocation6 + $0x110] sm:$0xff]
    %v730 = vld [vmem:[#allocation6 + $0x118] sm:$0xff]
    %v731 = vld [vmem:[#allocation6 + $0x120] sm:$0xff]
    %v732 = vld [vmem:[#allocation6 + $0x128] sm:$0xff]
    %v733 = vld [vmem:[#allocation6 + $0x130] sm:$0xff]
    %v734 = vld [vmem:[#allocation6 + $0x138] sm:$0xff]
    %v735 = vld [vmem:[#allocation6 + $0x140] sm:$0xff]
    %v736 = vld [vmem:[#allocation6 + $0x148] sm:$0xff]
    %v737 = vld [vmem:[#allocation6 + $0x150] sm:$0xff]
    %v738 = vld [vmem:[#allocation6 + $0x158] sm:$0xff]
    %v739 = vld [vmem:[#allocation6 + $0x160] sm:$0xff]
    %v740 = vld [vmem:[#allocation6 + $0x168] sm:$0xff]
    %v741 = vld [vmem:[#allocation6 + $0x170] sm:$0xff]
    %v742 = vld [vmem:[#allocation6 + $0x178] sm:$0xff]
    %v743 = vld [vmem:[#allocation6 + $0x180] sm:$0xff]
    %v744 = vld [vmem:[#allocation6 + $0x188] sm:$0xff]
    %v745 = vld [vmem:[#allocation6 + $0x190] sm:$0xff]
    %v746 = vld [vmem:[#allocation6 + $0x198] sm:$0xff]
    %v747 = vld [vmem:[#allocation6 + $0x1a0] sm:$0xff]
    %v748 = vld [vmem:[#allocation6 + $0x1a8] sm:$0xff]
    %v749 = vld [vmem:[#allocation6 + $0x1b0] sm:$0xff]
    %v750 = vld [vmem:[#allocation6 + $0x1b8] sm:$0xff]
    %v751 = vld [vmem:[#allocation6 + $0x1c0] sm:$0xff]
    %v752 = vld [vmem:[#allocation6 + $0x1c8] sm:$0xff]
    %v753 = vld [vmem:[#allocation6 + $0x1d0] sm:$0xff]
    %v754 = vld [vmem:[#allocation6 + $0x1d8] sm:$0xff]
    %v755 = vld [vmem:[#allocation6 + $0x1e0] sm:$0xff]
    %v756 = vld [vmem:[#allocation6 + $0x1e8] sm:$0xff]
    %v757 = vld [vmem:[#allocation6 + $0x1f0] sm:$0xff]
    %v758 = vld [vmem:[#allocation6 + $0x1f8] sm:$0xff]
    %759 = vmatprep.subr.mxu0 %v756
    %760 = vmatpush1.msra.mxu0 %v755
    %761 = vmatprep.subr.mxu0 %v752
    %762 = vmatpush1.msra.mxu0 %v751
    %763 = vmatprep.subr.mxu0 %v748
    %764 = vmatpush1.msra.mxu0 %v747
    %765 = vmatprep.subr.mxu0 %v744
    %766 = vmatpush1.msra.mxu0 %v743
    %767 = vmatprep.subr.mxu0 %v740
    %768 = vmatpush1.msra.mxu0 %v739
    %769 = vmatprep.subr.mxu0 %v736
    %770 = vmatpush1.msra.mxu0 %v735
    %771 = vmatprep.subr.mxu0 %v732
    %772 = vmatpush1.msra.mxu0 %v731
    %773 = vmatprep.subr.mxu0 %v728
    %774 = vmatpush1.msra.mxu0 %v727
    %775 = vmatprep.subr.mxu0 %v724
    %776 = vmatpush1.msra.mxu0 %v723
    %777 = vmatprep.subr.mxu0 %v720
    %778 = vmatpush1.msra.mxu0 %v719
    %779 = vmatprep.subr.mxu0 %v716
    %780 = vmatpush1.msra.mxu0 %v715
    %781 = vmatprep.subr.mxu0 %v712
    %782 = vmatpush1.msra.mxu0 %v711
    %783 = vmatprep.subr.mxu0 %v708
    %784 = vmatpush1.msra.mxu0 %v707
    %785 = vmatprep.subr.mxu0 %v704
    %786 = vmatpush1.msra.mxu0 %v703
    %787 = vmatprep.subr.mxu0 %v700
    %788 = vmatpush1.msra.mxu0 %v699
    %789 = vmatprep.subr.mxu0 %v696
    %790 = vmatpush1.msra.mxu0 %v695
    %791 = vmatprep.subr.mxu0 0.0
    %792 = vmatpush2.msra.mxu0 0.0
    %793 = vmatprep.subr.mxu0 0.0
    %794 = vmatpush2.msra.mxu0 0.0
    %795 = vmatprep.subr.mxu0 0.0
    %796 = vmatpush2.msra.mxu0 0.0
    %797 = vmatprep.subr.mxu0 0.0
    %798 = vmatpush2.msra.mxu0 0.0
    %799 = vmatprep.subr.mxu0 0.0
    %800 = vmatpush2.msra.mxu0 0.0
    %801 = vmatprep.subr.mxu0 0.0
    %802 = vmatpush2.msra.mxu0 0.0
    %803 = vmatprep.subr.mxu0 0.0
    %804 = vmatpush2.msra.mxu0 0.0
    %805 = vmatprep.subr.mxu0 0.0
    %806 = vmatpush2.msra.mxu0 0.0
    %807 = vmatprep.subr.mxu0 0.0
    %808 = vmatpush2.msra.mxu0 0.0
    %809 = vmatprep.subr.mxu0 0.0
    %810 = vmatpush2.msra.mxu0 0.0
    %811 = vmatprep.subr.mxu0 0.0
    %812 = vmatpush2.msra.mxu0 0.0
    %813 = vmatprep.subr.mxu0 0.0
    %814 = vmatpush2.msra.mxu0 0.0
    %815 = vmatprep.subr.mxu0 0.0
    %816 = vmatpush2.msra.mxu0 0.0
    %817 = vmatprep.subr.mxu0 0.0
    %818 = vmatpush2.msra.mxu0 0.0
    %819 = vmatprep.subr.mxu0 0.0
    %820 = vmatpush2.msra.mxu0 0.0
    %821 = vmatprep.subr.mxu0 0.0
    %822 = vmatpush2.msra.mxu0 0.0
    %823 = vmatprep.mubr.f32.mxu0 0.0
    %824 = vmatmul.mubr.f32.gmra.mxu0 %v689
    %v825 = vpop.f32.mrf.mxu0
    %v826 = vadd.f32 0.0, %v825
    %v827 = vpop.f32.mrf.mxu0
    %v828 = vadd.f32 0.0, %v827
    %829 = vdwg.mxu0
    %830 = vmatprep.subr.mxu0 %v758
    %831 = vmatpush1.msra.mxu0 %v757
    %832 = vmatprep.subr.mxu0 %v754
    %833 = vmatpush1.msra.mxu0 %v753
    %834 = vmatprep.subr.mxu0 %v750
    %835 = vmatpush1.msra.mxu0 %v749
    %836 = vmatprep.subr.mxu0 %v746
    %837 = vmatpush1.msra.mxu0 %v745
    %838 = vmatprep.subr.mxu0 %v742
    %839 = vmatpush1.msra.mxu0 %v741
    %840 = vmatprep.subr.mxu0 %v738
    %841 = vmatpush1.msra.mxu0 %v737
    %842 = vmatprep.subr.mxu0 %v734
    %843 = vmatpush1.msra.mxu0 %v733
    %844 = vmatprep.subr.mxu0 %v730
    %845 = vmatpush1.msra.mxu0 %v729
    %846 = vmatprep.subr.mxu0 %v726
    %847 = vmatpush1.msra.mxu0 %v725
    %848 = vmatprep.subr.mxu0 %v722
    %849 = vmatpush1.msra.mxu0 %v721
    %850 = vmatprep.subr.mxu0 %v718
    %851 = vmatpush1.msra.mxu0 %v717
    %852 = vmatprep.subr.mxu0 %v714
    %853 = vmatpush1.msra.mxu0 %v713
    %854 = vmatprep.subr.mxu0 %v710
    %855 = vmatpush1.msra.mxu0 %v709
    %856 = vmatprep.subr.mxu0 %v706
    %857 = vmatpush1.msra.mxu0 %v705
    %858 = vmatprep.subr.mxu0 %v702
    %859 = vmatpush1.msra.mxu0 %v701
    %860 = vmatprep.subr.mxu0 %v698
    %861 = vmatpush1.msra.mxu0 %v697
    %862 = vmatprep.subr.mxu0 0.0
    %863 = vmatpush2.msra.mxu0 0.0
    %864 = vmatprep.subr.mxu0 0.0
    %865 = vmatpush2.msra.mxu0 0.0
    %866 = vmatprep.subr.mxu0 0.0
    %867 = vmatpush2.msra.mxu0 0.0
    %868 = vmatprep.subr.mxu0 0.0
    %869 = vmatpush2.msra.mxu0 0.0
    %870 = vmatprep.subr.mxu0 0.0
    %871 = vmatpush2.msra.mxu0 0.0
    %872 = vmatprep.subr.mxu0 0.0
    %873 = vmatpush2.msra.mxu0 0.0
    %874 = vmatprep.subr.mxu0 0.0
    %875 = vmatpush2.msra.mxu0 0.0
    %876 = vmatprep.subr.mxu0 0.0
    %877 = vmatpush2.msra.mxu0 0.0
    %878 = vmatprep.subr.mxu0 0.0
    %879 = vmatpush2.msra.mxu0 0.0
    %880 = vmatprep.subr.mxu0 0.0
    %881 = vmatpush2.msra.mxu0 0.0
    %882 = vmatprep.subr.mxu0 0.0
    %883 = vmatpush2.msra.mxu0 0.0
    %884 = vmatprep.subr.mxu0 0.0
    %885 = vmatpush2.msra.mxu0 0.0
    %886 = vmatprep.subr.mxu0 0.0
    %887 = vmatpush2.msra.mxu0 0.0
    %888 = vmatprep.subr.mxu0 0.0
    %889 = vmatpush2.msra.mxu0 0.0
    %890 = vmatprep.subr.mxu0 0.0
    %891 = vmatpush2.msra.mxu0 0.0
    %892 = vmatprep.subr.mxu0 0.0
    %893 = vmatpush2.msra.mxu0 0.0
    %894 = vmatprep.mubr.f32.mxu0 0.0
    %895 = vmatmul.mubr.f32.gmra.mxu0 %v689
    %v896 = vpop.f32.mrf.mxu0
    %v897 = vadd.f32 0.0, %v896
    %v898 = vpop.f32.mrf.mxu0
    %v899 = vadd.f32 0.0, %v898
    %900 = vdwg.mxu0
    %v901 = vadd.f32 %v691, %v826
    %v902 = vadd.f32 %v692, %v828
    %v903 = vadd.f32 %v693, %v897
    %v904 = vadd.f32 %v694, %v899
    %v905 = vxor.u32 %v901, 2147483648
    %v906 = vmul.f32 %v905, 1.442695
    %v907 = vpow.pop %v906
    %v908 = vadd.f32 %v907, 1.0
    %v909 = vrcp.pop %v908
    %v910 = vmul.f32 1.0, %v909
    %v911 = vxor.u32 %v902, 2147483648
    %v912 = vmul.f32 %v911, 1.442695
    %v913 = vpow.pop %v912
    %v914 = vadd.f32 %v913, 1.0
    %v915 = vrcp.pop %v914
    %v916 = vmul.f32 1.0, %v915
    %v917 = vtanh.pop %v903
    %v918 = vxor.u32 %v904, 2147483648
    %v919 = vmul.f32 %v918, 1.442695
    %v920 = vpow.pop %v919
    %v921 = vadd.f32 %v920, 1.0
    %v922 = vrcp.pop %v921
    %v923 = vmul.f32 1.0, %v922
    %v924 = vmul.f32 %v916, %v687
    %v925 = vmul.f32 %v910, %v917
    %v926 = vadd.f32 %v924, %v925
    %v927 = vtanh.pop %v926
    %v928 = vmul.f32 %v923, %v927
    %929 = vst [vmem:[#allocation2 + $0x8] sm:$0xff] %v928
    %v930 = vld [vmem:[#allocation3 + $0x40] sm:$0xff]
    %v931 = vld [vmem:[#allocation3 + $0x48] sm:$0xff]
    %v932 = vld [vmem:[#allocation3 + $0x50] sm:$0xff]
    %v933 = vld [vmem:[#allocation3 + $0x58] sm:$0xff]
    %v934 = vld [vmem:[#allocation6] sm:$0xff]
    %v935 = vld [vmem:[#allocation6 + $0x8] sm:$0xff]
    %v936 = vld [vmem:[#allocation6 + $0x10] sm:$0xff]
    %v937 = vld [vmem:[#allocation6 + $0x18] sm:$0xff]
    %v938 = vld [vmem:[#allocation6 + $0x20] sm:$0xff]
    %v939 = vld [vmem:[#allocation6 + $0x28] sm:$0xff]
    %v940 = vld [vmem:[#allocation6 + $0x30] sm:$0xff]
    %v941 = vld [vmem:[#allocation6 + $0x38] sm:$0xff]
    %v942 = vld [vmem:[#allocation6 + $0x40] sm:$0xff]
    %v943 = vld [vmem:[#allocation6 + $0x48] sm:$0xff]
    %v944 = vld [vmem:[#allocation6 + $0x50] sm:$0xff]
    %v945 = vld [vmem:[#allocation6 + $0x58] sm:$0xff]
    %v946 = vld [vmem:[#allocation6 + $0x60] sm:$0xff]
    %v947 = vld [vmem:[#allocation6 + $0x68] sm:$0xff]
    %v948 = vld [vmem:[#allocation6 + $0x70] sm:$0xff]
    %v949 = vld [vmem:[#allocation6 + $0x78] sm:$0xff]
    %v950 = vld [vmem:[#allocation6 + $0x80] sm:$0xff]
    %v951 = vld [vmem:[#allocation6 + $0x88] sm:$0xff]
    %v952 = vld [vmem:[#allocation6 + $0x90] sm:$0xff]
    %v953 = vld [vmem:[#allocation6 + $0x98] sm:$0xff]
    %v954 = vld [vmem:[#allocation6 + $0xa0] sm:$0xff]
    %v955 = vld [vmem:[#allocation6 + $0xa8] sm:$0xff]
    %v956 = vld [vmem:[#allocation6 + $0xb0] sm:$0xff]
    %v957 = vld [vmem:[#allocation6 + $0xb8] sm:$0xff]
    %v958 = vld [vmem:[#allocation6 + $0xc0] sm:$0xff]
    %v959 = vld [vmem:[#allocation6 + $0xc8] sm:$0xff]
    %v960 = vld [vmem:[#allocation6 + $0xd0] sm:$0xff]
    %v961 = vld [vmem:[#allocation6 + $0xd8] sm:$0xff]
    %v962 = vld [vmem:[#allocation6 + $0xe0] sm:$0xff]
    %v963 = vld [vmem:[#allocation6 + $0xe8] sm:$0xff]
    %v964 = vld [vmem:[#allocation6 + $0xf0] sm:$0xff]
    %v965 = vld [vmem:[#allocation6 + $0xf8] sm:$0xff]
    %v966 = vld [vmem:[#allocation6 + $0x100] sm:$0xff]
    %v967 = vld [vmem:[#allocation6 + $0x108] sm:$0xff]
    %v968 = vld [vmem:[#allocation6 + $0x110] sm:$0xff]
    %v969 = vld [vmem:[#allocation6 + $0x118] sm:$0xff]
    %v970 = vld [vmem:[#allocation6 + $0x120] sm:$0xff]
    %v971 = vld [vmem:[#allocation6 + $0x128] sm:$0xff]
    %v972 = vld [vmem:[#allocation6 + $0x130] sm:$0xff]
    %v973 = vld [vmem:[#allocation6 + $0x138] sm:$0xff]
    %v974 = vld [vmem:[#allocation6 + $0x140] sm:$0xff]
    %v975 = vld [vmem:[#allocation6 + $0x148] sm:$0xff]
    %v976 = vld [vmem:[#allocation6 + $0x150] sm:$0xff]
    %v977 = vld [vmem:[#allocation6 + $0x158] sm:$0xff]
    %v978 = vld [vmem:[#allocation6 + $0x160] sm:$0xff]
    %v979 = vld [vmem:[#allocation6 + $0x168] sm:$0xff]
    %v980 = vld [vmem:[#allocation6 + $0x170] sm:$0xff]
    %v981 = vld [vmem:[#allocation6 + $0x178] sm:$0xff]
    %v982 = vld [vmem:[#allocation6 + $0x180] sm:$0xff]
    %v983 = vld [vmem:[#allocation6 + $0x188] sm:$0xff]
    %v984 = vld [vmem:[#allocation6 + $0x190] sm:$0xff]
    %v985 = vld [vmem:[#allocation6 + $0x198] sm:$0xff]
    %v986 = vld [vmem:[#allocation6 + $0x1a0] sm:$0xff]
    %v987 = vld [vmem:[#allocation6 + $0x1a8] sm:$0xff]
    %v988 = vld [vmem:[#allocation6 + $0x1b0] sm:$0xff]
    %v989 = vld [vmem:[#allocation6 + $0x1b8] sm:$0xff]
    %v990 = vld [vmem:[#allocation6 + $0x1c0] sm:$0xff]
    %v991 = vld [vmem:[#allocation6 + $0x1c8] sm:$0xff]
    %v992 = vld [vmem:[#allocation6 + $0x1d0] sm:$0xff]
    %v993 = vld [vmem:[#allocation6 + $0x1d8] sm:$0xff]
    %v994 = vld [vmem:[#allocation6 + $0x1e0] sm:$0xff]
    %v995 = vld [vmem:[#allocation6 + $0x1e8] sm:$0xff]
    %v996 = vld [vmem:[#allocation6 + $0x1f0] sm:$0xff]
    %v997 = vld [vmem:[#allocation6 + $0x1f8] sm:$0xff]
    %998 = vmatprep.subr.mxu0 %v995
    %999 = vmatpush1.msra.mxu0 %v994
    %1000 = vmatprep.subr.mxu0 %v991
    %1001 = vmatpush1.msra.mxu0 %v990
    %1002 = vmatprep.subr.mxu0 %v987
    %1003 = vmatpush1.msra.mxu0 %v986
    %1004 = vmatprep.subr.mxu0 %v983
    %1005 = vmatpush1.msra.mxu0 %v982
    %1006 = vmatprep.subr.mxu0 %v979
    %1007 = vmatpush1.msra.mxu0 %v978
    %1008 = vmatprep.subr.mxu0 %v975
    %1009 = vmatpush1.msra.mxu0 %v974
    %1010 = vmatprep.subr.mxu0 %v971
    %1011 = vmatpush1.msra.mxu0 %v970
    %1012 = vmatprep.subr.mxu0 %v967
    %1013 = vmatpush1.msra.mxu0 %v966
    %1014 = vmatprep.subr.mxu0 %v963
    %1015 = vmatpush1.msra.mxu0 %v962
    %1016 = vmatprep.subr.mxu0 %v959
    %1017 = vmatpush1.msra.mxu0 %v958
    %1018 = vmatprep.subr.mxu0 %v955
    %1019 = vmatpush1.msra.mxu0 %v954
    %1020 = vmatprep.subr.mxu0 %v951
    %1021 = vmatpush1.msra.mxu0 %v950
    %1022 = vmatprep.subr.mxu0 %v947
    %1023 = vmatpush1.msra.mxu0 %v946
    %1024 = vmatprep.subr.mxu0 %v943
    %1025 = vmatpush1.msra.mxu0 %v942
    %1026 = vmatprep.subr.mxu0 %v939
    %1027 = vmatpush1.msra.mxu0 %v938
    %1028 = vmatprep.subr.mxu0 %v935
    %1029 = vmatpush1.msra.mxu0 %v934
    %1030 = vmatprep.subr.mxu0 0.0
    %1031 = vmatpush2.msra.mxu0 0.0
    %1032 = vmatprep.subr.mxu0 0.0
    %1033 = vmatpush2.msra.mxu0 0.0
    %1034 = vmatprep.subr.mxu0 0.0
    %1035 = vmatpush2.msra.mxu0 0.0
    %1036 = vmatprep.subr.mxu0 0.0
    %1037 = vmatpush2.msra.mxu0 0.0
    %1038 = vmatprep.subr.mxu0 0.0
    %1039 = vmatpush2.msra.mxu0 0.0
    %1040 = vmatprep.subr.mxu0 0.0
    %1041 = vmatpush2.msra.mxu0 0.0
    %1042 = vmatprep.subr.mxu0 0.0
    %1043 = vmatpush2.msra.mxu0 0.0
    %1044 = vmatprep.subr.mxu0 0.0
    %1045 = vmatpush2.msra.mxu0 0.0
    %1046 = vmatprep.subr.mxu0 0.0
    %1047 = vmatpush2.msra.mxu0 0.0
    %1048 = vmatprep.subr.mxu0 0.0
    %1049 = vmatpush2.msra.mxu0 0.0
    %1050 = vmatprep.subr.mxu0 0.0
    %1051 = vmatpush2.msra.mxu0 0.0
    %1052 = vmatprep.subr.mxu0 0.0
    %1053 = vmatpush2.msra.mxu0 0.0
    %1054 = vmatprep.subr.mxu0 0.0
    %1055 = vmatpush2.msra.mxu0 0.0
    %1056 = vmatprep.subr.mxu0 0.0
    %1057 = vmatpush2.msra.mxu0 0.0
    %1058 = vmatprep.subr.mxu0 0.0
    %1059 = vmatpush2.msra.mxu0 0.0
    %1060 = vmatprep.subr.mxu0 0.0
    %1061 = vmatpush2.msra.mxu0 0.0
    %1062 = vmatprep.mubr.f32.mxu0 0.0
    %1063 = vmatmul.mubr.f32.gmra.mxu0 %v928
    %v1064 = vpop.f32.mrf.mxu0
    %v1065 = vadd.f32 0.0, %v1064
    %v1066 = vpop.f32.mrf.mxu0
    %v1067 = vadd.f32 0.0, %v1066
    %1068 = vdwg.mxu0
    %1069 = vmatprep.subr.mxu0 %v997
    %1070 = vmatpush1.msra.mxu0 %v996
    %1071 = vmatprep.subr.mxu0 %v993
    %1072 = vmatpush1.msra.mxu0 %v992
    %1073 = vmatprep.subr.mxu0 %v989
    %1074 = vmatpush1.msra.mxu0 %v988
    %1075 = vmatprep.subr.mxu0 %v985
    %1076 = vmatpush1.msra.mxu0 %v984
    %1077 = vmatprep.subr.mxu0 %v981
    %1078 = vmatpush1.msra.mxu0 %v980
    %1079 = vmatprep.subr.mxu0 %v977
    %1080 = vmatpush1.msra.mxu0 %v976
    %1081 = vmatprep.subr.mxu0 %v973
    %1082 = vmatpush1.msra.mxu0 %v972
    %1083 = vmatprep.subr.mxu0 %v969
    %1084 = vmatpush1.msra.mxu0 %v968
    %1085 = vmatprep.subr.mxu0 %v965
    %1086 = vmatpush1.msra.mxu0 %v964
    %1087 = vmatprep.subr.mxu0 %v961
    %1088 = vmatpush1.msra.mxu0 %v960
    %1089 = vmatprep.subr.mxu0 %v957
    %1090 = vmatpush1.msra.mxu0 %v956
    %1091 = vmatprep.subr.mxu0 %v953
    %1092 = vmatpush1.msra.mxu0 %v952
    %1093 = vmatprep.subr.mxu0 %v949
    %1094 = vmatpush1.msra.mxu0 %v948
    %1095 = vmatprep.subr.mxu0 %v945
    %1096 = vmatpush1.msra.mxu0 %v944
    %1097 = vmatprep.subr.mxu0 %v941
    %1098 = vmatpush1.msra.mxu0 %v940
    %1099 = vmatprep.subr.mxu0 %v937
    %1100 = vmatpush1.msra.mxu0 %v936
    %1101 = vmatprep.subr.mxu0 0.0
    %1102 = vmatpush2.msra.mxu0 0.0
    %1103 = vmatprep.subr.mxu0 0.0
    %1104 = vmatpush2.msra.mxu0 0.0
    %1105 = vmatprep.subr.mxu0 0.0
    %1106 = vmatpush2.msra.mxu0 0.0
    %1107 = vmatprep.subr.mxu0 0.0
    %1108 = vmatpush2.msra.mxu0 0.0
    %1109 = vmatprep.subr.mxu0 0.0
    %1110 = vmatpush2.msra.mxu0 0.0
    %1111 = vmatprep.subr.mxu0 0.0
    %1112 = vmatpush2.msra.mxu0 0.0
    %1113 = vmatprep.subr.mxu0 0.0
    %1114 = vmatpush2.msra.mxu0 0.0
    %1115 = vmatprep.subr.mxu0 0.0
    %1116 = vmatpush2.msra.mxu0 0.0
    %1117 = vmatprep.subr.mxu0 0.0
    %1118 = vmatpush2.msra.mxu0 0.0
    %1119 = vmatprep.subr.mxu0 0.0
    %1120 = vmatpush2.msra.mxu0 0.0
    %1121 = vmatprep.subr.mxu0 0.0
    %1122 = vmatpush2.msra.mxu0 0.0
    %1123 = vmatprep.subr.mxu0 0.0
    %1124 = vmatpush2.msra.mxu0 0.0
    %1125 = vmatprep.subr.mxu0 0.0
    %1126 = vmatpush2.msra.mxu0 0.0
    %1127 = vmatprep.subr.mxu0 0.0
    %1128 = vmatpush2.msra.mxu0 0.0
    %1129 = vmatprep.subr.mxu0 0.0
    %1130 = vmatpush2.msra.mxu0 0.0
    %1131 = vmatprep.subr.mxu0 0.0
    %1132 = vmatpush2.msra.mxu0 0.0
    %1133 = vmatprep.mubr.f32.mxu0 0.0
    %1134 = vmatmul.mubr.f32.gmra.mxu0 %v928
    %v1135 = vpop.f32.mrf.mxu0
    %v1136 = vadd.f32 0.0, %v1135
    %v1137 = vpop.f32.mrf.mxu0
    %v1138 = vadd.f32 0.0, %v1137
    %1139 = vdwg.mxu0
    %v1140 = vadd.f32 %v930, %v1065
    %v1141 = vadd.f32 %v931, %v1067
    %v1142 = vadd.f32 %v932, %v1136
    %v1143 = vadd.f32 %v933, %v1138
    %v1144 = vxor.u32 %v1140, 2147483648
    %v1145 = vmul.f32 %v1144, 1.442695
    %v1146 = vpow.pop %v1145
    %v1147 = vadd.f32 %v1146, 1.0
    %v1148 = vrcp.pop %v1147
    %v1149 = vmul.f32 1.0, %v1148
    %v1150 = vxor.u32 %v1141, 2147483648
    %v1151 = vmul.f32 %v1150, 1.442695
    %v1152 = vpow.pop %v1151
    %v1153 = vadd.f32 %v1152, 1.0
    %v1154 = vrcp.pop %v1153
    %v1155 = vmul.f32 1.0, %v1154
    %v1156 = vtanh.pop %v1142
    %v1157 = vxor.u32 %v1143, 2147483648
    %v1158 = vmul.f32 %v1157, 1.442695
    %v1159 = vpow.pop %v1158
    %v1160 = vadd.f32 %v1159, 1.0
    %v1161 = vrcp.pop %v1160
    %v1162 = vmul.f32 1.0, %v1161
    %v1163 = vmul.f32 %v1155, %v926
    %v1164 = vmul.f32 %v1149, %v1156
    %v1165 = vadd.f32 %v1163, %v1164
    %v1166 = vtanh.pop %v1165
    %v1167 = vmul.f32 %v1162, %v1166
    %1168 = vst [vmem:[#allocation2 + $0x10] sm:$0xff] %v1167
    %v1169 = vld [vmem:[#allocation3 + $0x60] sm:$0xff]
    %v1170 = vld [vmem:[#allocation3 + $0x68] sm:$0xff]
    %v1171 = vld [vmem:[#allocation3 + $0x70] sm:$0xff]
    %v1172 = vld [vmem:[#allocation3 + $0x78] sm:$0xff]
    %v1173 = vld [vmem:[#allocation6] sm:$0xff]
    %v1174 = vld [vmem:[#allocation6 + $0x8] sm:$0xff]
    %v1175 = vld [vmem:[#allocation6 + $0x10] sm:$0xff]
    %v1176 = vld [vmem:[#allocation6 + $0x18] sm:$0xff]
    %v1177 = vld [vmem:[#allocation6 + $0x20] sm:$0xff]
    %v1178 = vld [vmem:[#allocation6 + $0x28] sm:$0xff]
    %v1179 = vld [vmem:[#allocation6 + $0x30] sm:$0xff]
    %v1180 = vld [vmem:[#allocation6 + $0x38] sm:$0xff]
    %v1181 = vld [vmem:[#allocation6 + $0x40] sm:$0xff]
    %v1182 = vld [vmem:[#allocation6 + $0x48] sm:$0xff]
    %v1183 = vld [vmem:[#allocation6 + $0x50] sm:$0xff]
    %v1184 = vld [vmem:[#allocation6 + $0x58] sm:$0xff]
    %v1185 = vld [vmem:[#allocation6 + $0x60] sm:$0xff]
    %v1186 = vld [vmem:[#allocation6 + $0x68] sm:$0xff]
    %v1187 = vld [vmem:[#allocation6 + $0x70] sm:$0xff]
    %v1188 = vld [vmem:[#allocation6 + $0x78] sm:$0xff]
    %v1189 = vld [vmem:[#allocation6 + $0x80] sm:$0xff]
    %v1190 = vld [vmem:[#allocation6 + $0x88] sm:$0xff]
    %v1191 = vld [vmem:[#allocation6 + $0x90] sm:$0xff]
    %v1192 = vld [vmem:[#allocation6 + $0x98] sm:$0xff]
    %v1193 = vld [vmem:[#allocation6 + $0xa0] sm:$0xff]
    %v1194 = vld [vmem:[#allocation6 + $0xa8] sm:$0xff]
    %v1195 = vld [vmem:[#allocation6 + $0xb0] sm:$0xff]
    %v1196 = vld [vmem:[#allocation6 + $0xb8] sm:$0xff]
    %v1197 = vld [vmem:[#allocation6 + $0xc0] sm:$0xff]
    %v1198 = vld [vmem:[#allocation6 + $0xc8] sm:$0xff]
    %v1199 = vld [vmem:[#allocation6 + $0xd0] sm:$0xff]
    %v1200 = vld [vmem:[#allocation6 + $0xd8] sm:$0xff]
    %v1201 = vld [vmem:[#allocation6 + $0xe0] sm:$0xff]
    %v1202 = vld [vmem:[#allocation6 + $0xe8] sm:$0xff]
    %v1203 = vld [vmem:[#allocation6 + $0xf0] sm:$0xff]
    %v1204 = vld [vmem:[#allocation6 + $0xf8] sm:$0xff]
    %v1205 = vld [vmem:[#allocation6 + $0x100] sm:$0xff]
    %v1206 = vld [vmem:[#allocation6 + $0x108] sm:$0xff]
    %v1207 = vld [vmem:[#allocation6 + $0x110] sm:$0xff]
    %v1208 = vld [vmem:[#allocation6 + $0x118] sm:$0xff]
    %v1209 = vld [vmem:[#allocation6 + $0x120] sm:$0xff]
    %v1210 = vld [vmem:[#allocation6 + $0x128] sm:$0xff]
    %v1211 = vld [vmem:[#allocation6 + $0x130] sm:$0xff]
    %v1212 = vld [vmem:[#allocation6 + $0x138] sm:$0xff]
    %v1213 = vld [vmem:[#allocation6 + $0x140] sm:$0xff]
    %v1214 = vld [vmem:[#allocation6 + $0x148] sm:$0xff]
    %v1215 = vld [vmem:[#allocation6 + $0x150] sm:$0xff]
    %v1216 = vld [vmem:[#allocation6 + $0x158] sm:$0xff]
    %v1217 = vld [vmem:[#allocation6 + $0x160] sm:$0xff]
    %v1218 = vld [vmem:[#allocation6 + $0x168] sm:$0xff]
    %v1219 = vld [vmem:[#allocation6 + $0x170] sm:$0xff]
    %v1220 = vld [vmem:[#allocation6 + $0x178] sm:$0xff]
    %v1221 = vld [vmem:[#allocation6 + $0x180] sm:$0xff]
    %v1222 = vld [vmem:[#allocation6 + $0x188] sm:$0xff]
    %v1223 = vld [vmem:[#allocation6 + $0x190] sm:$0xff]
    %v1224 = vld [vmem:[#allocation6 + $0x198] sm:$0xff]
    %v1225 = vld [vmem:[#allocation6 + $0x1a0] sm:$0xff]
    %v1226 = vld [vmem:[#allocation6 + $0x1a8] sm:$0xff]
    %v1227 = vld [vmem:[#allocation6 + $0x1b0] sm:$0xff]
    %v1228 = vld [vmem:[#allocation6 + $0x1b8] sm:$0xff]
    %v1229 = vld [vmem:[#allocation6 + $0x1c0] sm:$0xff]
    %v1230 = vld [vmem:[#allocation6 + $0x1c8] sm:$0xff]
    %v1231 = vld [vmem:[#allocation6 + $0x1d0] sm:$0xff]
    %v1232 = vld [vmem:[#allocation6 + $0x1d8] sm:$0xff]
    %v1233 = vld [vmem:[#allocation6 + $0x1e0] sm:$0xff]
    %v1234 = vld [vmem:[#allocation6 + $0x1e8] sm:$0xff]
    %v1235 = vld [vmem:[#allocation6 + $0x1f0] sm:$0xff]
    %v1236 = vld [vmem:[#allocation6 + $0x1f8] sm:$0xff]
    %1237 = vmatprep.subr.mxu0 %v1234
    %1238 = vmatpush1.msra.mxu0 %v1233
    %1239 = vmatprep.subr.mxu0 %v1230
    %1240 = vmatpush1.msra.mxu0 %v1229
    %1241 = vmatprep.subr.mxu0 %v1226
    %1242 = vmatpush1.msra.mxu0 %v1225
    %1243 = vmatprep.subr.mxu0 %v1222
    %1244 = vmatpush1.msra.mxu0 %v1221
    %1245 = vmatprep.subr.mxu0 %v1218
    %1246 = vmatpush1.msra.mxu0 %v1217
    %1247 = vmatprep.subr.mxu0 %v1214
    %1248 = vmatpush1.msra.mxu0 %v1213
    %1249 = vmatprep.subr.mxu0 %v1210
    %1250 = vmatpush1.msra.mxu0 %v1209
    %1251 = vmatprep.subr.mxu0 %v1206
    %1252 = vmatpush1.msra.mxu0 %v1205
    %1253 = vmatprep.subr.mxu0 %v1202
    %1254 = vmatpush1.msra.mxu0 %v1201
    %1255 = vmatprep.subr.mxu0 %v1198
    %1256 = vmatpush1.msra.mxu0 %v1197
    %1257 = vmatprep.subr.mxu0 %v1194
    %1258 = vmatpush1.msra.mxu0 %v1193
    %1259 = vmatprep.subr.mxu0 %v1190
    %1260 = vmatpush1.msra.mxu0 %v1189
    %1261 = vmatprep.subr.mxu0 %v1186
    %1262 = vmatpush1.msra.mxu0 %v1185
    %1263 = vmatprep.subr.mxu0 %v1182
    %1264 = vmatpush1.msra.mxu0 %v1181
    %1265 = vmatprep.subr.mxu0 %v1178
    %1266 = vmatpush1.msra.mxu0 %v1177
    %1267 = vmatprep.subr.mxu0 %v1174
    %1268 = vmatpush1.msra.mxu0 %v1173
    %1269 = vmatprep.subr.mxu0 0.0
    %1270 = vmatpush2.msra.mxu0 0.0
    %1271 = vmatprep.subr.mxu0 0.0
    %1272 = vmatpush2.msra.mxu0 0.0
    %1273 = vmatprep.subr.mxu0 0.0
    %1274 = vmatpush2.msra.mxu0 0.0
    %1275 = vmatprep.subr.mxu0 0.0
    %1276 = vmatpush2.msra.mxu0 0.0
    %1277 = vmatprep.subr.mxu0 0.0
    %1278 = vmatpush2.msra.mxu0 0.0
    %1279 = vmatprep.subr.mxu0 0.0
    %1280 = vmatpush2.msra.mxu0 0.0
    %1281 = vmatprep.subr.mxu0 0.0
    %1282 = vmatpush2.msra.mxu0 0.0
    %1283 = vmatprep.subr.mxu0 0.0
    %1284 = vmatpush2.msra.mxu0 0.0
    %1285 = vmatprep.subr.mxu0 0.0
    %1286 = vmatpush2.msra.mxu0 0.0
    %1287 = vmatprep.subr.mxu0 0.0
    %1288 = vmatpush2.msra.mxu0 0.0
    %1289 = vmatprep.subr.mxu0 0.0
    %1290 = vmatpush2.msra.mxu0 0.0
    %1291 = vmatprep.subr.mxu0 0.0
    %1292 = vmatpush2.msra.mxu0 0.0
    %1293 = vmatprep.subr.mxu0 0.0
    %1294 = vmatpush2.msra.mxu0 0.0
    %1295 = vmatprep.subr.mxu0 0.0
    %1296 = vmatpush2.msra.mxu0 0.0
    %1297 = vmatprep.subr.mxu0 0.0
    %1298 = vmatpush2.msra.mxu0 0.0
    %1299 = vmatprep.subr.mxu0 0.0
    %1300 = vmatpush2.msra.mxu0 0.0
    %1301 = vmatprep.mubr.f32.mxu0 0.0
    %1302 = vmatmul.mubr.f32.gmra.mxu0 %v1167
    %v1303 = vpop.f32.mrf.mxu0
    %v1304 = vadd.f32 0.0, %v1303
    %v1305 = vpop.f32.mrf.mxu0
    %v1306 = vadd.f32 0.0, %v1305
    %1307 = vdwg.mxu0
    %1308 = vmatprep.subr.mxu0 %v1236
    %1309 = vmatpush1.msra.mxu0 %v1235
    %1310 = vmatprep.subr.mxu0 %v1232
    %1311 = vmatpush1.msra.mxu0 %v1231
    %1312 = vmatprep.subr.mxu0 %v1228
    %1313 = vmatpush1.msra.mxu0 %v1227
    %1314 = vmatprep.subr.mxu0 %v1224
    %1315 = vmatpush1.msra.mxu0 %v1223
    %1316 = vmatprep.subr.mxu0 %v1220
    %1317 = vmatpush1.msra.mxu0 %v1219
    %1318 = vmatprep.subr.mxu0 %v1216
    %1319 = vmatpush1.msra.mxu0 %v1215
    %1320 = vmatprep.subr.mxu0 %v1212
    %1321 = vmatpush1.msra.mxu0 %v1211
    %1322 = vmatprep.subr.mxu0 %v1208
    %1323 = vmatpush1.msra.mxu0 %v1207
    %1324 = vmatprep.subr.mxu0 %v1204
    %1325 = vmatpush1.msra.mxu0 %v1203
    %1326 = vmatprep.subr.mxu0 %v1200
    %1327 = vmatpush1.msra.mxu0 %v1199
    %1328 = vmatprep.subr.mxu0 %v1196
    %1329 = vmatpush1.msra.mxu0 %v1195
    %1330 = vmatprep.subr.mxu0 %v1192
    %1331 = vmatpush1.msra.mxu0 %v1191
    %1332 = vmatprep.subr.mxu0 %v1188
    %1333 = vmatpush1.msra.mxu0 %v1187
    %1334 = vmatprep.subr.mxu0 %v1184
    %1335 = vmatpush1.msra.mxu0 %v1183
    %1336 = vmatprep.subr.mxu0 %v1180
    %1337 = vmatpush1.msra.mxu0 %v1179
    %1338 = vmatprep.subr.mxu0 %v1176
    %1339 = vmatpush1.msra.mxu0 %v1175
    %1340 = vmatprep.subr.mxu0 0.0
    %1341 = vmatpush2.msra.mxu0 0.0
    %1342 = vmatprep.subr.mxu0 0.0
    %1343 = vmatpush2.msra.mxu0 0.0
    %1344 = vmatprep.subr.mxu0 0.0
    %1345 = vmatpush2.msra.mxu0 0.0
    %1346 = vmatprep.subr.mxu0 0.0
    %1347 = vmatpush2.msra.mxu0 0.0
    %1348 = vmatprep.subr.mxu0 0.0
    %1349 = vmatpush2.msra.mxu0 0.0
    %1350 = vmatprep.subr.mxu0 0.0
    %1351 = vmatpush2.msra.mxu0 0.0
    %1352 = vmatprep.subr.mxu0 0.0
    %1353 = vmatpush2.msra.mxu0 0.0
    %1354 = vmatprep.subr.mxu0 0.0
    %1355 = vmatpush2.msra.mxu0 0.0
    %1356 = vmatprep.subr.mxu0 0.0
    %1357 = vmatpush2.msra.mxu0 0.0
    %1358 = vmatprep.subr.mxu0 0.0
    %1359 = vmatpush2.msra.mxu0 0.0
    %1360 = vmatprep.subr.mxu0 0.0
    %1361 = vmatpush2.msra.mxu0 0.0
    %1362 = vmatprep.subr.mxu0 0.0
    %1363 = vmatpush2.msra.mxu0 0.0
    %1364 = vmatprep.subr.mxu0 0.0
    %1365 = vmatpush2.msra.mxu0 0.0
    %1366 = vmatprep.subr.mxu0 0.0
    %1367 = vmatpush2.msra.mxu0 0.0
    %1368 = vmatprep.subr.mxu0 0.0
    %1369 = vmatpush2.msra.mxu0 0.0
    %1370 = vmatprep.subr.mxu0 0.0
    %1371 = vmatpush2.msra.mxu0 0.0
    %1372 = vmatprep.mubr.f32.mxu0 0.0
    %1373 = vmatmul.mubr.f32.gmra.mxu0 %v1167
    %v1374 = vpop.f32.mrf.mxu0
    %v1375 = vadd.f32 0.0, %v1374
    %v1376 = vpop.f32.mrf.mxu0
    %v1377 = vadd.f32 0.0, %v1376
    %1378 = vdwg.mxu0
    %v1379 = vadd.f32 %v1169, %v1304
    %v1380 = vadd.f32 %v1170, %v1306
    %v1381 = vadd.f32 %v1171, %v1375
    %v1382 = vadd.f32 %v1172, %v1377
    %v1383 = vxor.u32 %v1379, 2147483648
    %v1384 = vmul.f32 %v1383, 1.442695
    %v1385 = vpow.pop %v1384
    %v1386 = vadd.f32 %v1385, 1.0
    %v1387 = vrcp.pop %v1386
    %v1388 = vmul.f32 1.0, %v1387
    %v1389 = vxor.u32 %v1380, 2147483648
    %v1390 = vmul.f32 %v1389, 1.442695
    %v1391 = vpow.pop %v1390
    %v1392 = vadd.f32 %v1391, 1.0
    %v1393 = vrcp.pop %v1392
    %v1394 = vmul.f32 1.0, %v1393
    %v1395 = vtanh.pop %v1381
    %v1396 = vxor.u32 %v1382, 2147483648
    %v1397 = vmul.f32 %v1396, 1.442695
    %v1398 = vpow.pop %v1397
    %v1399 = vadd.f32 %v1398, 1.0
    %v1400 = vrcp.pop %v1399
    %v1401 = vmul.f32 1.0, %v1400
    %v1402 = vmul.f32 %v1394, %v1165
    %v1403 = vmul.f32 %v1388, %v1395
    %v1404 = vadd.f32 %v1402, %v1403
    %v1405 = vtanh.pop %v1404
    %v1406 = vmul.f32 %v1401, %v1405
    %1407 = vst [vmem:[#allocation2 + $0x18] sm:$0xff] %v1406
    %v1408 = vld [vmem:[#allocation3 + $0x80] sm:$0xff]
    %v1409 = vld [vmem:[#allocation3 + $0x88] sm:$0xff]
    %v1410 = vld [vmem:[#allocation3 + $0x90] sm:$0xff]
    %v1411 = vld [vmem:[#allocation3 + $0x98] sm:$0xff]
    %v1412 = vld [vmem:[#allocation6] sm:$0xff]
    %v1413 = vld [vmem:[#allocation6 + $0x8] sm:$0xff]
    %v1414 = vld [vmem:[#allocation6 + $0x10] sm:$0xff]
    %v1415 = vld [vmem:[#allocation6 + $0x18] sm:$0xff]
    %v1416 = vld [vmem:[#allocation6 + $0x20] sm:$0xff]
    %v1417 = vld [vmem:[#allocation6 + $0x28] sm:$0xff]
    %v1418 = vld [vmem:[#allocation6 + $0x30] sm:$0xff]
    %v1419 = vld [vmem:[#allocation6 + $0x38] sm:$0xff]
    %v1420 = vld [vmem:[#allocation6 + $0x40] sm:$0xff]
    %v1421 = vld [vmem:[#allocation6 + $0x48] sm:$0xff]
    %v1422 = vld [vmem:[#allocation6 + $0x50] sm:$0xff]
    %v1423 = vld [vmem:[#allocation6 + $0x58] sm:$0xff]
    %v1424 = vld [vmem:[#allocation6 + $0x60] sm:$0xff]
    %v1425 = vld [vmem:[#allocation6 + $0x68] sm:$0xff]
    %v1426 = vld [vmem:[#allocation6 + $0x70] sm:$0xff]
    %v1427 = vld [vmem:[#allocation6 + $0x78] sm:$0xff]
    %v1428 = vld [vmem:[#allocation6 + $0x80] sm:$0xff]
    %v1429 = vld [vmem:[#allocation6 + $0x88] sm:$0xff]
    %v1430 = vld [vmem:[#allocation6 + $0x90] sm:$0xff]
    %v1431 = vld [vmem:[#allocation6 + $0x98] sm:$0xff]
    %v1432 = vld [vmem:[#allocation6 + $0xa0] sm:$0xff]
    %v1433 = vld [vmem:[#allocation6 + $0xa8] sm:$0xff]
    %v1434 = vld [vmem:[#allocation6 + $0xb0] sm:$0xff]
    %v1435 = vld [vmem:[#allocation6 + $0xb8] sm:$0xff]
    %v1436 = vld [vmem:[#allocation6 + $0xc0] sm:$0xff]
    %v1437 = vld [vmem:[#allocation6 + $0xc8] sm:$0xff]
    %v1438 = vld [vmem:[#allocation6 + $0xd0] sm:$0xff]
    %v1439 = vld [vmem:[#allocation6 + $0xd8] sm:$0xff]
    %v1440 = vld [vmem:[#allocation6 + $0xe0] sm:$0xff]
    %v1441 = vld [vmem:[#allocation6 + $0xe8] sm:$0xff]
    %v1442 = vld [vmem:[#allocation6 + $0xf0] sm:$0xff]
    %v1443 = vld [vmem:[#allocation6 + $0xf8] sm:$0xff]
    %v1444 = vld [vmem:[#allocation6 + $0x100] sm:$0xff]
    %v1445 = vld [vmem:[#allocation6 + $0x108] sm:$0xff]
    %v1446 = vld [vmem:[#allocation6 + $0x110] sm:$0xff]
    %v1447 = vld [vmem:[#allocation6 + $0x118] sm:$0xff]
    %v1448 = vld [vmem:[#allocation6 + $0x120] sm:$0xff]
    %v1449 = vld [vmem:[#allocation6 + $0x128] sm:$0xff]
    %v1450 = vld [vmem:[#allocation6 + $0x130] sm:$0xff]
    %v1451 = vld [vmem:[#allocation6 + $0x138] sm:$0xff]
    %v1452 = vld [vmem:[#allocation6 + $0x140] sm:$0xff]
    %v1453 = vld [vmem:[#allocation6 + $0x148] sm:$0xff]
    %v1454 = vld [vmem:[#allocation6 + $0x150] sm:$0xff]
    %v1455 = vld [vmem:[#allocation6 + $0x158] sm:$0xff]
    %v1456 = vld [vmem:[#allocation6 + $0x160] sm:$0xff]
    %v1457 = vld [vmem:[#allocation6 + $0x168] sm:$0xff]
    %v1458 = vld [vmem:[#allocation6 + $0x170] sm:$0xff]
    %v1459 = vld [vmem:[#allocation6 + $0x178] sm:$0xff]
    %v1460 = vld [vmem:[#allocation6 + $0x180] sm:$0xff]
    %v1461 = vld [vmem:[#allocation6 + $0x188] sm:$0xff]
    %v1462 = vld [vmem:[#allocation6 + $0x190] sm:$0xff]
    %v1463 = vld [vmem:[#allocation6 + $0x198] sm:$0xff]
    %v1464 = vld [vmem:[#allocation6 + $0x1a0] sm:$0xff]
    %v1465 = vld [vmem:[#allocation6 + $0x1a8] sm:$0xff]
    %v1466 = vld [vmem:[#allocation6 + $0x1b0] sm:$0xff]
    %v1467 = vld [vmem:[#allocation6 + $0x1b8] sm:$0xff]
    %v1468 = vld [vmem:[#allocation6 + $0x1c0] sm:$0xff]
    %v1469 = vld [vmem:[#allocation6 + $0x1c8] sm:$0xff]
    %v1470 = vld [vmem:[#allocation6 + $0x1d0] sm:$0xff]
    %v1471 = vld [vmem:[#allocation6 + $0x1d8] sm:$0xff]
    %v1472 = vld [vmem:[#allocation6 + $0x1e0] sm:$0xff]
    %v1473 = vld [vmem:[#allocation6 + $0x1e8] sm:$0xff]
    %v1474 = vld [vmem:[#allocation6 + $0x1f0] sm:$0xff]
    %v1475 = vld [vmem:[#allocation6 + $0x1f8] sm:$0xff]
    %1476 = vmatprep.subr.mxu0 %v1473
    %1477 = vmatpush1.msra.mxu0 %v1472
    %1478 = vmatprep.subr.mxu0 %v1469
    %1479 = vmatpush1.msra.mxu0 %v1468
    %1480 = vmatprep.subr.mxu0 %v1465
    %1481 = vmatpush1.msra.mxu0 %v1464
    %1482 = vmatprep.subr.mxu0 %v1461
    %1483 = vmatpush1.msra.mxu0 %v1460
    %1484 = vmatprep.subr.mxu0 %v1457
    %1485 = vmatpush1.msra.mxu0 %v1456
    %1486 = vmatprep.subr.mxu0 %v1453
    %1487 = vmatpush1.msra.mxu0 %v1452
    %1488 = vmatprep.subr.mxu0 %v1449
    %1489 = vmatpush1.msra.mxu0 %v1448
    %1490 = vmatprep.subr.mxu0 %v1445
    %1491 = vmatpush1.msra.mxu0 %v1444
    %1492 = vmatprep.subr.mxu0 %v1441
    %1493 = vmatpush1.msra.mxu0 %v1440
    %1494 = vmatprep.subr.mxu0 %v1437
    %1495 = vmatpush1.msra.mxu0 %v1436
    %1496 = vmatprep.subr.mxu0 %v1433
    %1497 = vmatpush1.msra.mxu0 %v1432
    %1498 = vmatprep.subr.mxu0 %v1429
    %1499 = vmatpush1.msra.mxu0 %v1428
    %1500 = vmatprep.subr.mxu0 %v1425
    %1501 = vmatpush1.msra.mxu0 %v1424
    %1502 = vmatprep.subr.mxu0 %v1421
    %1503 = vmatpush1.msra.mxu0 %v1420
    %1504 = vmatprep.subr.mxu0 %v1417
    %1505 = vmatpush1.msra.mxu0 %v1416
    %1506 = vmatprep.subr.mxu0 %v1413
    %1507 = vmatpush1.msra.mxu0 %v1412
    %1508 = vmatprep.subr.mxu0 0.0
    %1509 = vmatpush2.msra.mxu0 0.0
    %1510 = vmatprep.subr.mxu0 0.0
    %1511 = vmatpush2.msra.mxu0 0.0
    %1512 = vmatprep.subr.mxu0 0.0
    %1513 = vmatpush2.msra.mxu0 0.0
    %1514 = vmatprep.subr.mxu0 0.0
    %1515 = vmatpush2.msra.mxu0 0.0
    %1516 = vmatprep.subr.mxu0 0.0
    %1517 = vmatpush2.msra.mxu0 0.0
    %1518 = vmatprep.subr.mxu0 0.0
    %1519 = vmatpush2.msra.mxu0 0.0
    %1520 = vmatprep.subr.mxu0 0.0
    %1521 = vmatpush2.msra.mxu0 0.0
    %1522 = vmatprep.subr.mxu0 0.0
    %1523 = vmatpush2.msra.mxu0 0.0
    %1524 = vmatprep.subr.mxu0 0.0
    %1525 = vmatpush2.msra.mxu0 0.0
    %1526 = vmatprep.subr.mxu0 0.0
    %1527 = vmatpush2.msra.mxu0 0.0
    %1528 = vmatprep.subr.mxu0 0.0
    %1529 = vmatpush2.msra.mxu0 0.0
    %1530 = vmatprep.subr.mxu0 0.0
    %1531 = vmatpush2.msra.mxu0 0.0
    %1532 = vmatprep.subr.mxu0 0.0
    %1533 = vmatpush2.msra.mxu0 0.0
    %1534 = vmatprep.subr.mxu0 0.0
    %1535 = vmatpush2.msra.mxu0 0.0
    %1536 = vmatprep.subr.mxu0 0.0
    %1537 = vmatpush2.msra.mxu0 0.0
    %1538 = vmatprep.subr.mxu0 0.0
    %1539 = vmatpush2.msra.mxu0 0.0
    %1540 = vmatprep.mubr.f32.mxu0 0.0
    %1541 = vmatmul.mubr.f32.gmra.mxu0 %v1406
    %v1542 = vpop.f32.mrf.mxu0
    %v1543 = vadd.f32 0.0, %v1542
    %v1544 = vpop.f32.mrf.mxu0
    %v1545 = vadd.f32 0.0, %v1544
    %1546 = vdwg.mxu0
    %1547 = vmatprep.subr.mxu0 %v1475
    %1548 = vmatpush1.msra.mxu0 %v1474
    %1549 = vmatprep.subr.mxu0 %v1471
    %1550 = vmatpush1.msra.mxu0 %v1470
    %1551 = vmatprep.subr.mxu0 %v1467
    %1552 = vmatpush1.msra.mxu0 %v1466
    %1553 = vmatprep.subr.mxu0 %v1463
    %1554 = vmatpush1.msra.mxu0 %v1462
    %1555 = vmatprep.subr.mxu0 %v1459
    %1556 = vmatpush1.msra.mxu0 %v1458
    %1557 = vmatprep.subr.mxu0 %v1455
    %1558 = vmatpush1.msra.mxu0 %v1454
    %1559 = vmatprep.subr.mxu0 %v1451
    %1560 = vmatpush1.msra.mxu0 %v1450
    %1561 = vmatprep.subr.mxu0 %v1447
    %1562 = vmatpush1.msra.mxu0 %v1446
    %1563 = vmatprep.subr.mxu0 %v1443
    %1564 = vmatpush1.msra.mxu0 %v1442
    %1565 = vmatprep.subr.mxu0 %v1439
    %1566 = vmatpush1.msra.mxu0 %v1438
    %1567 = vmatprep.subr.mxu0 %v1435
    %1568 = vmatpush1.msra.mxu0 %v1434
    %1569 = vmatprep.subr.mxu0 %v1431
    %1570 = vmatpush1.msra.mxu0 %v1430
    %1571 = vmatprep.subr.mxu0 %v1427
    %1572 = vmatpush1.msra.mxu0 %v1426
    %1573 = vmatprep.subr.mxu0 %v1423
    %1574 = vmatpush1.msra.mxu0 %v1422
    %1575 = vmatprep.subr.mxu0 %v1419
    %1576 = vmatpush1.msra.mxu0 %v1418
    %1577 = vmatprep.subr.mxu0 %v1415
    %1578 = vmatpush1.msra.mxu0 %v1414
    %1579 = vmatprep.subr.mxu0 0.0
    %1580 = vmatpush2.msra.mxu0 0.0
    %1581 = vmatprep.subr.mxu0 0.0
    %1582 = vmatpush2.msra.mxu0 0.0
    %1583 = vmatprep.subr.mxu0 0.0
    %1584 = vmatpush2.msra.mxu0 0.0
    %1585 = vmatprep.subr.mxu0 0.0
    %1586 = vmatpush2.msra.mxu0 0.0
    %1587 = vmatprep.subr.mxu0 0.0
    %1588 = vmatpush2.msra.mxu0 0.0
    %1589 = vmatprep.subr.mxu0 0.0
    %1590 = vmatpush2.msra.mxu0 0.0
    %1591 = vmatprep.subr.mxu0 0.0
    %1592 = vmatpush2.msra.mxu0 0.0
    %1593 = vmatprep.subr.mxu0 0.0
    %1594 = vmatpush2.msra.mxu0 0.0
    %1595 = vmatprep.subr.mxu0 0.0
    %1596 = vmatpush2.msra.mxu0 0.0
    %1597 = vmatprep.subr.mxu0 0.0
    %1598 = vmatpush2.msra.mxu0 0.0
    %1599 = vmatprep.subr.mxu0 0.0
    %1600 = vmatpush2.msra.mxu0 0.0
    %1601 = vmatprep.subr.mxu0 0.0
    %1602 = vmatpush2.msra.mxu0 0.0
    %1603 = vmatprep.subr.mxu0 0.0
    %1604 = vmatpush2.msra.mxu0 0.0
    %1605 = vmatprep.subr.mxu0 0.0
    %1606 = vmatpush2.msra.mxu0 0.0
    %1607 = vmatprep.subr.mxu0 0.0
    %1608 = vmatpush2.msra.mxu0 0.0
    %1609 = vmatprep.subr.mxu0 0.0
    %1610 = vmatpush2.msra.mxu0 0.0
    %1611 = vmatprep.mubr.f32.mxu0 0.0
    %1612 = vmatmul.mubr.f32.gmra.mxu0 %v1406
    %v1613 = vpop.f32.mrf.mxu0
    %v1614 = vadd.f32 0.0, %v1613
    %v1615 = vpop.f32.mrf.mxu0
    %v1616 = vadd.f32 0.0, %v1615
    %1617 = vdwg.mxu0
    %v1618 = vadd.f32 %v1408, %v1543
    %v1619 = vadd.f32 %v1409, %v1545
    %v1620 = vadd.f32 %v1410, %v1614
    %v1621 = vadd.f32 %v1411, %v1616
    %v1622 = vxor.u32 %v1618, 2147483648
    %v1623 = vmul.f32 %v1622, 1.442695
    %v1624 = vpow.pop %v1623
    %v1625 = vadd.f32 %v1624, 1.0
    %v1626 = vrcp.pop %v1625
    %v1627 = vmul.f32 1.0, %v1626
    %v1628 = vxor.u32 %v1619, 2147483648
    %v1629 = vmul.f32 %v1628, 1.442695
    %v1630 = vpow.pop %v1629
    %v1631 = vadd.f32 %v1630, 1.0
    %v1632 = vrcp.pop %v1631
    %v1633 = vmul.f32 1.0, %v1632
    %v1634 = vtanh.pop %v1620
    %v1635 = vxor.u32 %v1621, 2147483648
    %v1636 = vmul.f32 %v1635, 1.442695
    %v1637 = vpow.pop %v1636
    %v1638 = vadd.f32 %v1637, 1.0
    %v1639 = vrcp.pop %v1638
    %v1640 = vmul.f32 1.0, %v1639
    %v1641 = vmul.f32 %v1633, %v1404
    %v1642 = vmul.f32 %v1627, %v1634
    %v1643 = vadd.f32 %v1641, %v1642
    %v1644 = vtanh.pop %v1643
    %v1645 = vmul.f32 %v1640, %v1644
    %1646 = vst [vmem:[#allocation2 + $0x20] sm:$0xff] %v1645
    %v1647 = vld [vmem:[#allocation3 + $0xa0] sm:$0xff]
    %v1648 = vld [vmem:[#allocation3 + $0xa8] sm:$0xff]
    %v1649 = vld [vmem:[#allocation3 + $0xb0] sm:$0xff]
    %v1650 = vld [vmem:[#allocation3 + $0xb8] sm:$0xff]
    %v1651 = vld [vmem:[#allocation6] sm:$0xff]
    %v1652 = vld [vmem:[#allocation6 + $0x8] sm:$0xff]
    %v1653 = vld [vmem:[#allocation6 + $0x10] sm:$0xff]
    %v1654 = vld [vmem:[#allocation6 + $0x18] sm:$0xff]
    %v1655 = vld [vmem:[#allocation6 + $0x20] sm:$0xff]
    %v1656 = vld [vmem:[#allocation6 + $0x28] sm:$0xff]
    %v1657 = vld [vmem:[#allocation6 + $0x30] sm:$0xff]
    %v1658 = vld [vmem:[#allocation6 + $0x38] sm:$0xff]
    %v1659 = vld [vmem:[#allocation6 + $0x40] sm:$0xff]
    %v1660 = vld [vmem:[#allocation6 + $0x48] sm:$0xff]
    %v1661 = vld [vmem:[#allocation6 + $0x50] sm:$0xff]
    %v1662 = vld [vmem:[#allocation6 + $0x58] sm:$0xff]
    %v1663 = vld [vmem:[#allocation6 + $0x60] sm:$0xff]
    %v1664 = vld [vmem:[#allocation6 + $0x68] sm:$0xff]
    %v1665 = vld [vmem:[#allocation6 + $0x70] sm:$0xff]
    %v1666 = vld [vmem:[#allocation6 + $0x78] sm:$0xff]
    %v1667 = vld [vmem:[#allocation6 + $0x80] sm:$0xff]
    %v1668 = vld [vmem:[#allocation6 + $0x88] sm:$0xff]
    %v1669 = vld [vmem:[#allocation6 + $0x90] sm:$0xff]
    %v1670 = vld [vmem:[#allocation6 + $0x98] sm:$0xff]
    %v1671 = vld [vmem:[#allocation6 + $0xa0] sm:$0xff]
    %v1672 = vld [vmem:[#allocation6 + $0xa8] sm:$0xff]
    %v1673 = vld [vmem:[#allocation6 + $0xb0] sm:$0xff]
    %v1674 = vld [vmem:[#allocation6 + $0xb8] sm:$0xff]
    %v1675 = vld [vmem:[#allocation6 + $0xc0] sm:$0xff]
    %v1676 = vld [vmem:[#allocation6 + $0xc8] sm:$0xff]
    %v1677 = vld [vmem:[#allocation6 + $0xd0] sm:$0xff]
    %v1678 = vld [vmem:[#allocation6 + $0xd8] sm:$0xff]
    %v1679 = vld [vmem:[#allocation6 + $0xe0] sm:$0xff]
    %v1680 = vld [vmem:[#allocation6 + $0xe8] sm:$0xff]
    %v1681 = vld [vmem:[#allocation6 + $0xf0] sm:$0xff]
    %v1682 = vld [vmem:[#allocation6 + $0xf8] sm:$0xff]
    %v1683 = vld [vmem:[#allocation6 + $0x100] sm:$0xff]
    %v1684 = vld [vmem:[#allocation6 + $0x108] sm:$0xff]
    %v1685 = vld [vmem:[#allocation6 + $0x110] sm:$0xff]
    %v1686 = vld [vmem:[#allocation6 + $0x118] sm:$0xff]
    %v1687 = vld [vmem:[#allocation6 + $0x120] sm:$0xff]
    %v1688 = vld [vmem:[#allocation6 + $0x128] sm:$0xff]
    %v1689 = vld [vmem:[#allocation6 + $0x130] sm:$0xff]
    %v1690 = vld [vmem:[#allocation6 + $0x138] sm:$0xff]
    %v1691 = vld [vmem:[#allocation6 + $0x140] sm:$0xff]
    %v1692 = vld [vmem:[#allocation6 + $0x148] sm:$0xff]
    %v1693 = vld [vmem:[#allocation6 + $0x150] sm:$0xff]
    %v1694 = vld [vmem:[#allocation6 + $0x158] sm:$0xff]
    %v1695 = vld [vmem:[#allocation6 + $0x160] sm:$0xff]
    %v1696 = vld [vmem:[#allocation6 + $0x168] sm:$0xff]
    %v1697 = vld [vmem:[#allocation6 + $0x170] sm:$0xff]
    %v1698 = vld [vmem:[#allocation6 + $0x178] sm:$0xff]
    %v1699 = vld [vmem:[#allocation6 + $0x180] sm:$0xff]
    %v1700 = vld [vmem:[#allocation6 + $0x188] sm:$0xff]
    %v1701 = vld [vmem:[#allocation6 + $0x190] sm:$0xff]
    %v1702 = vld [vmem:[#allocation6 + $0x198] sm:$0xff]
    %v1703 = vld [vmem:[#allocation6 + $0x1a0] sm:$0xff]
    %v1704 = vld [vmem:[#allocation6 + $0x1a8] sm:$0xff]
    %v1705 = vld [vmem:[#allocation6 + $0x1b0] sm:$0xff]
    %v1706 = vld [vmem:[#allocation6 + $0x1b8] sm:$0xff]
    %v1707 = vld [vmem:[#allocation6 + $0x1c0] sm:$0xff]
    %v1708 = vld [vmem:[#allocation6 + $0x1c8] sm:$0xff]
    %v1709 = vld [vmem:[#allocation6 + $0x1d0] sm:$0xff]
    %v1710 = vld [vmem:[#allocation6 + $0x1d8] sm:$0xff]
    %v1711 = vld [vmem:[#allocation6 + $0x1e0] sm:$0xff]
    %v1712 = vld [vmem:[#allocation6 + $0x1e8] sm:$0xff]
    %v1713 = vld [vmem:[#allocation6 + $0x1f0] sm:$0xff]
    %v1714 = vld [vmem:[#allocation6 + $0x1f8] sm:$0xff]
    %1715 = vmatprep.subr.mxu0 %v1712
    %1716 = vmatpush1.msra.mxu0 %v1711
    %1717 = vmatprep.subr.mxu0 %v1708
    %1718 = vmatpush1.msra.mxu0 %v1707
    %1719 = vmatprep.subr.mxu0 %v1704
    %1720 = vmatpush1.msra.mxu0 %v1703
    %1721 = vmatprep.subr.mxu0 %v1700
    %1722 = vmatpush1.msra.mxu0 %v1699
    %1723 = vmatprep.subr.mxu0 %v1696
    %1724 = vmatpush1.msra.mxu0 %v1695
    %1725 = vmatprep.subr.mxu0 %v1692
    %1726 = vmatpush1.msra.mxu0 %v1691
    %1727 = vmatprep.subr.mxu0 %v1688
    %1728 = vmatpush1.msra.mxu0 %v1687
    %1729 = vmatprep.subr.mxu0 %v1684
    %1730 = vmatpush1.msra.mxu0 %v1683
    %1731 = vmatprep.subr.mxu0 %v1680
    %1732 = vmatpush1.msra.mxu0 %v1679
    %1733 = vmatprep.subr.mxu0 %v1676
    %1734 = vmatpush1.msra.mxu0 %v1675
    %1735 = vmatprep.subr.mxu0 %v1672
    %1736 = vmatpush1.msra.mxu0 %v1671
    %1737 = vmatprep.subr.mxu0 %v1668
    %1738 = vmatpush1.msra.mxu0 %v1667
    %1739 = vmatprep.subr.mxu0 %v1664
    %1740 = vmatpush1.msra.mxu0 %v1663
    %1741 = vmatprep.subr.mxu0 %v1660
    %1742 = vmatpush1.msra.mxu0 %v1659
    %1743 = vmatprep.subr.mxu0 %v1656
    %1744 = vmatpush1.msra.mxu0 %v1655
    %1745 = vmatprep.subr.mxu0 %v1652
    %1746 = vmatpush1.msra.mxu0 %v1651
    %1747 = vmatprep.subr.mxu0 0.0
    %1748 = vmatpush2.msra.mxu0 0.0
    %1749 = vmatprep.subr.mxu0 0.0
    %1750 = vmatpush2.msra.mxu0 0.0
    %1751 = vmatprep.subr.mxu0 0.0
    %1752 = vmatpush2.msra.mxu0 0.0
    %1753 = vmatprep.subr.mxu0 0.0
    %1754 = vmatpush2.msra.mxu0 0.0
    %1755 = vmatprep.subr.mxu0 0.0
    %1756 = vmatpush2.msra.mxu0 0.0
    %1757 = vmatprep.subr.mxu0 0.0
    %1758 = vmatpush2.msra.mxu0 0.0
    %1759 = vmatprep.subr.mxu0 0.0
    %1760 = vmatpush2.msra.mxu0 0.0
    %1761 = vmatprep.subr.mxu0 0.0
    %1762 = vmatpush2.msra.mxu0 0.0
    %1763 = vmatprep.subr.mxu0 0.0
    %1764 = vmatpush2.msra.mxu0 0.0
    %1765 = vmatprep.subr.mxu0 0.0
    %1766 = vmatpush2.msra.mxu0 0.0
    %1767 = vmatprep.subr.mxu0 0.0
    %1768 = vmatpush2.msra.mxu0 0.0
    %1769 = vmatprep.subr.mxu0 0.0
    %1770 = vmatpush2.msra.mxu0 0.0
    %1771 = vmatprep.subr.mxu0 0.0
    %1772 = vmatpush2.msra.mxu0 0.0
    %1773 = vmatprep.subr.mxu0 0.0
    %1774 = vmatpush2.msra.mxu0 0.0
    %1775 = vmatprep.subr.mxu0 0.0
    %1776 = vmatpush2.msra.mxu0 0.0
    %1777 = vmatprep.subr.mxu0 0.0
    %1778 = vmatpush2.msra.mxu0 0.0
    %1779 = vmatprep.mubr.f32.mxu0 0.0
    %1780 = vmatmul.mubr.f32.gmra.mxu0 %v1645
    %v1781 = vpop.f32.mrf.mxu0
    %v1782 = vadd.f32 0.0, %v1781
    %v1783 = vpop.f32.mrf.mxu0
    %v1784 = vadd.f32 0.0, %v1783
    %1785 = vdwg.mxu0
    %1786 = vmatprep.subr.mxu0 %v1714
    %1787 = vmatpush1.msra.mxu0 %v1713
    %1788 = vmatprep.subr.mxu0 %v1710
    %1789 = vmatpush1.msra.mxu0 %v1709
    %1790 = vmatprep.subr.mxu0 %v1706
    %1791 = vmatpush1.msra.mxu0 %v1705
    %1792 = vmatprep.subr.mxu0 %v1702
    %1793 = vmatpush1.msra.mxu0 %v1701
    %1794 = vmatprep.subr.mxu0 %v1698
    %1795 = vmatpush1.msra.mxu0 %v1697
    %1796 = vmatprep.subr.mxu0 %v1694
    %1797 = vmatpush1.msra.mxu0 %v1693
    %1798 = vmatprep.subr.mxu0 %v1690
    %1799 = vmatpush1.msra.mxu0 %v1689
    %1800 = vmatprep.subr.mxu0 %v1686
    %1801 = vmatpush1.msra.mxu0 %v1685
    %1802 = vmatprep.subr.mxu0 %v1682
    %1803 = vmatpush1.msra.mxu0 %v1681
    %1804 = vmatprep.subr.mxu0 %v1678
    %1805 = vmatpush1.msra.mxu0 %v1677
    %1806 = vmatprep.subr.mxu0 %v1674
    %1807 = vmatpush1.msra.mxu0 %v1673
    %1808 = vmatprep.subr.mxu0 %v1670
    %1809 = vmatpush1.msra.mxu0 %v1669
    %1810 = vmatprep.subr.mxu0 %v1666
    %1811 = vmatpush1.msra.mxu0 %v1665
    %1812 = vmatprep.subr.mxu0 %v1662
    %1813 = vmatpush1.msra.mxu0 %v1661
    %1814 = vmatprep.subr.mxu0 %v1658
    %1815 = vmatpush1.msra.mxu0 %v1657
    %1816 = vmatprep.subr.mxu0 %v1654
    %1817 = vmatpush1.msra.mxu0 %v1653
    %1818 = vmatprep.subr.mxu0 0.0
    %1819 = vmatpush2.msra.mxu0 0.0
    %1820 = vmatprep.subr.mxu0 0.0
    %1821 = vmatpush2.msra.mxu0 0.0
    %1822 = vmatprep.subr.mxu0 0.0
    %1823 = vmatpush2.msra.mxu0 0.0
    %1824 = vmatprep.subr.mxu0 0.0
    %1825 = vmatpush2.msra.mxu0 0.0
    %1826 = vmatprep.subr.mxu0 0.0
    %1827 = vmatpush2.msra.mxu0 0.0
    %1828 = vmatprep.subr.mxu0 0.0
    %1829 = vmatpush2.msra.mxu0 0.0
    %1830 = vmatprep.subr.mxu0 0.0
    %1831 = vmatpush2.msra.mxu0 0.0
    %1832 = vmatprep.subr.mxu0 0.0
    %1833 = vmatpush2.msra.mxu0 0.0
    %1834 = vmatprep.subr.mxu0 0.0
    %1835 = vmatpush2.msra.mxu0 0.0
    %1836 = vmatprep.subr.mxu0 0.0
    %1837 = vmatpush2.msra.mxu0 0.0
    %1838 = vmatprep.subr.mxu0 0.0
    %1839 = vmatpush2.msra.mxu0 0.0
    %1840 = vmatprep.subr.mxu0 0.0
    %1841 = vmatpush2.msra.mxu0 0.0
    %1842 = vmatprep.subr.mxu0 0.0
    %1843 = vmatpush2.msra.mxu0 0.0
    %1844 = vmatprep.subr.mxu0 0.0
    %1845 = vmatpush2.msra.mxu0 0.0
    %1846 = vmatprep.subr.mxu0 0.0
    %1847 = vmatpush2.msra.mxu0 0.0
    %1848 = vmatprep.subr.mxu0 0.0
    %1849 = vmatpush2.msra.mxu0 0.0
    %1850 = vmatprep.mubr.f32.mxu0 0.0
    %1851 = vmatmul.mubr.f32.gmra.mxu0 %v1645
    %v1852 = vpop.f32.mrf.mxu0
    %v1853 = vadd.f32 0.0, %v1852
    %v1854 = vpop.f32.mrf.mxu0
    %v1855 = vadd.f32 0.0, %v1854
    %1856 = vdwg.mxu0
    %v1857 = vadd.f32 %v1647, %v1782
    %v1858 = vadd.f32 %v1648, %v1784
    %v1859 = vadd.f32 %v1649, %v1853
    %v1860 = vadd.f32 %v1650, %v1855
    %v1861 = vxor.u32 %v1857, 2147483648
    %v1862 = vmul.f32 %v1861, 1.442695
    %v1863 = vpow.pop %v1862
    %v1864 = vadd.f32 %v1863, 1.0
    %v1865 = vrcp.pop %v1864
    %v1866 = vmul.f32 1.0, %v1865
    %v1867 = vxor.u32 %v1858, 2147483648
    %v1868 = vmul.f32 %v1867, 1.442695
    %v1869 = vpow.pop %v1868
    %v1870 = vadd.f32 %v1869, 1.0
    %v1871 = vrcp.pop %v1870
    %v1872 = vmul.f32 1.0, %v1871
    %v1873 = vtanh.pop %v1859
    %v1874 = vxor.u32 %v1860, 2147483648
    %v1875 = vmul.f32 %v1874, 1.442695
    %v1876 = vpow.pop %v1875
    %v1877 = vadd.f32 %v1876, 1.0
    %v1878 = vrcp.pop %v1877
    %v1879 = vmul.f32 1.0, %v1878
    %v1880 = vmul.f32 %v1872, %v1643
    %v1881 = vmul.f32 %v1866, %v1873
    %v1882 = vadd.f32 %v1880, %v1881
    %v1883 = vtanh.pop %v1882
    %v1884 = vmul.f32 %v1879, %v1883
    %1885 = vst [vmem:[#allocation2 + $0x28] sm:$0xff] %v1884
    %v1886 = vld [vmem:[#allocation3 + $0xc0] sm:$0xff]
    %v1887 = vld [vmem:[#allocation3 + $0xc8] sm:$0xff]
    %v1888 = vld [vmem:[#allocation3 + $0xd0] sm:$0xff]
    %v1889 = vld [vmem:[#allocation3 + $0xd8] sm:$0xff]
    %v1890 = vld [vmem:[#allocation6] sm:$0xff]
    %v1891 = vld [vmem:[#allocation6 + $0x8] sm:$0xff]
    %v1892 = vld [vmem:[#allocation6 + $0x10] sm:$0xff]
    %v1893 = vld [vmem:[#allocation6 + $0x18] sm:$0xff]
    %v1894 = vld [vmem:[#allocation6 + $0x20] sm:$0xff]
    %v1895 = vld [vmem:[#allocation6 + $0x28] sm:$0xff]
    %v1896 = vld [vmem:[#allocation6 + $0x30] sm:$0xff]
    %v1897 = vld [vmem:[#allocation6 + $0x38] sm:$0xff]
    %v1898 = vld [vmem:[#allocation6 + $0x40] sm:$0xff]
    %v1899 = vld [vmem:[#allocation6 + $0x48] sm:$0xff]
    %v1900 = vld [vmem:[#allocation6 + $0x50] sm:$0xff]
    %v1901 = vld [vmem:[#allocation6 + $0x58] sm:$0xff]
    %v1902 = vld [vmem:[#allocation6 + $0x60] sm:$0xff]
    %v1903 = vld [vmem:[#allocation6 + $0x68] sm:$0xff]
    %v1904 = vld [vmem:[#allocation6 + $0x70] sm:$0xff]
    %v1905 = vld [vmem:[#allocation6 + $0x78] sm:$0xff]
    %v1906 = vld [vmem:[#allocation6 + $0x80] sm:$0xff]
    %v1907 = vld [vmem:[#allocation6 + $0x88] sm:$0xff]
    %v1908 = vld [vmem:[#allocation6 + $0x90] sm:$0xff]
    %v1909 = vld [vmem:[#allocation6 + $0x98] sm:$0xff]
    %v1910 = vld [vmem:[#allocation6 + $0xa0] sm:$0xff]
    %v1911 = vld [vmem:[#allocation6 + $0xa8] sm:$0xff]
    %v1912 = vld [vmem:[#allocation6 + $0xb0] sm:$0xff]
    %v1913 = vld [vmem:[#allocation6 + $0xb8] sm:$0xff]
    %v1914 = vld [vmem:[#allocation6 + $0xc0] sm:$0xff]
    %v1915 = vld [vmem:[#allocation6 + $0xc8] sm:$0xff]
    %v1916 = vld [vmem:[#allocation6 + $0xd0] sm:$0xff]
    %v1917 = vld [vmem:[#allocation6 + $0xd8] sm:$0xff]
    %v1918 = vld [vmem:[#allocation6 + $0xe0] sm:$0xff]
    %v1919 = vld [vmem:[#allocation6 + $0xe8] sm:$0xff]
    %v1920 = vld [vmem:[#allocation6 + $0xf0] sm:$0xff]
    %v1921 = vld [vmem:[#allocation6 + $0xf8] sm:$0xff]
    %v1922 = vld [vmem:[#allocation6 + $0x100] sm:$0xff]
    %v1923 = vld [vmem:[#allocation6 + $0x108] sm:$0xff]
    %v1924 = vld [vmem:[#allocation6 + $0x110] sm:$0xff]
    %v1925 = vld [vmem:[#allocation6 + $0x118] sm:$0xff]
    %v1926 = vld [vmem:[#allocation6 + $0x120] sm:$0xff]
    %v1927 = vld [vmem:[#allocation6 + $0x128] sm:$0xff]
    %v1928 = vld [vmem:[#allocation6 + $0x130] sm:$0xff]
    %v1929 = vld [vmem:[#allocation6 + $0x138] sm:$0xff]
    %v1930 = vld [vmem:[#allocation6 + $0x140] sm:$0xff]
    %v1931 = vld [vmem:[#allocation6 + $0x148] sm:$0xff]
    %v1932 = vld [vmem:[#allocation6 + $0x150] sm:$0xff]
    %v1933 = vld [vmem:[#allocation6 + $0x158] sm:$0xff]
    %v1934 = vld [vmem:[#allocation6 + $0x160] sm:$0xff]
    %v1935 = vld [vmem:[#allocation6 + $0x168] sm:$0xff]
    %v1936 = vld [vmem:[#allocation6 + $0x170] sm:$0xff]
    %v1937 = vld [vmem:[#allocation6 + $0x178] sm:$0xff]
    %v1938 = vld [vmem:[#allocation6 + $0x180] sm:$0xff]
    %v1939 = vld [vmem:[#allocation6 + $0x188] sm:$0xff]
    %v1940 = vld [vmem:[#allocation6 + $0x190] sm:$0xff]
    %v1941 = vld [vmem:[#allocation6 + $0x198] sm:$0xff]
    %v1942 = vld [vmem:[#allocation6 + $0x1a0] sm:$0xff]
    %v1943 = vld [vmem:[#allocation6 + $0x1a8] sm:$0xff]
    %v1944 = vld [vmem:[#allocation6 + $0x1b0] sm:$0xff]
    %v1945 = vld [vmem:[#allocation6 + $0x1b8] sm:$0xff]
    %v1946 = vld [vmem:[#allocation6 + $0x1c0] sm:$0xff]
    %v1947 = vld [vmem:[#allocation6 + $0x1c8] sm:$0xff]
    %v1948 = vld [vmem:[#allocation6 + $0x1d0] sm:$0xff]
    %v1949 = vld [vmem:[#allocation6 + $0x1d8] sm:$0xff]
    %v1950 = vld [vmem:[#allocation6 + $0x1e0] sm:$0xff]
    %v1951 = vld [vmem:[#allocation6 + $0x1e8] sm:$0xff]
    %v1952 = vld [vmem:[#allocation6 + $0x1f0] sm:$0xff]
    %v1953 = vld [vmem:[#allocation6 + $0x1f8] sm:$0xff]
    %1954 = vmatprep.subr.mxu0 %v1951
    %1955 = vmatpush1.msra.mxu0 %v1950
    %1956 = vmatprep.subr.mxu0 %v1947
    %1957 = vmatpush1.msra.mxu0 %v1946
    %1958 = vmatprep.subr.mxu0 %v1943
    %1959 = vmatpush1.msra.mxu0 %v1942
    %1960 = vmatprep.subr.mxu0 %v1939
    %1961 = vmatpush1.msra.mxu0 %v1938
    %1962 = vmatprep.subr.mxu0 %v1935
    %1963 = vmatpush1.msra.mxu0 %v1934
    %1964 = vmatprep.subr.mxu0 %v1931
    %1965 = vmatpush1.msra.mxu0 %v1930
    %1966 = vmatprep.subr.mxu0 %v1927
    %1967 = vmatpush1.msra.mxu0 %v1926
    %1968 = vmatprep.subr.mxu0 %v1923
    %1969 = vmatpush1.msra.mxu0 %v1922
    %1970 = vmatprep.subr.mxu0 %v1919
    %1971 = vmatpush1.msra.mxu0 %v1918
    %1972 = vmatprep.subr.mxu0 %v1915
    %1973 = vmatpush1.msra.mxu0 %v1914
    %1974 = vmatprep.subr.mxu0 %v1911
    %1975 = vmatpush1.msra.mxu0 %v1910
    %1976 = vmatprep.subr.mxu0 %v1907
    %1977 = vmatpush1.msra.mxu0 %v1906
    %1978 = vmatprep.subr.mxu0 %v1903
    %1979 = vmatpush1.msra.mxu0 %v1902
    %1980 = vmatprep.subr.mxu0 %v1899
    %1981 = vmatpush1.msra.mxu0 %v1898
    %1982 = vmatprep.subr.mxu0 %v1895
    %1983 = vmatpush1.msra.mxu0 %v1894
    %1984 = vmatprep.subr.mxu0 %v1891
    %1985 = vmatpush1.msra.mxu0 %v1890
    %1986 = vmatprep.subr.mxu0 0.0
    %1987 = vmatpush2.msra.mxu0 0.0
    %1988 = vmatprep.subr.mxu0 0.0
    %1989 = vmatpush2.msra.mxu0 0.0
    %1990 = vmatprep.subr.mxu0 0.0
    %1991 = vmatpush2.msra.mxu0 0.0
    %1992 = vmatprep.subr.mxu0 0.0
    %1993 = vmatpush2.msra.mxu0 0.0
    %1994 = vmatprep.subr.mxu0 0.0
    %1995 = vmatpush2.msra.mxu0 0.0
    %1996 = vmatprep.subr.mxu0 0.0
    %1997 = vmatpush2.msra.mxu0 0.0
    %1998 = vmatprep.subr.mxu0 0.0
    %1999 = vmatpush2.msra.mxu0 0.0
    %2000 = vmatprep.subr.mxu0 0.0
    %2001 = vmatpush2.msra.mxu0 0.0
    %2002 = vmatprep.subr.mxu0 0.0
    %2003 = vmatpush2.msra.mxu0 0.0
    %2004 = vmatprep.subr.mxu0 0.0
    %2005 = vmatpush2.msra.mxu0 0.0
    %2006 = vmatprep.subr.mxu0 0.0
    %2007 = vmatpush2.msra.mxu0 0.0
    %2008 = vmatprep.subr.mxu0 0.0
    %2009 = vmatpush2.msra.mxu0 0.0
    %2010 = vmatprep.subr.mxu0 0.0
    %2011 = vmatpush2.msra.mxu0 0.0
    %2012 = vmatprep.subr.mxu0 0.0
    %2013 = vmatpush2.msra.mxu0 0.0
    %2014 = vmatprep.subr.mxu0 0.0
    %2015 = vmatpush2.msra.mxu0 0.0
    %2016 = vmatprep.subr.mxu0 0.0
    %2017 = vmatpush2.msra.mxu0 0.0
    %2018 = vmatprep.mubr.f32.mxu0 0.0
    %2019 = vmatmul.mubr.f32.gmra.mxu0 %v1884
    %v2020 = vpop.f32.mrf.mxu0
    %v2021 = vadd.f32 0.0, %v2020
    %v2022 = vpop.f32.mrf.mxu0
    %v2023 = vadd.f32 0.0, %v2022
    %2024 = vdwg.mxu0
    %2025 = vmatprep.subr.mxu0 %v1953
    %2026 = vmatpush1.msra.mxu0 %v1952
    %2027 = vmatprep.subr.mxu0 %v1949
    %2028 = vmatpush1.msra.mxu0 %v1948
    %2029 = vmatprep.subr.mxu0 %v1945
    %2030 = vmatpush1.msra.mxu0 %v1944
    %2031 = vmatprep.subr.mxu0 %v1941
    %2032 = vmatpush1.msra.mxu0 %v1940
    %2033 = vmatprep.subr.mxu0 %v1937
    %2034 = vmatpush1.msra.mxu0 %v1936
    %2035 = vmatprep.subr.mxu0 %v1933
    %2036 = vmatpush1.msra.mxu0 %v1932
    %2037 = vmatprep.subr.mxu0 %v1929
    %2038 = vmatpush1.msra.mxu0 %v1928
    %2039 = vmatprep.subr.mxu0 %v1925
    %2040 = vmatpush1.msra.mxu0 %v1924
    %2041 = vmatprep.subr.mxu0 %v1921
    %2042 = vmatpush1.msra.mxu0 %v1920
    %2043 = vmatprep.subr.mxu0 %v1917
    %2044 = vmatpush1.msra.mxu0 %v1916
    %2045 = vmatprep.subr.mxu0 %v1913
    %2046 = vmatpush1.msra.mxu0 %v1912
    %2047 = vmatprep.subr.mxu0 %v1909
    %2048 = vmatpush1.msra.mxu0 %v1908
    %2049 = vmatprep.subr.mxu0 %v1905
    %2050 = vmatpush1.msra.mxu0 %v1904
    %2051 = vmatprep.subr.mxu0 %v1901
    %2052 = vmatpush1.msra.mxu0 %v1900
    %2053 = vmatprep.subr.mxu0 %v1897
    %2054 = vmatpush1.msra.mxu0 %v1896
    %2055 = vmatprep.subr.mxu0 %v1893
    %2056 = vmatpush1.msra.mxu0 %v1892
    %2057 = vmatprep.subr.mxu0 0.0
    %2058 = vmatpush2.msra.mxu0 0.0
    %2059 = vmatprep.subr.mxu0 0.0
    %2060 = vmatpush2.msra.mxu0 0.0
    %2061 = vmatprep.subr.mxu0 0.0
    %2062 = vmatpush2.msra.mxu0 0.0
    %2063 = vmatprep.subr.mxu0 0.0
    %2064 = vmatpush2.msra.mxu0 0.0
    %2065 = vmatprep.subr.mxu0 0.0
    %2066 = vmatpush2.msra.mxu0 0.0
    %2067 = vmatprep.subr.mxu0 0.0
    %2068 = vmatpush2.msra.mxu0 0.0
    %2069 = vmatprep.subr.mxu0 0.0
    %2070 = vmatpush2.msra.mxu0 0.0
    %2071 = vmatprep.subr.mxu0 0.0
    %2072 = vmatpush2.msra.mxu0 0.0
    %2073 = vmatprep.subr.mxu0 0.0
    %2074 = vmatpush2.msra.mxu0 0.0
    %2075 = vmatprep.subr.mxu0 0.0
    %2076 = vmatpush2.msra.mxu0 0.0
    %2077 = vmatprep.subr.mxu0 0.0
    %2078 = vmatpush2.msra.mxu0 0.0
    %2079 = vmatprep.subr.mxu0 0.0
    %2080 = vmatpush2.msra.mxu0 0.0
    %2081 = vmatprep.subr.mxu0 0.0
    %2082 = vmatpush2.msra.mxu0 0.0
    %2083 = vmatprep.subr.mxu0 0.0
    %2084 = vmatpush2.msra.mxu0 0.0
    %2085 = vmatprep.subr.mxu0 0.0
    %2086 = vmatpush2.msra.mxu0 0.0
    %2087 = vmatprep.subr.mxu0 0.0
    %2088 = vmatpush2.msra.mxu0 0.0
    %2089 = vmatprep.mubr.f32.mxu0 0.0
    %2090 = vmatmul.mubr.f32.gmra.mxu0 %v1884
    %v2091 = vpop.f32.mrf.mxu0
    %v2092 = vadd.f32 0.0, %v2091
    %v2093 = vpop.f32.mrf.mxu0
    %v2094 = vadd.f32 0.0, %v2093
    %2095 = vdwg.mxu0
    %v2096 = vadd.f32 %v1886, %v2021
    %v2097 = vadd.f32 %v1887, %v2023
    %v2098 = vadd.f32 %v1888, %v2092
    %v2099 = vadd.f32 %v1889, %v2094
    %v2100 = vxor.u32 %v2096, 2147483648
    %v2101 = vmul.f32 %v2100, 1.442695
    %v2102 = vpow.pop %v2101
    %v2103 = vadd.f32 %v2102, 1.0
    %v2104 = vrcp.pop %v2103
    %v2105 = vmul.f32 1.0, %v2104
    %v2106 = vxor.u32 %v2097, 2147483648
    %v2107 = vmul.f32 %v2106, 1.442695
    %v2108 = vpow.pop %v2107
    %v2109 = vadd.f32 %v2108, 1.0
    %v2110 = vrcp.pop %v2109
    %v2111 = vmul.f32 1.0, %v2110
    %v2112 = vtanh.pop %v2098
    %v2113 = vxor.u32 %v2099, 2147483648
    %v2114 = vmul.f32 %v2113, 1.442695
    %v2115 = vpow.pop %v2114
    %v2116 = vadd.f32 %v2115, 1.0
    %v2117 = vrcp.pop %v2116
    %v2118 = vmul.f32 1.0, %v2117
    %v2119 = vmul.f32 %v2111, %v1882
    %v2120 = vmul.f32 %v2105, %v2112
    %v2121 = vadd.f32 %v2119, %v2120
    %v2122 = vtanh.pop %v2121
    %v2123 = vmul.f32 %v2118, %v2122
    %2124 = vst [vmem:[#allocation2 + $0x30] sm:$0xff] %v2123
    %v2125 = vld [vmem:[#allocation3 + $0xe0] sm:$0xff]
    %v2126 = vld [vmem:[#allocation3 + $0xe8] sm:$0xff]
    %v2127 = vld [vmem:[#allocation3 + $0xf0] sm:$0xff]
    %v2128 = vld [vmem:[#allocation3 + $0xf8] sm:$0xff]
    %v2129 = vld [vmem:[#allocation6] sm:$0xff]
    %v2130 = vld [vmem:[#allocation6 + $0x8] sm:$0xff]
    %v2131 = vld [vmem:[#allocation6 + $0x10] sm:$0xff]
    %v2132 = vld [vmem:[#allocation6 + $0x18] sm:$0xff]
    %v2133 = vld [vmem:[#allocation6 + $0x20] sm:$0xff]
    %v2134 = vld [vmem:[#allocation6 + $0x28] sm:$0xff]
    %v2135 = vld [vmem:[#allocation6 + $0x30] sm:$0xff]
    %v2136 = vld [vmem:[#allocation6 + $0x38] sm:$0xff]
    %v2137 = vld [vmem:[#allocation6 + $0x40] sm:$0xff]
    %v2138 = vld [vmem:[#allocation6 + $0x48] sm:$0xff]
    %v2139 = vld [vmem:[#allocation6 + $0x50] sm:$0xff]
    %v2140 = vld [vmem:[#allocation6 + $0x58] sm:$0xff]
    %v2141 = vld [vmem:[#allocation6 + $0x60] sm:$0xff]
    %v2142 = vld [vmem:[#allocation6 + $0x68] sm:$0xff]
    %v2143 = vld [vmem:[#allocation6 + $0x70] sm:$0xff]
    %v2144 = vld [vmem:[#allocation6 + $0x78] sm:$0xff]
    %v2145 = vld [vmem:[#allocation6 + $0x80] sm:$0xff]
    %v2146 = vld [vmem:[#allocation6 + $0x88] sm:$0xff]
    %v2147 = vld [vmem:[#allocation6 + $0x90] sm:$0xff]
    %v2148 = vld [vmem:[#allocation6 + $0x98] sm:$0xff]
    %v2149 = vld [vmem:[#allocation6 + $0xa0] sm:$0xff]
    %v2150 = vld [vmem:[#allocation6 + $0xa8] sm:$0xff]
    %v2151 = vld [vmem:[#allocation6 + $0xb0] sm:$0xff]
    %v2152 = vld [vmem:[#allocation6 + $0xb8] sm:$0xff]
    %v2153 = vld [vmem:[#allocation6 + $0xc0] sm:$0xff]
    %v2154 = vld [vmem:[#allocation6 + $0xc8] sm:$0xff]
    %v2155 = vld [vmem:[#allocation6 + $0xd0] sm:$0xff]
    %v2156 = vld [vmem:[#allocation6 + $0xd8] sm:$0xff]
    %v2157 = vld [vmem:[#allocation6 + $0xe0] sm:$0xff]
    %v2158 = vld [vmem:[#allocation6 + $0xe8] sm:$0xff]
    %v2159 = vld [vmem:[#allocation6 + $0xf0] sm:$0xff]
    %v2160 = vld [vmem:[#allocation6 + $0xf8] sm:$0xff]
    %v2161 = vld [vmem:[#allocation6 + $0x100] sm:$0xff]
    %v2162 = vld [vmem:[#allocation6 + $0x108] sm:$0xff]
    %v2163 = vld [vmem:[#allocation6 + $0x110] sm:$0xff]
    %v2164 = vld [vmem:[#allocation6 + $0x118] sm:$0xff]
    %v2165 = vld [vmem:[#allocation6 + $0x120] sm:$0xff]
    %v2166 = vld [vmem:[#allocation6 + $0x128] sm:$0xff]
    %v2167 = vld [vmem:[#allocation6 + $0x130] sm:$0xff]
    %v2168 = vld [vmem:[#allocation6 + $0x138] sm:$0xff]
    %v2169 = vld [vmem:[#allocation6 + $0x140] sm:$0xff]
    %v2170 = vld [vmem:[#allocation6 + $0x148] sm:$0xff]
    %v2171 = vld [vmem:[#allocation6 + $0x150] sm:$0xff]
    %v2172 = vld [vmem:[#allocation6 + $0x158] sm:$0xff]
    %v2173 = vld [vmem:[#allocation6 + $0x160] sm:$0xff]
    %v2174 = vld [vmem:[#allocation6 + $0x168] sm:$0xff]
    %v2175 = vld [vmem:[#allocation6 + $0x170] sm:$0xff]
    %v2176 = vld [vmem:[#allocation6 + $0x178] sm:$0xff]
    %v2177 = vld [vmem:[#allocation6 + $0x180] sm:$0xff]
    %v2178 = vld [vmem:[#allocation6 + $0x188] sm:$0xff]
    %v2179 = vld [vmem:[#allocation6 + $0x190] sm:$0xff]
    %v2180 = vld [vmem:[#allocation6 + $0x198] sm:$0xff]
    %v2181 = vld [vmem:[#allocation6 + $0x1a0] sm:$0xff]
    %v2182 = vld [vmem:[#allocation6 + $0x1a8] sm:$0xff]
    %v2183 = vld [vmem:[#allocation6 + $0x1b0] sm:$0xff]
    %v2184 = vld [vmem:[#allocation6 + $0x1b8] sm:$0xff]
    %v2185 = vld [vmem:[#allocation6 + $0x1c0] sm:$0xff]
    %v2186 = vld [vmem:[#allocation6 + $0x1c8] sm:$0xff]
    %v2187 = vld [vmem:[#allocation6 + $0x1d0] sm:$0xff]
    %v2188 = vld [vmem:[#allocation6 + $0x1d8] sm:$0xff]
    %v2189 = vld [vmem:[#allocation6 + $0x1e0] sm:$0xff]
    %v2190 = vld [vmem:[#allocation6 + $0x1e8] sm:$0xff]
    %v2191 = vld [vmem:[#allocation6 + $0x1f0] sm:$0xff]
    %v2192 = vld [vmem:[#allocation6 + $0x1f8] sm:$0xff]
    %2193 = vmatprep.subr.mxu0 %v2190
    %2194 = vmatpush1.msra.mxu0 %v2189
    %2195 = vmatprep.subr.mxu0 %v2186
    %2196 = vmatpush1.msra.mxu0 %v2185
    %2197 = vmatprep.subr.mxu0 %v2182
    %2198 = vmatpush1.msra.mxu0 %v2181
    %2199 = vmatprep.subr.mxu0 %v2178
    %2200 = vmatpush1.msra.mxu0 %v2177
    %2201 = vmatprep.subr.mxu0 %v2174
    %2202 = vmatpush1.msra.mxu0 %v2173
    %2203 = vmatprep.subr.mxu0 %v2170
    %2204 = vmatpush1.msra.mxu0 %v2169
    %2205 = vmatprep.subr.mxu0 %v2166
    %2206 = vmatpush1.msra.mxu0 %v2165
    %2207 = vmatprep.subr.mxu0 %v2162
    %2208 = vmatpush1.msra.mxu0 %v2161
    %2209 = vmatprep.subr.mxu0 %v2158
    %2210 = vmatpush1.msra.mxu0 %v2157
    %2211 = vmatprep.subr.mxu0 %v2154
    %2212 = vmatpush1.msra.mxu0 %v2153
    %2213 = vmatprep.subr.mxu0 %v2150
    %2214 = vmatpush1.msra.mxu0 %v2149
    %2215 = vmatprep.subr.mxu0 %v2146
    %2216 = vmatpush1.msra.mxu0 %v2145
    %2217 = vmatprep.subr.mxu0 %v2142
    %2218 = vmatpush1.msra.mxu0 %v2141
    %2219 = vmatprep.subr.mxu0 %v2138
    %2220 = vmatpush1.msra.mxu0 %v2137
    %2221 = vmatprep.subr.mxu0 %v2134
    %2222 = vmatpush1.msra.mxu0 %v2133
    %2223 = vmatprep.subr.mxu0 %v2130
    %2224 = vmatpush1.msra.mxu0 %v2129
    %2225 = vmatprep.subr.mxu0 0.0
    %2226 = vmatpush2.msra.mxu0 0.0
    %2227 = vmatprep.subr.mxu0 0.0
    %2228 = vmatpush2.msra.mxu0 0.0
    %2229 = vmatprep.subr.mxu0 0.0
    %2230 = vmatpush2.msra.mxu0 0.0
    %2231 = vmatprep.subr.mxu0 0.0
    %2232 = vmatpush2.msra.mxu0 0.0
    %2233 = vmatprep.subr.mxu0 0.0
    %2234 = vmatpush2.msra.mxu0 0.0
    %2235 = vmatprep.subr.mxu0 0.0
    %2236 = vmatpush2.msra.mxu0 0.0
    %2237 = vmatprep.subr.mxu0 0.0
    %2238 = vmatpush2.msra.mxu0 0.0
    %2239 = vmatprep.subr.mxu0 0.0
    %2240 = vmatpush2.msra.mxu0 0.0
    %2241 = vmatprep.subr.mxu0 0.0
    %2242 = vmatpush2.msra.mxu0 0.0
    %2243 = vmatprep.subr.mxu0 0.0
    %2244 = vmatpush2.msra.mxu0 0.0
    %2245 = vmatprep.subr.mxu0 0.0
    %2246 = vmatpush2.msra.mxu0 0.0
    %2247 = vmatprep.subr.mxu0 0.0
    %2248 = vmatpush2.msra.mxu0 0.0
    %2249 = vmatprep.subr.mxu0 0.0
    %2250 = vmatpush2.msra.mxu0 0.0
    %2251 = vmatprep.subr.mxu0 0.0
    %2252 = vmatpush2.msra.mxu0 0.0
    %2253 = vmatprep.subr.mxu0 0.0
    %2254 = vmatpush2.msra.mxu0 0.0
    %2255 = vmatprep.subr.mxu0 0.0
    %2256 = vmatpush2.msra.mxu0 0.0
    %2257 = vmatprep.mubr.f32.mxu0 0.0
    %2258 = vmatmul.mubr.f32.gmra.mxu0 %v2123
    %v2259 = vpop.f32.mrf.mxu0
    %v2260 = vadd.f32 0.0, %v2259
    %v2261 = vpop.f32.mrf.mxu0
    %v2262 = vadd.f32 0.0, %v2261
    %2263 = vdwg.mxu0
    %2264 = vmatprep.subr.mxu0 %v2192
    %2265 = vmatpush1.msra.mxu0 %v2191
    %2266 = vmatprep.subr.mxu0 %v2188
    %2267 = vmatpush1.msra.mxu0 %v2187
    %2268 = vmatprep.subr.mxu0 %v2184
    %2269 = vmatpush1.msra.mxu0 %v2183
    %2270 = vmatprep.subr.mxu0 %v2180
    %2271 = vmatpush1.msra.mxu0 %v2179
    %2272 = vmatprep.subr.mxu0 %v2176
    %2273 = vmatpush1.msra.mxu0 %v2175
    %2274 = vmatprep.subr.mxu0 %v2172
    %2275 = vmatpush1.msra.mxu0 %v2171
    %2276 = vmatprep.subr.mxu0 %v2168
    %2277 = vmatpush1.msra.mxu0 %v2167
    %2278 = vmatprep.subr.mxu0 %v2164
    %2279 = vmatpush1.msra.mxu0 %v2163
    %2280 = vmatprep.subr.mxu0 %v2160
    %2281 = vmatpush1.msra.mxu0 %v2159
    %2282 = vmatprep.subr.mxu0 %v2156
    %2283 = vmatpush1.msra.mxu0 %v2155
    %2284 = vmatprep.subr.mxu0 %v2152
    %2285 = vmatpush1.msra.mxu0 %v2151
    %2286 = vmatprep.subr.mxu0 %v2148
    %2287 = vmatpush1.msra.mxu0 %v2147
    %2288 = vmatprep.subr.mxu0 %v2144
    %2289 = vmatpush1.msra.mxu0 %v2143
    %2290 = vmatprep.subr.mxu0 %v2140
    %2291 = vmatpush1.msra.mxu0 %v2139
    %2292 = vmatprep.subr.mxu0 %v2136
    %2293 = vmatpush1.msra.mxu0 %v2135
    %2294 = vmatprep.subr.mxu0 %v2132
    %2295 = vmatpush1.msra.mxu0 %v2131
    %2296 = vmatprep.subr.mxu0 0.0
    %2297 = vmatpush2.msra.mxu0 0.0
    %2298 = vmatprep.subr.mxu0 0.0
    %2299 = vmatpush2.msra.mxu0 0.0
    %2300 = vmatprep.subr.mxu0 0.0
    %2301 = vmatpush2.msra.mxu0 0.0
    %2302 = vmatprep.subr.mxu0 0.0
    %2303 = vmatpush2.msra.mxu0 0.0
    %2304 = vmatprep.subr.mxu0 0.0
    %2305 = vmatpush2.msra.mxu0 0.0
    %2306 = vmatprep.subr.mxu0 0.0
    %2307 = vmatpush2.msra.mxu0 0.0
    %2308 = vmatprep.subr.mxu0 0.0
    %2309 = vmatpush2.msra.mxu0 0.0
    %2310 = vmatprep.subr.mxu0 0.0
    %2311 = vmatpush2.msra.mxu0 0.0
    %2312 = vmatprep.subr.mxu0 0.0
    %2313 = vmatpush2.msra.mxu0 0.0
    %2314 = vmatprep.subr.mxu0 0.0
    %2315 = vmatpush2.msra.mxu0 0.0
    %2316 = vmatprep.subr.mxu0 0.0
    %2317 = vmatpush2.msra.mxu0 0.0
    %2318 = vmatprep.subr.mxu0 0.0
    %2319 = vmatpush2.msra.mxu0 0.0
    %2320 = vmatprep.subr.mxu0 0.0
    %2321 = vmatpush2.msra.mxu0 0.0
    %2322 = vmatprep.subr.mxu0 0.0
    %2323 = vmatpush2.msra.mxu0 0.0
    %2324 = vmatprep.subr.mxu0 0.0
    %2325 = vmatpush2.msra.mxu0 0.0
    %2326 = vmatprep.subr.mxu0 0.0
    %2327 = vmatpush2.msra.mxu0 0.0
    %2328 = vmatprep.mubr.f32.mxu0 0.0
    %2329 = vmatmul.mubr.f32.gmra.mxu0 %v2123
    %v2330 = vpop.f32.mrf.mxu0
    %v2331 = vadd.f32 0.0, %v2330
    %v2332 = vpop.f32.mrf.mxu0
    %v2333 = vadd.f32 0.0, %v2332
    %2334 = vdwg.mxu0
    %v2335 = vadd.f32 %v2125, %v2260
    %v2336 = vadd.f32 %v2126, %v2262
    %v2337 = vadd.f32 %v2127, %v2331
    %v2338 = vadd.f32 %v2128, %v2333
    %v2339 = vxor.u32 %v2335, 2147483648
    %v2340 = vmul.f32 %v2339, 1.442695
    %v2341 = vpow.pop %v2340
    %v2342 = vadd.f32 %v2341, 1.0
    %v2343 = vrcp.pop %v2342
    %v2344 = vmul.f32 1.0, %v2343
    %v2345 = vxor.u32 %v2336, 2147483648
    %v2346 = vmul.f32 %v2345, 1.442695
    %v2347 = vpow.pop %v2346
    %v2348 = vadd.f32 %v2347, 1.0
    %v2349 = vrcp.pop %v2348
    %v2350 = vmul.f32 1.0, %v2349
    %v2351 = vtanh.pop %v2337
    %v2352 = vxor.u32 %v2338, 2147483648
    %v2353 = vmul.f32 %v2352, 1.442695
    %v2354 = vpow.pop %v2353
    %v2355 = vadd.f32 %v2354, 1.0
    %v2356 = vrcp.pop %v2355
    %v2357 = vmul.f32 1.0, %v2356
    %v2358 = vmul.f32 %v2350, %v2121
    %v2359 = vmul.f32 %v2344, %v2351
    %v2360 = vadd.f32 %v2358, %v2359
    %v2361 = vtanh.pop %v2360
    %v2362 = vmul.f32 %v2357, %v2361
    %2363 = vst [vmem:[#allocation2 + $0x38] sm:$0xff] %v2362
    %v2364 = vld [vmem:[#allocation2] sm:$0xff]
    %v2365 = vld [vmem:[#allocation2 + $0x8] sm:$0xff]
    %v2366 = vld [vmem:[#allocation2 + $0x10] sm:$0xff]
    %v2367 = vld [vmem:[#allocation2 + $0x18] sm:$0xff]
    %v2368 = vld [vmem:[#allocation2 + $0x20] sm:$0xff]
    %v2369 = vld [vmem:[#allocation2 + $0x28] sm:$0xff]
    %v2370 = vld [vmem:[#allocation2 + $0x30] sm:$0xff]
    %v2371 = vld [vmem:[#allocation2 + $0x38] sm:$0xff]
    %v2372 = vld [vmem:[#allocation8] sm:$0xff]
    %v2373 = vld [vmem:[#allocation8 + $0x8] sm:$0xff]
    %v2374 = vld [vmem:[#allocation8 + $0x10] sm:$0xff]
    %v2375 = vld [vmem:[#allocation8 + $0x18] sm:$0xff]
    %v2376 = vld [vmem:[#allocation8 + $0x20] sm:$0xff]
    %v2377 = vld [vmem:[#allocation8 + $0x28] sm:$0xff]
    %v2378 = vld [vmem:[#allocation8 + $0x30] sm:$0xff]
    %v2379 = vld [vmem:[#allocation8 + $0x38] sm:$0xff]
    %v2380 = vld [vmem:[#allocation8 + $0x40] sm:$0xff]
    %v2381 = vld [vmem:[#allocation8 + $0x48] sm:$0xff]
    %v2382 = vld [vmem:[#allocation8 + $0x50] sm:$0xff]
    %v2383 = vld [vmem:[#allocation8 + $0x58] sm:$0xff]
    %v2384 = vld [vmem:[#allocation8 + $0x60] sm:$0xff]
    %v2385 = vld [vmem:[#allocation8 + $0x68] sm:$0xff]
    %v2386 = vld [vmem:[#allocation8 + $0x70] sm:$0xff]
    %v2387 = vld [vmem:[#allocation8 + $0x78] sm:$0xff]
    %v2388 = vld [vmem:[#allocation8 + $0x80] sm:$0xff]
    %v2389 = vld [vmem:[#allocation8 + $0x88] sm:$0xff]
    %v2390 = vld [vmem:[#allocation8 + $0x90] sm:$0xff]
    %v2391 = vld [vmem:[#allocation8 + $0x98] sm:$0xff]
    %v2392 = vld [vmem:[#allocation8 + $0xa0] sm:$0xff]
    %v2393 = vld [vmem:[#allocation8 + $0xa8] sm:$0xff]
    %v2394 = vld [vmem:[#allocation8 + $0xb0] sm:$0xff]
    %v2395 = vld [vmem:[#allocation8 + $0xb8] sm:$0xff]
    %v2396 = vld [vmem:[#allocation8 + $0xc0] sm:$0xff]
    %v2397 = vld [vmem:[#allocation8 + $0xc8] sm:$0xff]
    %v2398 = vld [vmem:[#allocation8 + $0xd0] sm:$0xff]
    %v2399 = vld [vmem:[#allocation8 + $0xd8] sm:$0xff]
    %v2400 = vld [vmem:[#allocation8 + $0xe0] sm:$0xff]
    %v2401 = vld [vmem:[#allocation8 + $0xe8] sm:$0xff]
    %v2402 = vld [vmem:[#allocation8 + $0xf0] sm:$0xff]
    %v2403 = vld [vmem:[#allocation8 + $0xf8] sm:$0xff]
    %v2404 = vld [vmem:[#allocation8 + $0x100] sm:$0xff]
    %v2405 = vld [vmem:[#allocation8 + $0x108] sm:$0xff]
    %v2406 = vld [vmem:[#allocation8 + $0x110] sm:$0xff]
    %v2407 = vld [vmem:[#allocation8 + $0x118] sm:$0xff]
    %v2408 = vld [vmem:[#allocation8 + $0x120] sm:$0xff]
    %v2409 = vld [vmem:[#allocation8 + $0x128] sm:$0xff]
    %v2410 = vld [vmem:[#allocation8 + $0x130] sm:$0xff]
    %v2411 = vld [vmem:[#allocation8 + $0x138] sm:$0xff]
    %v2412 = vld [vmem:[#allocation8 + $0x140] sm:$0xff]
    %v2413 = vld [vmem:[#allocation8 + $0x148] sm:$0xff]
    %v2414 = vld [vmem:[#allocation8 + $0x150] sm:$0xff]
    %v2415 = vld [vmem:[#allocation8 + $0x158] sm:$0xff]
    %v2416 = vld [vmem:[#allocation8 + $0x160] sm:$0xff]
    %v2417 = vld [vmem:[#allocation8 + $0x168] sm:$0xff]
    %v2418 = vld [vmem:[#allocation8 + $0x170] sm:$0xff]
    %v2419 = vld [vmem:[#allocation8 + $0x178] sm:$0xff]
    %v2420 = vld [vmem:[#allocation8 + $0x180] sm:$0xff]
    %v2421 = vld [vmem:[#allocation8 + $0x188] sm:$0xff]
    %v2422 = vld [vmem:[#allocation8 + $0x190] sm:$0xff]
    %v2423 = vld [vmem:[#allocation8 + $0x198] sm:$0xff]
    %v2424 = vld [vmem:[#allocation8 + $0x1a0] sm:$0xff]
    %v2425 = vld [vmem:[#allocation8 + $0x1a8] sm:$0xff]
    %v2426 = vld [vmem:[#allocation8 + $0x1b0] sm:$0xff]
    %v2427 = vld [vmem:[#allocation8 + $0x1b8] sm:$0xff]
    %v2428 = vld [vmem:[#allocation8 + $0x1c0] sm:$0xff]
    %v2429 = vld [vmem:[#allocation8 + $0x1c8] sm:$0xff]
    %v2430 = vld [vmem:[#allocation8 + $0x1d0] sm:$0xff]
    %v2431 = vld [vmem:[#allocation8 + $0x1d8] sm:$0xff]
    %v2432 = vld [vmem:[#allocation8 + $0x1e0] sm:$0xff]
    %v2433 = vld [vmem:[#allocation8 + $0x1e8] sm:$0xff]
    %v2434 = vld [vmem:[#allocation8 + $0x1f0] sm:$0xff]
    %v2435 = vld [vmem:[#allocation8 + $0x1f8] sm:$0xff]
    %v2436 = vld [vmem:[%s6] sm:$0xf]
    %v2438 = vlaneseq
    %v2439 = vshrl.u32 %v2438, 7
    %v2440 = vsub.s32 0, %v2439
    %v2441 = vrot.slane %v2436, %v2440
    %v2442 = vlaneseq
    %v2443 = vshrl.u32 %v2442, 7
    %v2444 = vsub.s32 1, %v2443
    %v2445 = vrot.slane %v2436, %v2444
    %v2446 = vlaneseq
    %v2447 = vshrl.u32 %v2446, 7
    %v2448 = vsub.s32 2, %v2447
    %v2449 = vrot.slane %v2436, %v2448
    %v2450 = vlaneseq
    %v2451 = vshrl.u32 %v2450, 7
    %v2452 = vsub.s32 3, %v2451
    %v2453 = vrot.slane %v2436, %v2452
    %2458 = vmatprep.subr.mxu0 %v2433
    %2459 = vmatpush1.msra.mxu0 %v2432
    %2460 = vmatprep.subr.mxu0 %v2429
    %2461 = vmatpush1.msra.mxu0 %v2428
    %2462 = vmatprep.subr.mxu0 %v2425
    %2463 = vmatpush1.msra.mxu0 %v2424
    %2464 = vmatprep.subr.mxu0 %v2421
    %2465 = vmatpush1.msra.mxu0 %v2420
    %2466 = vmatprep.subr.mxu0 %v2417
    %2467 = vmatpush1.msra.mxu0 %v2416
    %2468 = vmatprep.subr.mxu0 %v2413
    %2469 = vmatpush1.msra.mxu0 %v2412
    %2470 = vmatprep.subr.mxu0 %v2409
    %2471 = vmatpush1.msra.mxu0 %v2408
    %2472 = vmatprep.subr.mxu0 %v2405
    %2473 = vmatpush1.msra.mxu0 %v2404
    %2474 = vmatprep.subr.mxu0 %v2401
    %2475 = vmatpush1.msra.mxu0 %v2400
    %2476 = vmatprep.subr.mxu0 %v2397
    %2477 = vmatpush1.msra.mxu0 %v2396
    %2478 = vmatprep.subr.mxu0 %v2393
    %2479 = vmatpush1.msra.mxu0 %v2392
    %2480 = vmatprep.subr.mxu0 %v2389
    %2481 = vmatpush1.msra.mxu0 %v2388
    %2482 = vmatprep.subr.mxu0 %v2385
    %2483 = vmatpush1.msra.mxu0 %v2384
    %2484 = vmatprep.subr.mxu0 %v2381
    %2485 = vmatpush1.msra.mxu0 %v2380
    %2486 = vmatprep.subr.mxu0 %v2377
    %2487 = vmatpush1.msra.mxu0 %v2376
    %2488 = vmatprep.subr.mxu0 %v2373
    %2489 = vmatpush1.msra.mxu0 %v2372
    %2490 = vmatprep.subr.mxu0 0.0
    %2491 = vmatpush2.msra.mxu0 0.0
    %2492 = vmatprep.subr.mxu0 0.0
    %2493 = vmatpush2.msra.mxu0 0.0
    %2494 = vmatprep.subr.mxu0 0.0
    %2495 = vmatpush2.msra.mxu0 0.0
    %2496 = vmatprep.subr.mxu0 0.0
    %2497 = vmatpush2.msra.mxu0 0.0
    %2498 = vmatprep.subr.mxu0 0.0
    %2499 = vmatpush2.msra.mxu0 0.0
    %2500 = vmatprep.subr.mxu0 0.0
    %2501 = vmatpush2.msra.mxu0 0.0
    %2502 = vmatprep.subr.mxu0 0.0
    %2503 = vmatpush2.msra.mxu0 0.0
    %2504 = vmatprep.subr.mxu0 0.0
    %2505 = vmatpush2.msra.mxu0 0.0
    %2506 = vmatprep.subr.mxu0 0.0
    %2507 = vmatpush2.msra.mxu0 0.0
    %2508 = vmatprep.subr.mxu0 0.0
    %2509 = vmatpush2.msra.mxu0 0.0
    %2510 = vmatprep.subr.mxu0 0.0
    %2511 = vmatpush2.msra.mxu0 0.0
    %2512 = vmatprep.subr.mxu0 0.0
    %2513 = vmatpush2.msra.mxu0 0.0
    %2514 = vmatprep.subr.mxu0 0.0
    %2515 = vmatpush2.msra.mxu0 0.0
    %2516 = vmatprep.subr.mxu0 0.0
    %2517 = vmatpush2.msra.mxu0 0.0
    %2518 = vmatprep.subr.mxu0 0.0
    %2519 = vmatpush2.msra.mxu0 0.0
    %2520 = vmatprep.subr.mxu0 0.0
    %2521 = vmatpush2.msra.mxu0 0.0
    %2522 = vmatprep.mubr.f32.mxu0 0.0
    %2523 = vmatmul.mubr.f32.gmra.mxu0 %v2364
    %v2524 = vpop.f32.mrf.mxu0
    %v2525 = vadd.f32 %v2441, %v2524
    %v2526 = vpop.f32.mrf.mxu0
    %v2527 = vadd.f32 %v2445, %v2526
    %2528 = vmatprep.mubr.f32.mxu0 0.0
    %2529 = vmatmul.mubr.f32.gmra.mxu0 %v2365
    %v2530 = vpop.f32.mrf.mxu0
    %v2531 = vadd.f32 %v2441, %v2530
    %v2532 = vpop.f32.mrf.mxu0
    %v2533 = vadd.f32 %v2445, %v2532
    %2534 = vmatprep.mubr.f32.mxu0 0.0
    %2535 = vmatmul.mubr.f32.gmra.mxu0 %v2366
    %v2536 = vpop.f32.mrf.mxu0
    %v2537 = vadd.f32 %v2441, %v2536
    %v2538 = vpop.f32.mrf.mxu0
    %v2539 = vadd.f32 %v2445, %v2538
    %2540 = vmatprep.mubr.f32.mxu0 0.0
    %2541 = vmatmul.mubr.f32.gmra.mxu0 %v2367
    %v2542 = vpop.f32.mrf.mxu0
    %v2543 = vadd.f32 %v2441, %v2542
    %v2544 = vpop.f32.mrf.mxu0
    %v2545 = vadd.f32 %v2445, %v2544
    %2546 = vmatprep.mubr.f32.mxu0 0.0
    %2547 = vmatmul.mubr.f32.gmra.mxu0 %v2368
    %v2548 = vpop.f32.mrf.mxu0
    %v2549 = vadd.f32 %v2441, %v2548
    %v2550 = vpop.f32.mrf.mxu0
    %v2551 = vadd.f32 %v2445, %v2550
    %2552 = vmatprep.mubr.f32.mxu0 0.0
    %2553 = vmatmul.mubr.f32.gmra.mxu0 %v2369
    %v2554 = vpop.f32.mrf.mxu0
    %v2555 = vadd.f32 %v2441, %v2554
    %v2556 = vpop.f32.mrf.mxu0
    %v2557 = vadd.f32 %v2445, %v2556
    %2558 = vmatprep.mubr.f32.mxu0 0.0
    %2559 = vmatmul.mubr.f32.gmra.mxu0 %v2370
    %v2560 = vpop.f32.mrf.mxu0
    %v2561 = vadd.f32 %v2441, %v2560
    %v2562 = vpop.f32.mrf.mxu0
    %v2563 = vadd.f32 %v2445, %v2562
    %2564 = vmatprep.mubr.f32.mxu0 0.0
    %2565 = vmatmul.mubr.f32.gmra.mxu0 %v2371
    %v2566 = vpop.f32.mrf.mxu0
    %v2567 = vadd.f32 %v2441, %v2566
    %v2568 = vpop.f32.mrf.mxu0
    %v2569 = vadd.f32 %v2445, %v2568
    %2570 = vdwg.mxu0
    %2571 = vmatprep.subr.mxu0 %v2435
    %2572 = vmatpush1.msra.mxu0 %v2434
    %2573 = vmatprep.subr.mxu0 %v2431
    %2574 = vmatpush1.msra.mxu0 %v2430
    %2575 = vmatprep.subr.mxu0 %v2427
    %2576 = vmatpush1.msra.mxu0 %v2426
    %2577 = vmatprep.subr.mxu0 %v2423
    %2578 = vmatpush1.msra.mxu0 %v2422
    %2579 = vmatprep.subr.mxu0 %v2419
    %2580 = vmatpush1.msra.mxu0 %v2418
    %2581 = vmatprep.subr.mxu0 %v2415
    %2582 = vmatpush1.msra.mxu0 %v2414
    %2583 = vmatprep.subr.mxu0 %v2411
    %2584 = vmatpush1.msra.mxu0 %v2410
    %2585 = vmatprep.subr.mxu0 %v2407
    %2586 = vmatpush1.msra.mxu0 %v2406
    %2587 = vmatprep.subr.mxu0 %v2403
    %2588 = vmatpush1.msra.mxu0 %v2402
    %2589 = vmatprep.subr.mxu0 %v2399
    %2590 = vmatpush1.msra.mxu0 %v2398
    %2591 = vmatprep.subr.mxu0 %v2395
    %2592 = vmatpush1.msra.mxu0 %v2394
    %2593 = vmatprep.subr.mxu0 %v2391
    %2594 = vmatpush1.msra.mxu0 %v2390
    %2595 = vmatprep.subr.mxu0 %v2387
    %2596 = vmatpush1.msra.mxu0 %v2386
    %2597 = vmatprep.subr.mxu0 %v2383
    %2598 = vmatpush1.msra.mxu0 %v2382
    %2599 = vmatprep.subr.mxu0 %v2379
    %2600 = vmatpush1.msra.mxu0 %v2378
    %2601 = vmatprep.subr.mxu0 %v2375
    %2602 = vmatpush1.msra.mxu0 %v2374
    %2603 = vmatprep.subr.mxu0 0.0
    %2604 = vmatpush2.msra.mxu0 0.0
    %2605 = vmatprep.subr.mxu0 0.0
    %2606 = vmatpush2.msra.mxu0 0.0
    %2607 = vmatprep.subr.mxu0 0.0
    %2608 = vmatpush2.msra.mxu0 0.0
    %2609 = vmatprep.subr.mxu0 0.0
    %2610 = vmatpush2.msra.mxu0 0.0
    %2611 = vmatprep.subr.mxu0 0.0
    %2612 = vmatpush2.msra.mxu0 0.0
    %2613 = vmatprep.subr.mxu0 0.0
    %2614 = vmatpush2.msra.mxu0 0.0
    %2615 = vmatprep.subr.mxu0 0.0
    %2616 = vmatpush2.msra.mxu0 0.0
    %2617 = vmatprep.subr.mxu0 0.0
    %2618 = vmatpush2.msra.mxu0 0.0
    %2619 = vmatprep.subr.mxu0 0.0
    %2620 = vmatpush2.msra.mxu0 0.0
    %2621 = vmatprep.subr.mxu0 0.0
    %2622 = vmatpush2.msra.mxu0 0.0
    %2623 = vmatprep.subr.mxu0 0.0
    %2624 = vmatpush2.msra.mxu0 0.0
    %2625 = vmatprep.subr.mxu0 0.0
    %2626 = vmatpush2.msra.mxu0 0.0
    %2627 = vmatprep.subr.mxu0 0.0
    %2628 = vmatpush2.msra.mxu0 0.0
    %2629 = vmatprep.subr.mxu0 0.0
    %2630 = vmatpush2.msra.mxu0 0.0
    %2631 = vmatprep.subr.mxu0 0.0
    %2632 = vmatpush2.msra.mxu0 0.0
    %2633 = vmatprep.subr.mxu0 0.0
    %2634 = vmatpush2.msra.mxu0 0.0
    %2635 = vmatprep.mubr.f32.mxu0 0.0
    %2636 = vmatmul.mubr.f32.gmra.mxu0 %v2364
    %v2637 = vpop.f32.mrf.mxu0
    %v2638 = vadd.f32 %v2449, %v2637
    %v2639 = vpop.f32.mrf.mxu0
    %v2640 = vadd.f32 %v2453, %v2639
    %2641 = vmatprep.mubr.f32.mxu0 0.0
    %2642 = vmatmul.mubr.f32.gmra.mxu0 %v2365
    %v2643 = vpop.f32.mrf.mxu0
    %v2644 = vadd.f32 %v2449, %v2643
    %v2645 = vpop.f32.mrf.mxu0
    %v2646 = vadd.f32 %v2453, %v2645
    %2647 = vmatprep.mubr.f32.mxu0 0.0
    %2648 = vmatmul.mubr.f32.gmra.mxu0 %v2366
    %v2649 = vpop.f32.mrf.mxu0
    %v2650 = vadd.f32 %v2449, %v2649
    %v2651 = vpop.f32.mrf.mxu0
    %v2652 = vadd.f32 %v2453, %v2651
    %2653 = vmatprep.mubr.f32.mxu0 0.0
    %2654 = vmatmul.mubr.f32.gmra.mxu0 %v2367
    %v2655 = vpop.f32.mrf.mxu0
    %v2656 = vadd.f32 %v2449, %v2655
    %v2657 = vpop.f32.mrf.mxu0
    %v2658 = vadd.f32 %v2453, %v2657
    %2659 = vmatprep.mubr.f32.mxu0 0.0
    %2660 = vmatmul.mubr.f32.gmra.mxu0 %v2368
    %v2661 = vpop.f32.mrf.mxu0
    %v2662 = vadd.f32 %v2449, %v2661
    %v2663 = vpop.f32.mrf.mxu0
    %v2664 = vadd.f32 %v2453, %v2663
    %2665 = vmatprep.mubr.f32.mxu0 0.0
    %2666 = vmatmul.mubr.f32.gmra.mxu0 %v2369
    %v2667 = vpop.f32.mrf.mxu0
    %v2668 = vadd.f32 %v2449, %v2667
    %v2669 = vpop.f32.mrf.mxu0
    %v2670 = vadd.f32 %v2453, %v2669
    %2671 = vmatprep.mubr.f32.mxu0 0.0
    %2672 = vmatmul.mubr.f32.gmra.mxu0 %v2370
    %v2673 = vpop.f32.mrf.mxu0
    %v2674 = vadd.f32 %v2449, %v2673
    %v2675 = vpop.f32.mrf.mxu0
    %v2676 = vadd.f32 %v2453, %v2675
    %2677 = vmatprep.mubr.f32.mxu0 0.0
    %2678 = vmatmul.mubr.f32.gmra.mxu0 %v2371
    %v2679 = vpop.f32.mrf.mxu0
    %v2680 = vadd.f32 %v2449, %v2679
    %v2681 = vpop.f32.mrf.mxu0
    %v2682 = vadd.f32 %v2453, %v2681
    %2683 = vdwg.mxu0
    %2684 = vst [vmem:[#allocation3] sm:$0xff] %v2525
    %2685 = vst [vmem:[#allocation3 + $0x8] sm:$0xff] %v2527
    %2686 = vst [vmem:[#allocation3 + $0x10] sm:$0xff] %v2638
    %2687 = vst [vmem:[#allocation3 + $0x18] sm:$0xff] %v2640
    %2688 = vst [vmem:[#allocation3 + $0x20] sm:$0xff] %v2531
    %2689 = vst [vmem:[#allocation3 + $0x28] sm:$0xff] %v2533
    %2690 = vst [vmem:[#allocation3 + $0x30] sm:$0xff] %v2644
    %2691 = vst [vmem:[#allocation3 + $0x38] sm:$0xff] %v2646
    %2692 = vst [vmem:[#allocation3 + $0x40] sm:$0xff] %v2537
    %2693 = vst [vmem:[#allocation3 + $0x48] sm:$0xff] %v2539
    %2694 = vst [vmem:[#allocation3 + $0x50] sm:$0xff] %v2650
    %2695 = vst [vmem:[#allocation3 + $0x58] sm:$0xff] %v2652
    %2696 = vst [vmem:[#allocation3 + $0x60] sm:$0xff] %v2543
    %2697 = vst [vmem:[#allocation3 + $0x68] sm:$0xff] %v2545
    %2698 = vst [vmem:[#allocation3 + $0x70] sm:$0xff] %v2656
    %2699 = vst [vmem:[#allocation3 + $0x78] sm:$0xff] %v2658
    %2700 = vst [vmem:[#allocation3 + $0x80] sm:$0xff] %v2549
    %2701 = vst [vmem:[#allocation3 + $0x88] sm:$0xff] %v2551
    %2702 = vst [vmem:[#allocation3 + $0x90] sm:$0xff] %v2662
    %2703 = vst [vmem:[#allocation3 + $0x98] sm:$0xff] %v2664
    %2704 = vst [vmem:[#allocation3 + $0xa0] sm:$0xff] %v2555
    %2705 = vst [vmem:[#allocation3 + $0xa8] sm:$0xff] %v2557
    %2706 = vst [vmem:[#allocation3 + $0xb0] sm:$0xff] %v2668
    %2707 = vst [vmem:[#allocation3 + $0xb8] sm:$0xff] %v2670
    %2708 = vst [vmem:[#allocation3 + $0xc0] sm:$0xff] %v2561
    %2709 = vst [vmem:[#allocation3 + $0xc8] sm:$0xff] %v2563
    %2710 = vst [vmem:[#allocation3 + $0xd0] sm:$0xff] %v2674
    %2711 = vst [vmem:[#allocation3 + $0xd8] sm:$0xff] %v2676
    %2712 = vst [vmem:[#allocation3 + $0xe0] sm:$0xff] %v2567
    %2713 = vst [vmem:[#allocation3 + $0xe8] sm:$0xff] %v2569
    %2714 = vst [vmem:[#allocation3 + $0xf0] sm:$0xff] %v2680
    %2715 = vst [vmem:[#allocation3 + $0xf8] sm:$0xff] %v2682
    %v2716 = vld [vmem:[#allocation3] sm:$0xff]
    %v2717 = vld [vmem:[#allocation3 + $0x8] sm:$0xff]
    %v2718 = vld [vmem:[#allocation3 + $0x10] sm:$0xff]
    %v2719 = vld [vmem:[#allocation3 + $0x18] sm:$0xff]
    %v2720 = vld [vmem:[#allocation9] sm:$0xff]
    %v2721 = vld [vmem:[#allocation9 + $0x8] sm:$0xff]
    %v2722 = vld [vmem:[#allocation9 + $0x10] sm:$0xff]
    %v2723 = vld [vmem:[#allocation9 + $0x18] sm:$0xff]
    %v2724 = vld [vmem:[#allocation9 + $0x20] sm:$0xff]
    %v2725 = vld [vmem:[#allocation9 + $0x28] sm:$0xff]
    %v2726 = vld [vmem:[#allocation9 + $0x30] sm:$0xff]
    %v2727 = vld [vmem:[#allocation9 + $0x38] sm:$0xff]
    %v2728 = vld [vmem:[#allocation9 + $0x40] sm:$0xff]
    %v2729 = vld [vmem:[#allocation9 + $0x48] sm:$0xff]
    %v2730 = vld [vmem:[#allocation9 + $0x50] sm:$0xff]
    %v2731 = vld [vmem:[#allocation9 + $0x58] sm:$0xff]
    %v2732 = vld [vmem:[#allocation9 + $0x60] sm:$0xff]
    %v2733 = vld [vmem:[#allocation9 + $0x68] sm:$0xff]
    %v2734 = vld [vmem:[#allocation9 + $0x70] sm:$0xff]
    %v2735 = vld [vmem:[#allocation9 + $0x78] sm:$0xff]
    %v2736 = vld [vmem:[#allocation9 + $0x80] sm:$0xff]
    %v2737 = vld [vmem:[#allocation9 + $0x88] sm:$0xff]
    %v2738 = vld [vmem:[#allocation9 + $0x90] sm:$0xff]
    %v2739 = vld [vmem:[#allocation9 + $0x98] sm:$0xff]
    %v2740 = vld [vmem:[#allocation9 + $0xa0] sm:$0xff]
    %v2741 = vld [vmem:[#allocation9 + $0xa8] sm:$0xff]
    %v2742 = vld [vmem:[#allocation9 + $0xb0] sm:$0xff]
    %v2743 = vld [vmem:[#allocation9 + $0xb8] sm:$0xff]
    %v2744 = vld [vmem:[#allocation9 + $0xc0] sm:$0xff]
    %v2745 = vld [vmem:[#allocation9 + $0xc8] sm:$0xff]
    %v2746 = vld [vmem:[#allocation9 + $0xd0] sm:$0xff]
    %v2747 = vld [vmem:[#allocation9 + $0xd8] sm:$0xff]
    %v2748 = vld [vmem:[#allocation9 + $0xe0] sm:$0xff]
    %v2749 = vld [vmem:[#allocation9 + $0xe8] sm:$0xff]
    %v2750 = vld [vmem:[#allocation9 + $0xf0] sm:$0xff]
    %v2751 = vld [vmem:[#allocation9 + $0xf8] sm:$0xff]
    %v2752 = vld [vmem:[#allocation9 + $0x100] sm:$0xff]
    %v2753 = vld [vmem:[#allocation9 + $0x108] sm:$0xff]
    %v2754 = vld [vmem:[#allocation9 + $0x110] sm:$0xff]
    %v2755 = vld [vmem:[#allocation9 + $0x118] sm:$0xff]
    %v2756 = vld [vmem:[#allocation9 + $0x120] sm:$0xff]
    %v2757 = vld [vmem:[#allocation9 + $0x128] sm:$0xff]
    %v2758 = vld [vmem:[#allocation9 + $0x130] sm:$0xff]
    %v2759 = vld [vmem:[#allocation9 + $0x138] sm:$0xff]
    %v2760 = vld [vmem:[#allocation9 + $0x140] sm:$0xff]
    %v2761 = vld [vmem:[#allocation9 + $0x148] sm:$0xff]
    %v2762 = vld [vmem:[#allocation9 + $0x150] sm:$0xff]
    %v2763 = vld [vmem:[#allocation9 + $0x158] sm:$0xff]
    %v2764 = vld [vmem:[#allocation9 + $0x160] sm:$0xff]
    %v2765 = vld [vmem:[#allocation9 + $0x168] sm:$0xff]
    %v2766 = vld [vmem:[#allocation9 + $0x170] sm:$0xff]
    %v2767 = vld [vmem:[#allocation9 + $0x178] sm:$0xff]
    %v2768 = vld [vmem:[#allocation9 + $0x180] sm:$0xff]
    %v2769 = vld [vmem:[#allocation9 + $0x188] sm:$0xff]
    %v2770 = vld [vmem:[#allocation9 + $0x190] sm:$0xff]
    %v2771 = vld [vmem:[#allocation9 + $0x198] sm:$0xff]
    %v2772 = vld [vmem:[#allocation9 + $0x1a0] sm:$0xff]
    %v2773 = vld [vmem:[#allocation9 + $0x1a8] sm:$0xff]
    %v2774 = vld [vmem:[#allocation9 + $0x1b0] sm:$0xff]
    %v2775 = vld [vmem:[#allocation9 + $0x1b8] sm:$0xff]
    %v2776 = vld [vmem:[#allocation9 + $0x1c0] sm:$0xff]
    %v2777 = vld [vmem:[#allocation9 + $0x1c8] sm:$0xff]
    %v2778 = vld [vmem:[#allocation9 + $0x1d0] sm:$0xff]
    %v2779 = vld [vmem:[#allocation9 + $0x1d8] sm:$0xff]
    %v2780 = vld [vmem:[#allocation9 + $0x1e0] sm:$0xff]
    %v2781 = vld [vmem:[#allocation9 + $0x1e8] sm:$0xff]
    %v2782 = vld [vmem:[#allocation9 + $0x1f0] sm:$0xff]
    %v2783 = vld [vmem:[#allocation9 + $0x1f8] sm:$0xff]
    %2784 = vmatprep.subr.mxu0 %v2781
    %2785 = vmatpush1.msra.mxu0 %v2780
    %2786 = vmatprep.subr.mxu0 %v2777
    %2787 = vmatpush1.msra.mxu0 %v2776
    %2788 = vmatprep.subr.mxu0 %v2773
    %2789 = vmatpush1.msra.mxu0 %v2772
    %2790 = vmatprep.subr.mxu0 %v2769
    %2791 = vmatpush1.msra.mxu0 %v2768
    %2792 = vmatprep.subr.mxu0 %v2765
    %2793 = vmatpush1.msra.mxu0 %v2764
    %2794 = vmatprep.subr.mxu0 %v2761
    %2795 = vmatpush1.msra.mxu0 %v2760
    %2796 = vmatprep.subr.mxu0 %v2757
    %2797 = vmatpush1.msra.mxu0 %v2756
    %2798 = vmatprep.subr.mxu0 %v2753
    %2799 = vmatpush1.msra.mxu0 %v2752
    %2800 = vmatprep.subr.mxu0 %v2749
    %2801 = vmatpush1.msra.mxu0 %v2748
    %2802 = vmatprep.subr.mxu0 %v2745
    %2803 = vmatpush1.msra.mxu0 %v2744
    %2804 = vmatprep.subr.mxu0 %v2741
    %2805 = vmatpush1.msra.mxu0 %v2740
    %2806 = vmatprep.subr.mxu0 %v2737
    %2807 = vmatpush1.msra.mxu0 %v2736
    %2808 = vmatprep.subr.mxu0 %v2733
    %2809 = vmatpush1.msra.mxu0 %v2732
    %2810 = vmatprep.subr.mxu0 %v2729
    %2811 = vmatpush1.msra.mxu0 %v2728
    %2812 = vmatprep.subr.mxu0 %v2725
    %2813 = vmatpush1.msra.mxu0 %v2724
    %2814 = vmatprep.subr.mxu0 %v2721
    %2815 = vmatpush1.msra.mxu0 %v2720
    %2816 = vmatprep.subr.mxu0 0.0
    %2817 = vmatpush2.msra.mxu0 0.0
    %2818 = vmatprep.subr.mxu0 0.0
    %2819 = vmatpush2.msra.mxu0 0.0
    %2820 = vmatprep.subr.mxu0 0.0
    %2821 = vmatpush2.msra.mxu0 0.0
    %2822 = vmatprep.subr.mxu0 0.0
    %2823 = vmatpush2.msra.mxu0 0.0
    %2824 = vmatprep.subr.mxu0 0.0
    %2825 = vmatpush2.msra.mxu0 0.0
    %2826 = vmatprep.subr.mxu0 0.0
    %2827 = vmatpush2.msra.mxu0 0.0
    %2828 = vmatprep.subr.mxu0 0.0
    %2829 = vmatpush2.msra.mxu0 0.0
    %2830 = vmatprep.subr.mxu0 0.0
    %2831 = vmatpush2.msra.mxu0 0.0
    %2832 = vmatprep.subr.mxu0 0.0
    %2833 = vmatpush2.msra.mxu0 0.0
    %2834 = vmatprep.subr.mxu0 0.0
    %2835 = vmatpush2.msra.mxu0 0.0
    %2836 = vmatprep.subr.mxu0 0.0
    %2837 = vmatpush2.msra.mxu0 0.0
    %2838 = vmatprep.subr.mxu0 0.0
    %2839 = vmatpush2.msra.mxu0 0.0
    %2840 = vmatprep.subr.mxu0 0.0
    %2841 = vmatpush2.msra.mxu0 0.0
    %2842 = vmatprep.subr.mxu0 0.0
    %2843 = vmatpush2.msra.mxu0 0.0
    %2844 = vmatprep.subr.mxu0 0.0
    %2845 = vmatpush2.msra.mxu0 0.0
    %2846 = vmatprep.subr.mxu0 0.0
    %2847 = vmatpush2.msra.mxu0 0.0
    %2848 = vmatprep.mubr.f32.mxu0 0.0
    %2849 = vmatmul.mubr.f32.gmra.mxu0 0.0
    %v2850 = vpop.f32.mrf.mxu0
    %v2851 = vadd.f32 0.0, %v2850
    %v2852 = vpop.f32.mrf.mxu0
    %v2853 = vadd.f32 0.0, %v2852
    %2854 = vdwg.mxu0
    %2855 = vmatprep.subr.mxu0 %v2783
    %2856 = vmatpush1.msra.mxu0 %v2782
    %2857 = vmatprep.subr.mxu0 %v2779
    %2858 = vmatpush1.msra.mxu0 %v2778
    %2859 = vmatprep.subr.mxu0 %v2775
    %2860 = vmatpush1.msra.mxu0 %v2774
    %2861 = vmatprep.subr.mxu0 %v2771
    %2862 = vmatpush1.msra.mxu0 %v2770
    %2863 = vmatprep.subr.mxu0 %v2767
    %2864 = vmatpush1.msra.mxu0 %v2766
    %2865 = vmatprep.subr.mxu0 %v2763
    %2866 = vmatpush1.msra.mxu0 %v2762
    %2867 = vmatprep.subr.mxu0 %v2759
    %2868 = vmatpush1.msra.mxu0 %v2758
    %2869 = vmatprep.subr.mxu0 %v2755
    %2870 = vmatpush1.msra.mxu0 %v2754
    %2871 = vmatprep.subr.mxu0 %v2751
    %2872 = vmatpush1.msra.mxu0 %v2750
    %2873 = vmatprep.subr.mxu0 %v2747
    %2874 = vmatpush1.msra.mxu0 %v2746
    %2875 = vmatprep.subr.mxu0 %v2743
    %2876 = vmatpush1.msra.mxu0 %v2742
    %2877 = vmatprep.subr.mxu0 %v2739
    %2878 = vmatpush1.msra.mxu0 %v2738
    %2879 = vmatprep.subr.mxu0 %v2735
    %2880 = vmatpush1.msra.mxu0 %v2734
    %2881 = vmatprep.subr.mxu0 %v2731
    %2882 = vmatpush1.msra.mxu0 %v2730
    %2883 = vmatprep.subr.mxu0 %v2727
    %2884 = vmatpush1.msra.mxu0 %v2726
    %2885 = vmatprep.subr.mxu0 %v2723
    %2886 = vmatpush1.msra.mxu0 %v2722
    %2887 = vmatprep.subr.mxu0 0.0
    %2888 = vmatpush2.msra.mxu0 0.0
    %2889 = vmatprep.subr.mxu0 0.0
    %2890 = vmatpush2.msra.mxu0 0.0
    %2891 = vmatprep.subr.mxu0 0.0
    %2892 = vmatpush2.msra.mxu0 0.0
    %2893 = vmatprep.subr.mxu0 0.0
    %2894 = vmatpush2.msra.mxu0 0.0
    %2895 = vmatprep.subr.mxu0 0.0
    %2896 = vmatpush2.msra.mxu0 0.0
    %2897 = vmatprep.subr.mxu0 0.0
    %2898 = vmatpush2.msra.mxu0 0.0
    %2899 = vmatprep.subr.mxu0 0.0
    %2900 = vmatpush2.msra.mxu0 0.0
    %2901 = vmatprep.subr.mxu0 0.0
    %2902 = vmatpush2.msra.mxu0 0.0
    %2903 = vmatprep.subr.mxu0 0.0
    %2904 = vmatpush2.msra.mxu0 0.0
    %2905 = vmatprep.subr.mxu0 0.0
    %2906 = vmatpush2.msra.mxu0 0.0
    %2907 = vmatprep.subr.mxu0 0.0
    %2908 = vmatpush2.msra.mxu0 0.0
    %2909 = vmatprep.subr.mxu0 0.0
    %2910 = vmatpush2.msra.mxu0 0.0
    %2911 = vmatprep.subr.mxu0 0.0
    %2912 = vmatpush2.msra.mxu0 0.0
    %2913 = vmatprep.subr.mxu0 0.0
    %2914 = vmatpush2.msra.mxu0 0.0
    %2915 = vmatprep.subr.mxu0 0.0
    %2916 = vmatpush2.msra.mxu0 0.0
    %2917 = vmatprep.subr.mxu0 0.0
    %2918 = vmatpush2.msra.mxu0 0.0
    %2919 = vmatprep.mubr.f32.mxu0 0.0
    %2920 = vmatmul.mubr.f32.gmra.mxu0 0.0
    %v2921 = vpop.f32.mrf.mxu0
    %v2922 = vadd.f32 0.0, %v2921
    %v2923 = vpop.f32.mrf.mxu0
    %v2924 = vadd.f32 0.0, %v2923
    %2925 = vdwg.mxu0
    %v2926 = vadd.f32 %v2716, %v2851
    %v2927 = vadd.f32 %v2717, %v2853
    %v2928 = vadd.f32 %v2718, %v2922
    %v2929 = vadd.f32 %v2719, %v2924
    %v2930 = vxor.u32 %v2926, 2147483648
    %v2931 = vmul.f32 %v2930, 1.442695
    %v2932 = vpow.pop %v2931
    %v2933 = vadd.f32 %v2932, 1.0
    %v2934 = vrcp.pop %v2933
    %v2935 = vmul.f32 1.0, %v2934
    %v2936 = vxor.u32 %v2927, 2147483648
    %v2937 = vmul.f32 %v2936, 1.442695
    %v2938 = vpow.pop %v2937
    %v2939 = vadd.f32 %v2938, 1.0
    %v2940 = vrcp.pop %v2939
    %v2941 = vmul.f32 1.0, %v2940
    %v2942 = vtanh.pop %v2928
    %v2943 = vxor.u32 %v2929, 2147483648
    %v2944 = vmul.f32 %v2943, 1.442695
    %v2945 = vpow.pop %v2944
    %v2946 = vadd.f32 %v2945, 1.0
    %v2947 = vrcp.pop %v2946
    %v2948 = vmul.f32 1.0, %v2947
    %v2949 = vmul.f32 %v2941, 0.0
    %v2950 = vmul.f32 %v2935, %v2942
    %v2951 = vadd.f32 %v2949, %v2950
    %v2952 = vtanh.pop %v2951
    %v2953 = vmul.f32 %v2948, %v2952
    %v2954 = vld [vmem:[#allocation3 + $0x20] sm:$0xff]
    %v2955 = vld [vmem:[#allocation3 + $0x28] sm:$0xff]
    %v2956 = vld [vmem:[#allocation3 + $0x30] sm:$0xff]
    %v2957 = vld [vmem:[#allocation3 + $0x38] sm:$0xff]
    %2958 = vmatprep.subr.mxu0 %v2781
    %2959 = vmatpush1.msra.mxu0 %v2780
    %2960 = vmatprep.subr.mxu0 %v2777
    %2961 = vmatpush1.msra.mxu0 %v2776
    %2962 = vmatprep.subr.mxu0 %v2773
    %2963 = vmatpush1.msra.mxu0 %v2772
    %2964 = vmatprep.subr.mxu0 %v2769
    %2965 = vmatpush1.msra.mxu0 %v2768
    %2966 = vmatprep.subr.mxu0 %v2765
    %2967 = vmatpush1.msra.mxu0 %v2764
    %2968 = vmatprep.subr.mxu0 %v2761
    %2969 = vmatpush1.msra.mxu0 %v2760
    %2970 = vmatprep.subr.mxu0 %v2757
    %2971 = vmatpush1.msra.mxu0 %v2756
    %2972 = vmatprep.subr.mxu0 %v2753
    %2973 = vmatpush1.msra.mxu0 %v2752
    %2974 = vmatprep.subr.mxu0 %v2749
    %2975 = vmatpush1.msra.mxu0 %v2748
    %2976 = vmatprep.subr.mxu0 %v2745
    %2977 = vmatpush1.msra.mxu0 %v2744
    %2978 = vmatprep.subr.mxu0 %v2741
    %2979 = vmatpush1.msra.mxu0 %v2740
    %2980 = vmatprep.subr.mxu0 %v2737
    %2981 = vmatpush1.msra.mxu0 %v2736
    %2982 = vmatprep.subr.mxu0 %v2733
    %2983 = vmatpush1.msra.mxu0 %v2732
    %2984 = vmatprep.subr.mxu0 %v2729
    %2985 = vmatpush1.msra.mxu0 %v2728
    %2986 = vmatprep.subr.mxu0 %v2725
    %2987 = vmatpush1.msra.mxu0 %v2724
    %2988 = vmatprep.subr.mxu0 %v2721
    %2989 = vmatpush1.msra.mxu0 %v2720
    %2990 = vmatprep.subr.mxu0 0.0
    %2991 = vmatpush2.msra.mxu0 0.0
    %2992 = vmatprep.subr.mxu0 0.0
    %2993 = vmatpush2.msra.mxu0 0.0
    %2994 = vmatprep.subr.mxu0 0.0
    %2995 = vmatpush2.msra.mxu0 0.0
    %2996 = vmatprep.subr.mxu0 0.0
    %2997 = vmatpush2.msra.mxu0 0.0
    %2998 = vmatprep.subr.mxu0 0.0
    %2999 = vmatpush2.msra.mxu0 0.0
    %3000 = vmatprep.subr.mxu0 0.0
    %3001 = vmatpush2.msra.mxu0 0.0
    %3002 = vmatprep.subr.mxu0 0.0
    %3003 = vmatpush2.msra.mxu0 0.0
    %3004 = vmatprep.subr.mxu0 0.0
    %3005 = vmatpush2.msra.mxu0 0.0
    %3006 = vmatprep.subr.mxu0 0.0
    %3007 = vmatpush2.msra.mxu0 0.0
    %3008 = vmatprep.subr.mxu0 0.0
    %3009 = vmatpush2.msra.mxu0 0.0
    %3010 = vmatprep.subr.mxu0 0.0
    %3011 = vmatpush2.msra.mxu0 0.0
    %3012 = vmatprep.subr.mxu0 0.0
    %3013 = vmatpush2.msra.mxu0 0.0
    %3014 = vmatprep.subr.mxu0 0.0
    %3015 = vmatpush2.msra.mxu0 0.0
    %3016 = vmatprep.subr.mxu0 0.0
    %3017 = vmatpush2.msra.mxu0 0.0
    %3018 = vmatprep.subr.mxu0 0.0
    %3019 = vmatpush2.msra.mxu0 0.0
    %3020 = vmatprep.subr.mxu0 0.0
    %3021 = vmatpush2.msra.mxu0 0.0
    %3022 = vmatprep.mubr.f32.mxu0 0.0
    %3023 = vmatmul.mubr.f32.gmra.mxu0 %v2953
    %v3024 = vpop.f32.mrf.mxu0
    %v3025 = vadd.f32 0.0, %v3024
    %v3026 = vpop.f32.mrf.mxu0
    %v3027 = vadd.f32 0.0, %v3026
    %3028 = vdwg.mxu0
    %3029 = vmatprep.subr.mxu0 %v2783
    %3030 = vmatpush1.msra.mxu0 %v2782
    %3031 = vmatprep.subr.mxu0 %v2779
    %3032 = vmatpush1.msra.mxu0 %v2778
    %3033 = vmatprep.subr.mxu0 %v2775
    %3034 = vmatpush1.msra.mxu0 %v2774
    %3035 = vmatprep.subr.mxu0 %v2771
    %3036 = vmatpush1.msra.mxu0 %v2770
    %3037 = vmatprep.subr.mxu0 %v2767
    %3038 = vmatpush1.msra.mxu0 %v2766
    %3039 = vmatprep.subr.mxu0 %v2763
    %3040 = vmatpush1.msra.mxu0 %v2762
    %3041 = vmatprep.subr.mxu0 %v2759
    %3042 = vmatpush1.msra.mxu0 %v2758
    %3043 = vmatprep.subr.mxu0 %v2755
    %3044 = vmatpush1.msra.mxu0 %v2754
    %3045 = vmatprep.subr.mxu0 %v2751
    %3046 = vmatpush1.msra.mxu0 %v2750
    %3047 = vmatprep.subr.mxu0 %v2747
    %3048 = vmatpush1.msra.mxu0 %v2746
    %3049 = vmatprep.subr.mxu0 %v2743
    %3050 = vmatpush1.msra.mxu0 %v2742
    %3051 = vmatprep.subr.mxu0 %v2739
    %3052 = vmatpush1.msra.mxu0 %v2738
    %3053 = vmatprep.subr.mxu0 %v2735
    %3054 = vmatpush1.msra.mxu0 %v2734
    %3055 = vmatprep.subr.mxu0 %v2731
    %3056 = vmatpush1.msra.mxu0 %v2730
    %3057 = vmatprep.subr.mxu0 %v2727
    %3058 = vmatpush1.msra.mxu0 %v2726
    %3059 = vmatprep.subr.mxu0 %v2723
    %3060 = vmatpush1.msra.mxu0 %v2722
    %3061 = vmatprep.subr.mxu0 0.0
    %3062 = vmatpush2.msra.mxu0 0.0
    %3063 = vmatprep.subr.mxu0 0.0
    %3064 = vmatpush2.msra.mxu0 0.0
    %3065 = vmatprep.subr.mxu0 0.0
    %3066 = vmatpush2.msra.mxu0 0.0
    %3067 = vmatprep.subr.mxu0 0.0
    %3068 = vmatpush2.msra.mxu0 0.0
    %3069 = vmatprep.subr.mxu0 0.0
    %3070 = vmatpush2.msra.mxu0 0.0
    %3071 = vmatprep.subr.mxu0 0.0
    %3072 = vmatpush2.msra.mxu0 0.0
    %3073 = vmatprep.subr.mxu0 0.0
    %3074 = vmatpush2.msra.mxu0 0.0
    %3075 = vmatprep.subr.mxu0 0.0
    %3076 = vmatpush2.msra.mxu0 0.0
    %3077 = vmatprep.subr.mxu0 0.0
    %3078 = vmatpush2.msra.mxu0 0.0
    %3079 = vmatprep.subr.mxu0 0.0
    %3080 = vmatpush2.msra.mxu0 0.0
    %3081 = vmatprep.subr.mxu0 0.0
    %3082 = vmatpush2.msra.mxu0 0.0
    %3083 = vmatprep.subr.mxu0 0.0
    %3084 = vmatpush2.msra.mxu0 0.0
    %3085 = vmatprep.subr.mxu0 0.0
    %3086 = vmatpush2.msra.mxu0 0.0
    %3087 = vmatprep.subr.mxu0 0.0
    %3088 = vmatpush2.msra.mxu0 0.0
    %3089 = vmatprep.subr.mxu0 0.0
    %3090 = vmatpush2.msra.mxu0 0.0
    %3091 = vmatprep.subr.mxu0 0.0
    %3092 = vmatpush2.msra.mxu0 0.0
    %3093 = vmatprep.mubr.f32.mxu0 0.0
    %3094 = vmatmul.mubr.f32.gmra.mxu0 %v2953
    %v3095 = vpop.f32.mrf.mxu0
    %v3096 = vadd.f32 0.0, %v3095
    %v3097 = vpop.f32.mrf.mxu0
    %v3098 = vadd.f32 0.0, %v3097
    %3099 = vdwg.mxu0
    %v3100 = vadd.f32 %v2954, %v3025
    %v3101 = vadd.f32 %v2955, %v3027
    %v3102 = vadd.f32 %v2956, %v3096
    %v3103 = vadd.f32 %v2957, %v3098
    %v3104 = vxor.u32 %v3100, 2147483648
    %v3105 = vmul.f32 %v3104, 1.442695
    %v3106 = vpow.pop %v3105
    %v3107 = vadd.f32 %v3106, 1.0
    %v3108 = vrcp.pop %v3107
    %v3109 = vmul.f32 1.0, %v3108
    %v3110 = vxor.u32 %v3101, 2147483648
    %v3111 = vmul.f32 %v3110, 1.442695
    %v3112 = vpow.pop %v3111
    %v3113 = vadd.f32 %v3112, 1.0
    %v3114 = vrcp.pop %v3113
    %v3115 = vmul.f32 1.0, %v3114
    %v3116 = vtanh.pop %v3102
    %v3117 = vxor.u32 %v3103, 2147483648
    %v3118 = vmul.f32 %v3117, 1.442695
    %v3119 = vpow.pop %v3118
    %v3120 = vadd.f32 %v3119, 1.0
    %v3121 = vrcp.pop %v3120
    %v3122 = vmul.f32 1.0, %v3121
    %v3123 = vmul.f32 %v3115, %v2951
    %v3124 = vmul.f32 %v3109, %v3116
    %v3125 = vadd.f32 %v3123, %v3124
    %v3126 = vtanh.pop %v3125
    %v3127 = vmul.f32 %v3122, %v3126
    %v3128 = vld [vmem:[#allocation3 + $0x40] sm:$0xff]
    %v3129 = vld [vmem:[#allocation3 + $0x48] sm:$0xff]
    %v3130 = vld [vmem:[#allocation3 + $0x50] sm:$0xff]
    %v3131 = vld [vmem:[#allocation3 + $0x58] sm:$0xff]
    %3132 = vmatprep.subr.mxu0 %v2781
    %3133 = vmatpush1.msra.mxu0 %v2780
    %3134 = vmatprep.subr.mxu0 %v2777
    %3135 = vmatpush1.msra.mxu0 %v2776
    %3136 = vmatprep.subr.mxu0 %v2773
    %3137 = vmatpush1.msra.mxu0 %v2772
    %3138 = vmatprep.subr.mxu0 %v2769
    %3139 = vmatpush1.msra.mxu0 %v2768
    %3140 = vmatprep.subr.mxu0 %v2765
    %3141 = vmatpush1.msra.mxu0 %v2764
    %3142 = vmatprep.subr.mxu0 %v2761
    %3143 = vmatpush1.msra.mxu0 %v2760
    %3144 = vmatprep.subr.mxu0 %v2757
    %3145 = vmatpush1.msra.mxu0 %v2756
    %3146 = vmatprep.subr.mxu0 %v2753
    %3147 = vmatpush1.msra.mxu0 %v2752
    %3148 = vmatprep.subr.mxu0 %v2749
    %3149 = vmatpush1.msra.mxu0 %v2748
    %3150 = vmatprep.subr.mxu0 %v2745
    %3151 = vmatpush1.msra.mxu0 %v2744
    %3152 = vmatprep.subr.mxu0 %v2741
    %3153 = vmatpush1.msra.mxu0 %v2740
    %3154 = vmatprep.subr.mxu0 %v2737
    %3155 = vmatpush1.msra.mxu0 %v2736
    %3156 = vmatprep.subr.mxu0 %v2733
    %3157 = vmatpush1.msra.mxu0 %v2732
    %3158 = vmatprep.subr.mxu0 %v2729
    %3159 = vmatpush1.msra.mxu0 %v2728
    %3160 = vmatprep.subr.mxu0 %v2725
    %3161 = vmatpush1.msra.mxu0 %v2724
    %3162 = vmatprep.subr.mxu0 %v2721
    %3163 = vmatpush1.msra.mxu0 %v2720
    %3164 = vmatprep.subr.mxu0 0.0
    %3165 = vmatpush2.msra.mxu0 0.0
    %3166 = vmatprep.subr.mxu0 0.0
    %3167 = vmatpush2.msra.mxu0 0.0
    %3168 = vmatprep.subr.mxu0 0.0
    %3169 = vmatpush2.msra.mxu0 0.0
    %3170 = vmatprep.subr.mxu0 0.0
    %3171 = vmatpush2.msra.mxu0 0.0
    %3172 = vmatprep.subr.mxu0 0.0
    %3173 = vmatpush2.msra.mxu0 0.0
    %3174 = vmatprep.subr.mxu0 0.0
    %3175 = vmatpush2.msra.mxu0 0.0
    %3176 = vmatprep.subr.mxu0 0.0
    %3177 = vmatpush2.msra.mxu0 0.0
    %3178 = vmatprep.subr.mxu0 0.0
    %3179 = vmatpush2.msra.mxu0 0.0
    %3180 = vmatprep.subr.mxu0 0.0
    %3181 = vmatpush2.msra.mxu0 0.0
    %3182 = vmatprep.subr.mxu0 0.0
    %3183 = vmatpush2.msra.mxu0 0.0
    %3184 = vmatprep.subr.mxu0 0.0
    %3185 = vmatpush2.msra.mxu0 0.0
    %3186 = vmatprep.subr.mxu0 0.0
    %3187 = vmatpush2.msra.mxu0 0.0
    %3188 = vmatprep.subr.mxu0 0.0
    %3189 = vmatpush2.msra.mxu0 0.0
    %3190 = vmatprep.subr.mxu0 0.0
    %3191 = vmatpush2.msra.mxu0 0.0
    %3192 = vmatprep.subr.mxu0 0.0
    %3193 = vmatpush2.msra.mxu0 0.0
    %3194 = vmatprep.subr.mxu0 0.0
    %3195 = vmatpush2.msra.mxu0 0.0
    %3196 = vmatprep.mubr.f32.mxu0 0.0
    %3197 = vmatmul.mubr.f32.gmra.mxu0 %v3127
    %v3198 = vpop.f32.mrf.mxu0
    %v3199 = vadd.f32 0.0, %v3198
    %v3200 = vpop.f32.mrf.mxu0
    %v3201 = vadd.f32 0.0, %v3200
    %3202 = vdwg.mxu0
    %3203 = vmatprep.subr.mxu0 %v2783
    %3204 = vmatpush1.msra.mxu0 %v2782
    %3205 = vmatprep.subr.mxu0 %v2779
    %3206 = vmatpush1.msra.mxu0 %v2778
    %3207 = vmatprep.subr.mxu0 %v2775
    %3208 = vmatpush1.msra.mxu0 %v2774
    %3209 = vmatprep.subr.mxu0 %v2771
    %3210 = vmatpush1.msra.mxu0 %v2770
    %3211 = vmatprep.subr.mxu0 %v2767
    %3212 = vmatpush1.msra.mxu0 %v2766
    %3213 = vmatprep.subr.mxu0 %v2763
    %3214 = vmatpush1.msra.mxu0 %v2762
    %3215 = vmatprep.subr.mxu0 %v2759
    %3216 = vmatpush1.msra.mxu0 %v2758
    %3217 = vmatprep.subr.mxu0 %v2755
    %3218 = vmatpush1.msra.mxu0 %v2754
    %3219 = vmatprep.subr.mxu0 %v2751
    %3220 = vmatpush1.msra.mxu0 %v2750
    %3221 = vmatprep.subr.mxu0 %v2747
    %3222 = vmatpush1.msra.mxu0 %v2746
    %3223 = vmatprep.subr.mxu0 %v2743
    %3224 = vmatpush1.msra.mxu0 %v2742
    %3225 = vmatprep.subr.mxu0 %v2739
    %3226 = vmatpush1.msra.mxu0 %v2738
    %3227 = vmatprep.subr.mxu0 %v2735
    %3228 = vmatpush1.msra.mxu0 %v2734
    %3229 = vmatprep.subr.mxu0 %v2731
    %3230 = vmatpush1.msra.mxu0 %v2730
    %3231 = vmatprep.subr.mxu0 %v2727
    %3232 = vmatpush1.msra.mxu0 %v2726
    %3233 = vmatprep.subr.mxu0 %v2723
    %3234 = vmatpush1.msra.mxu0 %v2722
    %3235 = vmatprep.subr.mxu0 0.0
    %3236 = vmatpush2.msra.mxu0 0.0
    %3237 = vmatprep.subr.mxu0 0.0
    %3238 = vmatpush2.msra.mxu0 0.0
    %3239 = vmatprep.subr.mxu0 0.0
    %3240 = vmatpush2.msra.mxu0 0.0
    %3241 = vmatprep.subr.mxu0 0.0
    %3242 = vmatpush2.msra.mxu0 0.0
    %3243 = vmatprep.subr.mxu0 0.0
    %3244 = vmatpush2.msra.mxu0 0.0
    %3245 = vmatprep.subr.mxu0 0.0
    %3246 = vmatpush2.msra.mxu0 0.0
    %3247 = vmatprep.subr.mxu0 0.0
    %3248 = vmatpush2.msra.mxu0 0.0
    %3249 = vmatprep.subr.mxu0 0.0
    %3250 = vmatpush2.msra.mxu0 0.0
    %3251 = vmatprep.subr.mxu0 0.0
    %3252 = vmatpush2.msra.mxu0 0.0
    %3253 = vmatprep.subr.mxu0 0.0
    %3254 = vmatpush2.msra.mxu0 0.0
    %3255 = vmatprep.subr.mxu0 0.0
    %3256 = vmatpush2.msra.mxu0 0.0
    %3257 = vmatprep.subr.mxu0 0.0
    %3258 = vmatpush2.msra.mxu0 0.0
    %3259 = vmatprep.subr.mxu0 0.0
    %3260 = vmatpush2.msra.mxu0 0.0
    %3261 = vmatprep.subr.mxu0 0.0
    %3262 = vmatpush2.msra.mxu0 0.0
    %3263 = vmatprep.subr.mxu0 0.0
    %3264 = vmatpush2.msra.mxu0 0.0
    %3265 = vmatprep.subr.mxu0 0.0
    %3266 = vmatpush2.msra.mxu0 0.0
    %3267 = vmatprep.mubr.f32.mxu0 0.0
    %3268 = vmatmul.mubr.f32.gmra.mxu0 %v3127
    %v3269 = vpop.f32.mrf.mxu0
    %v3270 = vadd.f32 0.0, %v3269
    %v3271 = vpop.f32.mrf.mxu0
    %v3272 = vadd.f32 0.0, %v3271
    %3273 = vdwg.mxu0
    %v3274 = vadd.f32 %v3128, %v3199
    %v3275 = vadd.f32 %v3129, %v3201
    %v3276 = vadd.f32 %v3130, %v3270
    %v3277 = vadd.f32 %v3131, %v3272
    %v3278 = vxor.u32 %v3274, 2147483648
    %v3279 = vmul.f32 %v3278, 1.442695
    %v3280 = vpow.pop %v3279
    %v3281 = vadd.f32 %v3280, 1.0
    %v3282 = vrcp.pop %v3281
    %v3283 = vmul.f32 1.0, %v3282
    %v3284 = vxor.u32 %v3275, 2147483648
    %v3285 = vmul.f32 %v3284, 1.442695
    %v3286 = vpow.pop %v3285
    %v3287 = vadd.f32 %v3286, 1.0
    %v3288 = vrcp.pop %v3287
    %v3289 = vmul.f32 1.0, %v3288
    %v3290 = vtanh.pop %v3276
    %v3291 = vxor.u32 %v3277, 2147483648
    %v3292 = vmul.f32 %v3291, 1.442695
    %v3293 = vpow.pop %v3292
    %v3294 = vadd.f32 %v3293, 1.0
    %v3295 = vrcp.pop %v3294
    %v3296 = vmul.f32 1.0, %v3295
    %v3297 = vmul.f32 %v3289, %v3125
    %v3298 = vmul.f32 %v3283, %v3290
    %v3299 = vadd.f32 %v3297, %v3298
    %v3300 = vtanh.pop %v3299
    %v3301 = vmul.f32 %v3296, %v3300
    %v3302 = vld [vmem:[#allocation3 + $0x60] sm:$0xff]
    %v3303 = vld [vmem:[#allocation3 + $0x68] sm:$0xff]
    %v3304 = vld [vmem:[#allocation3 + $0x70] sm:$0xff]
    %v3305 = vld [vmem:[#allocation3 + $0x78] sm:$0xff]
    %3306 = vmatprep.subr.mxu0 %v2781
    %3307 = vmatpush1.msra.mxu0 %v2780
    %3308 = vmatprep.subr.mxu0 %v2777
    %3309 = vmatpush1.msra.mxu0 %v2776
    %3310 = vmatprep.subr.mxu0 %v2773
    %3311 = vmatpush1.msra.mxu0 %v2772
    %3312 = vmatprep.subr.mxu0 %v2769
    %3313 = vmatpush1.msra.mxu0 %v2768
    %3314 = vmatprep.subr.mxu0 %v2765
    %3315 = vmatpush1.msra.mxu0 %v2764
    %3316 = vmatprep.subr.mxu0 %v2761
    %3317 = vmatpush1.msra.mxu0 %v2760
    %3318 = vmatprep.subr.mxu0 %v2757
    %3319 = vmatpush1.msra.mxu0 %v2756
    %3320 = vmatprep.subr.mxu0 %v2753
    %3321 = vmatpush1.msra.mxu0 %v2752
    %3322 = vmatprep.subr.mxu0 %v2749
    %3323 = vmatpush1.msra.mxu0 %v2748
    %3324 = vmatprep.subr.mxu0 %v2745
    %3325 = vmatpush1.msra.mxu0 %v2744
    %3326 = vmatprep.subr.mxu0 %v2741
    %3327 = vmatpush1.msra.mxu0 %v2740
    %3328 = vmatprep.subr.mxu0 %v2737
    %3329 = vmatpush1.msra.mxu0 %v2736
    %3330 = vmatprep.subr.mxu0 %v2733
    %3331 = vmatpush1.msra.mxu0 %v2732
    %3332 = vmatprep.subr.mxu0 %v2729
    %3333 = vmatpush1.msra.mxu0 %v2728
    %3334 = vmatprep.subr.mxu0 %v2725
    %3335 = vmatpush1.msra.mxu0 %v2724
    %3336 = vmatprep.subr.mxu0 %v2721
    %3337 = vmatpush1.msra.mxu0 %v2720
    %3338 = vmatprep.subr.mxu0 0.0
    %3339 = vmatpush2.msra.mxu0 0.0
    %3340 = vmatprep.subr.mxu0 0.0
    %3341 = vmatpush2.msra.mxu0 0.0
    %3342 = vmatprep.subr.mxu0 0.0
    %3343 = vmatpush2.msra.mxu0 0.0
    %3344 = vmatprep.subr.mxu0 0.0
    %3345 = vmatpush2.msra.mxu0 0.0
    %3346 = vmatprep.subr.mxu0 0.0
    %3347 = vmatpush2.msra.mxu0 0.0
    %3348 = vmatprep.subr.mxu0 0.0
    %3349 = vmatpush2.msra.mxu0 0.0
    %3350 = vmatprep.subr.mxu0 0.0
    %3351 = vmatpush2.msra.mxu0 0.0
    %3352 = vmatprep.subr.mxu0 0.0
    %3353 = vmatpush2.msra.mxu0 0.0
    %3354 = vmatprep.subr.mxu0 0.0
    %3355 = vmatpush2.msra.mxu0 0.0
    %3356 = vmatprep.subr.mxu0 0.0
    %3357 = vmatpush2.msra.mxu0 0.0
    %3358 = vmatprep.subr.mxu0 0.0
    %3359 = vmatpush2.msra.mxu0 0.0
    %3360 = vmatprep.subr.mxu0 0.0
    %3361 = vmatpush2.msra.mxu0 0.0
    %3362 = vmatprep.subr.mxu0 0.0
    %3363 = vmatpush2.msra.mxu0 0.0
    %3364 = vmatprep.subr.mxu0 0.0
    %3365 = vmatpush2.msra.mxu0 0.0
    %3366 = vmatprep.subr.mxu0 0.0
    %3367 = vmatpush2.msra.mxu0 0.0
    %3368 = vmatprep.subr.mxu0 0.0
    %3369 = vmatpush2.msra.mxu0 0.0
    %3370 = vmatprep.mubr.f32.mxu0 0.0
    %3371 = vmatmul.mubr.f32.gmra.mxu0 %v3301
    %v3372 = vpop.f32.mrf.mxu0
    %v3373 = vadd.f32 0.0, %v3372
    %v3374 = vpop.f32.mrf.mxu0
    %v3375 = vadd.f32 0.0, %v3374
    %3376 = vdwg.mxu0
    %3377 = vmatprep.subr.mxu0 %v2783
    %3378 = vmatpush1.msra.mxu0 %v2782
    %3379 = vmatprep.subr.mxu0 %v2779
    %3380 = vmatpush1.msra.mxu0 %v2778
    %3381 = vmatprep.subr.mxu0 %v2775
    %3382 = vmatpush1.msra.mxu0 %v2774
    %3383 = vmatprep.subr.mxu0 %v2771
    %3384 = vmatpush1.msra.mxu0 %v2770
    %3385 = vmatprep.subr.mxu0 %v2767
    %3386 = vmatpush1.msra.mxu0 %v2766
    %3387 = vmatprep.subr.mxu0 %v2763
    %3388 = vmatpush1.msra.mxu0 %v2762
    %3389 = vmatprep.subr.mxu0 %v2759
    %3390 = vmatpush1.msra.mxu0 %v2758
    %3391 = vmatprep.subr.mxu0 %v2755
    %3392 = vmatpush1.msra.mxu0 %v2754
    %3393 = vmatprep.subr.mxu0 %v2751
    %3394 = vmatpush1.msra.mxu0 %v2750
    %3395 = vmatprep.subr.mxu0 %v2747
    %3396 = vmatpush1.msra.mxu0 %v2746
    %3397 = vmatprep.subr.mxu0 %v2743
    %3398 = vmatpush1.msra.mxu0 %v2742
    %3399 = vmatprep.subr.mxu0 %v2739
    %3400 = vmatpush1.msra.mxu0 %v2738
    %3401 = vmatprep.subr.mxu0 %v2735
    %3402 = vmatpush1.msra.mxu0 %v2734
    %3403 = vmatprep.subr.mxu0 %v2731
    %3404 = vmatpush1.msra.mxu0 %v2730
    %3405 = vmatprep.subr.mxu0 %v2727
    %3406 = vmatpush1.msra.mxu0 %v2726
    %3407 = vmatprep.subr.mxu0 %v2723
    %3408 = vmatpush1.msra.mxu0 %v2722
    %3409 = vmatprep.subr.mxu0 0.0
    %3410 = vmatpush2.msra.mxu0 0.0
    %3411 = vmatprep.subr.mxu0 0.0
    %3412 = vmatpush2.msra.mxu0 0.0
    %3413 = vmatprep.subr.mxu0 0.0
    %3414 = vmatpush2.msra.mxu0 0.0
    %3415 = vmatprep.subr.mxu0 0.0
    %3416 = vmatpush2.msra.mxu0 0.0
    %3417 = vmatprep.subr.mxu0 0.0
    %3418 = vmatpush2.msra.mxu0 0.0
    %3419 = vmatprep.subr.mxu0 0.0
    %3420 = vmatpush2.msra.mxu0 0.0
    %3421 = vmatprep.subr.mxu0 0.0
    %3422 = vmatpush2.msra.mxu0 0.0
    %3423 = vmatprep.subr.mxu0 0.0
    %3424 = vmatpush2.msra.mxu0 0.0
    %3425 = vmatprep.subr.mxu0 0.0
    %3426 = vmatpush2.msra.mxu0 0.0
    %3427 = vmatprep.subr.mxu0 0.0
    %3428 = vmatpush2.msra.mxu0 0.0
    %3429 = vmatprep.subr.mxu0 0.0
    %3430 = vmatpush2.msra.mxu0 0.0
    %3431 = vmatprep.subr.mxu0 0.0
    %3432 = vmatpush2.msra.mxu0 0.0
    %3433 = vmatprep.subr.mxu0 0.0
    %3434 = vmatpush2.msra.mxu0 0.0
    %3435 = vmatprep.subr.mxu0 0.0
    %3436 = vmatpush2.msra.mxu0 0.0
    %3437 = vmatprep.subr.mxu0 0.0
    %3438 = vmatpush2.msra.mxu0 0.0
    %3439 = vmatprep.subr.mxu0 0.0
    %3440 = vmatpush2.msra.mxu0 0.0
    %3441 = vmatprep.mubr.f32.mxu0 0.0
    %3442 = vmatmul.mubr.f32.gmra.mxu0 %v3301
    %v3443 = vpop.f32.mrf.mxu0
    %v3444 = vadd.f32 0.0, %v3443
    %v3445 = vpop.f32.mrf.mxu0
    %v3446 = vadd.f32 0.0, %v3445
    %3447 = vdwg.mxu0
    %v3448 = vadd.f32 %v3302, %v3373
    %v3449 = vadd.f32 %v3303, %v3375
    %v3450 = vadd.f32 %v3304, %v3444
    %v3451 = vadd.f32 %v3305, %v3446
    %v3452 = vxor.u32 %v3448, 2147483648
    %v3453 = vmul.f32 %v3452, 1.442695
    %v3454 = vpow.pop %v3453
    %v3455 = vadd.f32 %v3454, 1.0
    %v3456 = vrcp.pop %v3455
    %v3457 = vmul.f32 1.0, %v3456
    %v3458 = vxor.u32 %v3449, 2147483648
    %v3459 = vmul.f32 %v3458, 1.442695
    %v3460 = vpow.pop %v3459
    %v3461 = vadd.f32 %v3460, 1.0
    %v3462 = vrcp.pop %v3461
    %v3463 = vmul.f32 1.0, %v3462
    %v3464 = vtanh.pop %v3450
    %v3465 = vxor.u32 %v3451, 2147483648
    %v3466 = vmul.f32 %v3465, 1.442695
    %v3467 = vpow.pop %v3466
    %v3468 = vadd.f32 %v3467, 1.0
    %v3469 = vrcp.pop %v3468
    %v3470 = vmul.f32 1.0, %v3469
    %v3471 = vmul.f32 %v3463, %v3299
    %v3472 = vmul.f32 %v3457, %v3464
    %v3473 = vadd.f32 %v3471, %v3472
    %v3474 = vtanh.pop %v3473
    %v3475 = vmul.f32 %v3470, %v3474
    %v3476 = vld [vmem:[#allocation3 + $0x80] sm:$0xff]
    %v3477 = vld [vmem:[#allocation3 + $0x88] sm:$0xff]
    %v3478 = vld [vmem:[#allocation3 + $0x90] sm:$0xff]
    %v3479 = vld [vmem:[#allocation3 + $0x98] sm:$0xff]
    %3480 = vmatprep.subr.mxu0 %v2781
    %3481 = vmatpush1.msra.mxu0 %v2780
    %3482 = vmatprep.subr.mxu0 %v2777
    %3483 = vmatpush1.msra.mxu0 %v2776
    %3484 = vmatprep.subr.mxu0 %v2773
    %3485 = vmatpush1.msra.mxu0 %v2772
    %3486 = vmatprep.subr.mxu0 %v2769
    %3487 = vmatpush1.msra.mxu0 %v2768
    %3488 = vmatprep.subr.mxu0 %v2765
    %3489 = vmatpush1.msra.mxu0 %v2764
    %3490 = vmatprep.subr.mxu0 %v2761
    %3491 = vmatpush1.msra.mxu0 %v2760
    %3492 = vmatprep.subr.mxu0 %v2757
    %3493 = vmatpush1.msra.mxu0 %v2756
    %3494 = vmatprep.subr.mxu0 %v2753
    %3495 = vmatpush1.msra.mxu0 %v2752
    %3496 = vmatprep.subr.mxu0 %v2749
    %3497 = vmatpush1.msra.mxu0 %v2748
    %3498 = vmatprep.subr.mxu0 %v2745
    %3499 = vmatpush1.msra.mxu0 %v2744
    %3500 = vmatprep.subr.mxu0 %v2741
    %3501 = vmatpush1.msra.mxu0 %v2740
    %3502 = vmatprep.subr.mxu0 %v2737
    %3503 = vmatpush1.msra.mxu0 %v2736
    %3504 = vmatprep.subr.mxu0 %v2733
    %3505 = vmatpush1.msra.mxu0 %v2732
    %3506 = vmatprep.subr.mxu0 %v2729
    %3507 = vmatpush1.msra.mxu0 %v2728
    %3508 = vmatprep.subr.mxu0 %v2725
    %3509 = vmatpush1.msra.mxu0 %v2724
    %3510 = vmatprep.subr.mxu0 %v2721
    %3511 = vmatpush1.msra.mxu0 %v2720
    %3512 = vmatprep.subr.mxu0 0.0
    %3513 = vmatpush2.msra.mxu0 0.0
    %3514 = vmatprep.subr.mxu0 0.0
    %3515 = vmatpush2.msra.mxu0 0.0
    %3516 = vmatprep.subr.mxu0 0.0
    %3517 = vmatpush2.msra.mxu0 0.0
    %3518 = vmatprep.subr.mxu0 0.0
    %3519 = vmatpush2.msra.mxu0 0.0
    %3520 = vmatprep.subr.mxu0 0.0
    %3521 = vmatpush2.msra.mxu0 0.0
    %3522 = vmatprep.subr.mxu0 0.0
    %3523 = vmatpush2.msra.mxu0 0.0
    %3524 = vmatprep.subr.mxu0 0.0
    %3525 = vmatpush2.msra.mxu0 0.0
    %3526 = vmatprep.subr.mxu0 0.0
    %3527 = vmatpush2.msra.mxu0 0.0
    %3528 = vmatprep.subr.mxu0 0.0
    %3529 = vmatpush2.msra.mxu0 0.0
    %3530 = vmatprep.subr.mxu0 0.0
    %3531 = vmatpush2.msra.mxu0 0.0
    %3532 = vmatprep.subr.mxu0 0.0
    %3533 = vmatpush2.msra.mxu0 0.0
    %3534 = vmatprep.subr.mxu0 0.0
    %3535 = vmatpush2.msra.mxu0 0.0
    %3536 = vmatprep.subr.mxu0 0.0
    %3537 = vmatpush2.msra.mxu0 0.0
    %3538 = vmatprep.subr.mxu0 0.0
    %3539 = vmatpush2.msra.mxu0 0.0
    %3540 = vmatprep.subr.mxu0 0.0
    %3541 = vmatpush2.msra.mxu0 0.0
    %3542 = vmatprep.subr.mxu0 0.0
    %3543 = vmatpush2.msra.mxu0 0.0
    %3544 = vmatprep.mubr.f32.mxu0 0.0
    %3545 = vmatmul.mubr.f32.gmra.mxu0 %v3475
    %v3546 = vpop.f32.mrf.mxu0
    %v3547 = vadd.f32 0.0, %v3546
    %v3548 = vpop.f32.mrf.mxu0
    %v3549 = vadd.f32 0.0, %v3548
    %3550 = vdwg.mxu0
    %3551 = vmatprep.subr.mxu0 %v2783
    %3552 = vmatpush1.msra.mxu0 %v2782
    %3553 = vmatprep.subr.mxu0 %v2779
    %3554 = vmatpush1.msra.mxu0 %v2778
    %3555 = vmatprep.subr.mxu0 %v2775
    %3556 = vmatpush1.msra.mxu0 %v2774
    %3557 = vmatprep.subr.mxu0 %v2771
    %3558 = vmatpush1.msra.mxu0 %v2770
    %3559 = vmatprep.subr.mxu0 %v2767
    %3560 = vmatpush1.msra.mxu0 %v2766
    %3561 = vmatprep.subr.mxu0 %v2763
    %3562 = vmatpush1.msra.mxu0 %v2762
    %3563 = vmatprep.subr.mxu0 %v2759
    %3564 = vmatpush1.msra.mxu0 %v2758
    %3565 = vmatprep.subr.mxu0 %v2755
    %3566 = vmatpush1.msra.mxu0 %v2754
    %3567 = vmatprep.subr.mxu0 %v2751
    %3568 = vmatpush1.msra.mxu0 %v2750
    %3569 = vmatprep.subr.mxu0 %v2747
    %3570 = vmatpush1.msra.mxu0 %v2746
    %3571 = vmatprep.subr.mxu0 %v2743
    %3572 = vmatpush1.msra.mxu0 %v2742
    %3573 = vmatprep.subr.mxu0 %v2739
    %3574 = vmatpush1.msra.mxu0 %v2738
    %3575 = vmatprep.subr.mxu0 %v2735
    %3576 = vmatpush1.msra.mxu0 %v2734
    %3577 = vmatprep.subr.mxu0 %v2731
    %3578 = vmatpush1.msra.mxu0 %v2730
    %3579 = vmatprep.subr.mxu0 %v2727
    %3580 = vmatpush1.msra.mxu0 %v2726
    %3581 = vmatprep.subr.mxu0 %v2723
    %3582 = vmatpush1.msra.mxu0 %v2722
    %3583 = vmatprep.subr.mxu0 0.0
    %3584 = vmatpush2.msra.mxu0 0.0
    %3585 = vmatprep.subr.mxu0 0.0
    %3586 = vmatpush2.msra.mxu0 0.0
    %3587 = vmatprep.subr.mxu0 0.0
    %3588 = vmatpush2.msra.mxu0 0.0
    %3589 = vmatprep.subr.mxu0 0.0
    %3590 = vmatpush2.msra.mxu0 0.0
    %3591 = vmatprep.subr.mxu0 0.0
    %3592 = vmatpush2.msra.mxu0 0.0
    %3593 = vmatprep.subr.mxu0 0.0
    %3594 = vmatpush2.msra.mxu0 0.0
    %3595 = vmatprep.subr.mxu0 0.0
    %3596 = vmatpush2.msra.mxu0 0.0
    %3597 = vmatprep.subr.mxu0 0.0
    %3598 = vmatpush2.msra.mxu0 0.0
    %3599 = vmatprep.subr.mxu0 0.0
    %3600 = vmatpush2.msra.mxu0 0.0
    %3601 = vmatprep.subr.mxu0 0.0
    %3602 = vmatpush2.msra.mxu0 0.0
    %3603 = vmatprep.subr.mxu0 0.0
    %3604 = vmatpush2.msra.mxu0 0.0
    %3605 = vmatprep.subr.mxu0 0.0
    %3606 = vmatpush2.msra.mxu0 0.0
    %3607 = vmatprep.subr.mxu0 0.0
    %3608 = vmatpush2.msra.mxu0 0.0
    %3609 = vmatprep.subr.mxu0 0.0
    %3610 = vmatpush2.msra.mxu0 0.0
    %3611 = vmatprep.subr.mxu0 0.0
    %3612 = vmatpush2.msra.mxu0 0.0
    %3613 = vmatprep.subr.mxu0 0.0
    %3614 = vmatpush2.msra.mxu0 0.0
    %3615 = vmatprep.mubr.f32.mxu0 0.0
    %3616 = vmatmul.mubr.f32.gmra.mxu0 %v3475
    %v3617 = vpop.f32.mrf.mxu0
    %v3618 = vadd.f32 0.0, %v3617
    %v3619 = vpop.f32.mrf.mxu0
    %v3620 = vadd.f32 0.0, %v3619
    %3621 = vdwg.mxu0
    %v3622 = vadd.f32 %v3476, %v3547
    %v3623 = vadd.f32 %v3477, %v3549
    %v3624 = vadd.f32 %v3478, %v3618
    %v3625 = vadd.f32 %v3479, %v3620
    %v3626 = vxor.u32 %v3622, 2147483648
    %v3627 = vmul.f32 %v3626, 1.442695
    %v3628 = vpow.pop %v3627
    %v3629 = vadd.f32 %v3628, 1.0
    %v3630 = vrcp.pop %v3629
    %v3631 = vmul.f32 1.0, %v3630
    %v3632 = vxor.u32 %v3623, 2147483648
    %v3633 = vmul.f32 %v3632, 1.442695
    %v3634 = vpow.pop %v3633
    %v3635 = vadd.f32 %v3634, 1.0
    %v3636 = vrcp.pop %v3635
    %v3637 = vmul.f32 1.0, %v3636
    %v3638 = vtanh.pop %v3624
    %v3639 = vxor.u32 %v3625, 2147483648
    %v3640 = vmul.f32 %v3639, 1.442695
    %v3641 = vpow.pop %v3640
    %v3642 = vadd.f32 %v3641, 1.0
    %v3643 = vrcp.pop %v3642
    %v3644 = vmul.f32 1.0, %v3643
    %v3645 = vmul.f32 %v3637, %v3473
    %v3646 = vmul.f32 %v3631, %v3638
    %v3647 = vadd.f32 %v3645, %v3646
    %v3648 = vtanh.pop %v3647
    %v3649 = vmul.f32 %v3644, %v3648
    %v3650 = vld [vmem:[#allocation3 + $0xa0] sm:$0xff]
    %v3651 = vld [vmem:[#allocation3 + $0xa8] sm:$0xff]
    %v3652 = vld [vmem:[#allocation3 + $0xb0] sm:$0xff]
    %v3653 = vld [vmem:[#allocation3 + $0xb8] sm:$0xff]
    %3654 = vmatprep.subr.mxu0 %v2781
    %3655 = vmatpush1.msra.mxu0 %v2780
    %3656 = vmatprep.subr.mxu0 %v2777
    %3657 = vmatpush1.msra.mxu0 %v2776
    %3658 = vmatprep.subr.mxu0 %v2773
    %3659 = vmatpush1.msra.mxu0 %v2772
    %3660 = vmatprep.subr.mxu0 %v2769
    %3661 = vmatpush1.msra.mxu0 %v2768
    %3662 = vmatprep.subr.mxu0 %v2765
    %3663 = vmatpush1.msra.mxu0 %v2764
    %3664 = vmatprep.subr.mxu0 %v2761
    %3665 = vmatpush1.msra.mxu0 %v2760
    %3666 = vmatprep.subr.mxu0 %v2757
    %3667 = vmatpush1.msra.mxu0 %v2756
    %3668 = vmatprep.subr.mxu0 %v2753
    %3669 = vmatpush1.msra.mxu0 %v2752
    %3670 = vmatprep.subr.mxu0 %v2749
    %3671 = vmatpush1.msra.mxu0 %v2748
    %3672 = vmatprep.subr.mxu0 %v2745
    %3673 = vmatpush1.msra.mxu0 %v2744
    %3674 = vmatprep.subr.mxu0 %v2741
    %3675 = vmatpush1.msra.mxu0 %v2740
    %3676 = vmatprep.subr.mxu0 %v2737
    %3677 = vmatpush1.msra.mxu0 %v2736
    %3678 = vmatprep.subr.mxu0 %v2733
    %3679 = vmatpush1.msra.mxu0 %v2732
    %3680 = vmatprep.subr.mxu0 %v2729
    %3681 = vmatpush1.msra.mxu0 %v2728
    %3682 = vmatprep.subr.mxu0 %v2725
    %3683 = vmatpush1.msra.mxu0 %v2724
    %3684 = vmatprep.subr.mxu0 %v2721
    %3685 = vmatpush1.msra.mxu0 %v2720
    %3686 = vmatprep.subr.mxu0 0.0
    %3687 = vmatpush2.msra.mxu0 0.0
    %3688 = vmatprep.subr.mxu0 0.0
    %3689 = vmatpush2.msra.mxu0 0.0
    %3690 = vmatprep.subr.mxu0 0.0
    %3691 = vmatpush2.msra.mxu0 0.0
    %3692 = vmatprep.subr.mxu0 0.0
    %3693 = vmatpush2.msra.mxu0 0.0
    %3694 = vmatprep.subr.mxu0 0.0
    %3695 = vmatpush2.msra.mxu0 0.0
    %3696 = vmatprep.subr.mxu0 0.0
    %3697 = vmatpush2.msra.mxu0 0.0
    %3698 = vmatprep.subr.mxu0 0.0
    %3699 = vmatpush2.msra.mxu0 0.0
    %3700 = vmatprep.subr.mxu0 0.0
    %3701 = vmatpush2.msra.mxu0 0.0
    %3702 = vmatprep.subr.mxu0 0.0
    %3703 = vmatpush2.msra.mxu0 0.0
    %3704 = vmatprep.subr.mxu0 0.0
    %3705 = vmatpush2.msra.mxu0 0.0
    %3706 = vmatprep.subr.mxu0 0.0
    %3707 = vmatpush2.msra.mxu0 0.0
    %3708 = vmatprep.subr.mxu0 0.0
    %3709 = vmatpush2.msra.mxu0 0.0
    %3710 = vmatprep.subr.mxu0 0.0
    %3711 = vmatpush2.msra.mxu0 0.0
    %3712 = vmatprep.subr.mxu0 0.0
    %3713 = vmatpush2.msra.mxu0 0.0
    %3714 = vmatprep.subr.mxu0 0.0
    %3715 = vmatpush2.msra.mxu0 0.0
    %3716 = vmatprep.subr.mxu0 0.0
    %3717 = vmatpush2.msra.mxu0 0.0
    %3718 = vmatprep.mubr.f32.mxu0 0.0
    %3719 = vmatmul.mubr.f32.gmra.mxu0 %v3649
    %v3720 = vpop.f32.mrf.mxu0
    %v3721 = vadd.f32 0.0, %v3720
    %v3722 = vpop.f32.mrf.mxu0
    %v3723 = vadd.f32 0.0, %v3722
    %3724 = vdwg.mxu0
    %3725 = vmatprep.subr.mxu0 %v2783
    %3726 = vmatpush1.msra.mxu0 %v2782
    %3727 = vmatprep.subr.mxu0 %v2779
    %3728 = vmatpush1.msra.mxu0 %v2778
    %3729 = vmatprep.subr.mxu0 %v2775
    %3730 = vmatpush1.msra.mxu0 %v2774
    %3731 = vmatprep.subr.mxu0 %v2771
    %3732 = vmatpush1.msra.mxu0 %v2770
    %3733 = vmatprep.subr.mxu0 %v2767
    %3734 = vmatpush1.msra.mxu0 %v2766
    %3735 = vmatprep.subr.mxu0 %v2763
    %3736 = vmatpush1.msra.mxu0 %v2762
    %3737 = vmatprep.subr.mxu0 %v2759
    %3738 = vmatpush1.msra.mxu0 %v2758
    %3739 = vmatprep.subr.mxu0 %v2755
    %3740 = vmatpush1.msra.mxu0 %v2754
    %3741 = vmatprep.subr.mxu0 %v2751
    %3742 = vmatpush1.msra.mxu0 %v2750
    %3743 = vmatprep.subr.mxu0 %v2747
    %3744 = vmatpush1.msra.mxu0 %v2746
    %3745 = vmatprep.subr.mxu0 %v2743
    %3746 = vmatpush1.msra.mxu0 %v2742
    %3747 = vmatprep.subr.mxu0 %v2739
    %3748 = vmatpush1.msra.mxu0 %v2738
    %3749 = vmatprep.subr.mxu0 %v2735
    %3750 = vmatpush1.msra.mxu0 %v2734
    %3751 = vmatprep.subr.mxu0 %v2731
    %3752 = vmatpush1.msra.mxu0 %v2730
    %3753 = vmatprep.subr.mxu0 %v2727
    %3754 = vmatpush1.msra.mxu0 %v2726
    %3755 = vmatprep.subr.mxu0 %v2723
    %3756 = vmatpush1.msra.mxu0 %v2722
    %3757 = vmatprep.subr.mxu0 0.0
    %3758 = vmatpush2.msra.mxu0 0.0
    %3759 = vmatprep.subr.mxu0 0.0
    %3760 = vmatpush2.msra.mxu0 0.0
    %3761 = vmatprep.subr.mxu0 0.0
    %3762 = vmatpush2.msra.mxu0 0.0
    %3763 = vmatprep.subr.mxu0 0.0
    %3764 = vmatpush2.msra.mxu0 0.0
    %3765 = vmatprep.subr.mxu0 0.0
    %3766 = vmatpush2.msra.mxu0 0.0
    %3767 = vmatprep.subr.mxu0 0.0
    %3768 = vmatpush2.msra.mxu0 0.0
    %3769 = vmatprep.subr.mxu0 0.0
    %3770 = vmatpush2.msra.mxu0 0.0
    %3771 = vmatprep.subr.mxu0 0.0
    %3772 = vmatpush2.msra.mxu0 0.0
    %3773 = vmatprep.subr.mxu0 0.0
    %3774 = vmatpush2.msra.mxu0 0.0
    %3775 = vmatprep.subr.mxu0 0.0
    %3776 = vmatpush2.msra.mxu0 0.0
    %3777 = vmatprep.subr.mxu0 0.0
    %3778 = vmatpush2.msra.mxu0 0.0
    %3779 = vmatprep.subr.mxu0 0.0
    %3780 = vmatpush2.msra.mxu0 0.0
    %3781 = vmatprep.subr.mxu0 0.0
    %3782 = vmatpush2.msra.mxu0 0.0
    %3783 = vmatprep.subr.mxu0 0.0
    %3784 = vmatpush2.msra.mxu0 0.0
    %3785 = vmatprep.subr.mxu0 0.0
    %3786 = vmatpush2.msra.mxu0 0.0
    %3787 = vmatprep.subr.mxu0 0.0
    %3788 = vmatpush2.msra.mxu0 0.0
    %3789 = vmatprep.mubr.f32.mxu0 0.0
    %3790 = vmatmul.mubr.f32.gmra.mxu0 %v3649
    %v3791 = vpop.f32.mrf.mxu0
    %v3792 = vadd.f32 0.0, %v3791
    %v3793 = vpop.f32.mrf.mxu0
    %v3794 = vadd.f32 0.0, %v3793
    %3795 = vdwg.mxu0
    %v3796 = vadd.f32 %v3650, %v3721
    %v3797 = vadd.f32 %v3651, %v3723
    %v3798 = vadd.f32 %v3652, %v3792
    %v3799 = vadd.f32 %v3653, %v3794
    %v3800 = vxor.u32 %v3796, 2147483648
    %v3801 = vmul.f32 %v3800, 1.442695
    %v3802 = vpow.pop %v3801
    %v3803 = vadd.f32 %v3802, 1.0
    %v3804 = vrcp.pop %v3803
    %v3805 = vmul.f32 1.0, %v3804
    %v3806 = vxor.u32 %v3797, 2147483648
    %v3807 = vmul.f32 %v3806, 1.442695
    %v3808 = vpow.pop %v3807
    %v3809 = vadd.f32 %v3808, 1.0
    %v3810 = vrcp.pop %v3809
    %v3811 = vmul.f32 1.0, %v3810
    %v3812 = vtanh.pop %v3798
    %v3813 = vxor.u32 %v3799, 2147483648
    %v3814 = vmul.f32 %v3813, 1.442695
    %v3815 = vpow.pop %v3814
    %v3816 = vadd.f32 %v3815, 1.0
    %v3817 = vrcp.pop %v3816
    %v3818 = vmul.f32 1.0, %v3817
    %v3819 = vmul.f32 %v3811, %v3647
    %v3820 = vmul.f32 %v3805, %v3812
    %v3821 = vadd.f32 %v3819, %v3820
    %v3822 = vtanh.pop %v3821
    %v3823 = vmul.f32 %v3818, %v3822
    %v3824 = vld [vmem:[#allocation3 + $0xc0] sm:$0xff]
    %v3825 = vld [vmem:[#allocation3 + $0xc8] sm:$0xff]
    %v3826 = vld [vmem:[#allocation3 + $0xd0] sm:$0xff]
    %v3827 = vld [vmem:[#allocation3 + $0xd8] sm:$0xff]
    %3828 = vmatprep.subr.mxu0 %v2781
    %3829 = vmatpush1.msra.mxu0 %v2780
    %3830 = vmatprep.subr.mxu0 %v2777
    %3831 = vmatpush1.msra.mxu0 %v2776
    %3832 = vmatprep.subr.mxu0 %v2773
    %3833 = vmatpush1.msra.mxu0 %v2772
    %3834 = vmatprep.subr.mxu0 %v2769
    %3835 = vmatpush1.msra.mxu0 %v2768
    %3836 = vmatprep.subr.mxu0 %v2765
    %3837 = vmatpush1.msra.mxu0 %v2764
    %3838 = vmatprep.subr.mxu0 %v2761
    %3839 = vmatpush1.msra.mxu0 %v2760
    %3840 = vmatprep.subr.mxu0 %v2757
    %3841 = vmatpush1.msra.mxu0 %v2756
    %3842 = vmatprep.subr.mxu0 %v2753
    %3843 = vmatpush1.msra.mxu0 %v2752
    %3844 = vmatprep.subr.mxu0 %v2749
    %3845 = vmatpush1.msra.mxu0 %v2748
    %3846 = vmatprep.subr.mxu0 %v2745
    %3847 = vmatpush1.msra.mxu0 %v2744
    %3848 = vmatprep.subr.mxu0 %v2741
    %3849 = vmatpush1.msra.mxu0 %v2740
    %3850 = vmatprep.subr.mxu0 %v2737
    %3851 = vmatpush1.msra.mxu0 %v2736
    %3852 = vmatprep.subr.mxu0 %v2733
    %3853 = vmatpush1.msra.mxu0 %v2732
    %3854 = vmatprep.subr.mxu0 %v2729
    %3855 = vmatpush1.msra.mxu0 %v2728
    %3856 = vmatprep.subr.mxu0 %v2725
    %3857 = vmatpush1.msra.mxu0 %v2724
    %3858 = vmatprep.subr.mxu0 %v2721
    %3859 = vmatpush1.msra.mxu0 %v2720
    %3860 = vmatprep.subr.mxu0 0.0
    %3861 = vmatpush2.msra.mxu0 0.0
    %3862 = vmatprep.subr.mxu0 0.0
    %3863 = vmatpush2.msra.mxu0 0.0
    %3864 = vmatprep.subr.mxu0 0.0
    %3865 = vmatpush2.msra.mxu0 0.0
    %3866 = vmatprep.subr.mxu0 0.0
    %3867 = vmatpush2.msra.mxu0 0.0
    %3868 = vmatprep.subr.mxu0 0.0
    %3869 = vmatpush2.msra.mxu0 0.0
    %3870 = vmatprep.subr.mxu0 0.0
    %3871 = vmatpush2.msra.mxu0 0.0
    %3872 = vmatprep.subr.mxu0 0.0
    %3873 = vmatpush2.msra.mxu0 0.0
    %3874 = vmatprep.subr.mxu0 0.0
    %3875 = vmatpush2.msra.mxu0 0.0
    %3876 = vmatprep.subr.mxu0 0.0
    %3877 = vmatpush2.msra.mxu0 0.0
    %3878 = vmatprep.subr.mxu0 0.0
    %3879 = vmatpush2.msra.mxu0 0.0
    %3880 = vmatprep.subr.mxu0 0.0
    %3881 = vmatpush2.msra.mxu0 0.0
    %3882 = vmatprep.subr.mxu0 0.0
    %3883 = vmatpush2.msra.mxu0 0.0
    %3884 = vmatprep.subr.mxu0 0.0
    %3885 = vmatpush2.msra.mxu0 0.0
    %3886 = vmatprep.subr.mxu0 0.0
    %3887 = vmatpush2.msra.mxu0 0.0
    %3888 = vmatprep.subr.mxu0 0.0
    %3889 = vmatpush2.msra.mxu0 0.0
    %3890 = vmatprep.subr.mxu0 0.0
    %3891 = vmatpush2.msra.mxu0 0.0
    %3892 = vmatprep.mubr.f32.mxu0 0.0
    %3893 = vmatmul.mubr.f32.gmra.mxu0 %v3823
    %v3894 = vpop.f32.mrf.mxu0
    %v3895 = vadd.f32 0.0, %v3894
    %v3896 = vpop.f32.mrf.mxu0
    %v3897 = vadd.f32 0.0, %v3896
    %3898 = vdwg.mxu0
    %3899 = vmatprep.subr.mxu0 %v2783
    %3900 = vmatpush1.msra.mxu0 %v2782
    %3901 = vmatprep.subr.mxu0 %v2779
    %3902 = vmatpush1.msra.mxu0 %v2778
    %3903 = vmatprep.subr.mxu0 %v2775
    %3904 = vmatpush1.msra.mxu0 %v2774
    %3905 = vmatprep.subr.mxu0 %v2771
    %3906 = vmatpush1.msra.mxu0 %v2770
    %3907 = vmatprep.subr.mxu0 %v2767
    %3908 = vmatpush1.msra.mxu0 %v2766
    %3909 = vmatprep.subr.mxu0 %v2763
    %3910 = vmatpush1.msra.mxu0 %v2762
    %3911 = vmatprep.subr.mxu0 %v2759
    %3912 = vmatpush1.msra.mxu0 %v2758
    %3913 = vmatprep.subr.mxu0 %v2755
    %3914 = vmatpush1.msra.mxu0 %v2754
    %3915 = vmatprep.subr.mxu0 %v2751
    %3916 = vmatpush1.msra.mxu0 %v2750
    %3917 = vmatprep.subr.mxu0 %v2747
    %3918 = vmatpush1.msra.mxu0 %v2746
    %3919 = vmatprep.subr.mxu0 %v2743
    %3920 = vmatpush1.msra.mxu0 %v2742
    %3921 = vmatprep.subr.mxu0 %v2739
    %3922 = vmatpush1.msra.mxu0 %v2738
    %3923 = vmatprep.subr.mxu0 %v2735
    %3924 = vmatpush1.msra.mxu0 %v2734
    %3925 = vmatprep.subr.mxu0 %v2731
    %3926 = vmatpush1.msra.mxu0 %v2730
    %3927 = vmatprep.subr.mxu0 %v2727
    %3928 = vmatpush1.msra.mxu0 %v2726
    %3929 = vmatprep.subr.mxu0 %v2723
    %3930 = vmatpush1.msra.mxu0 %v2722
    %3931 = vmatprep.subr.mxu0 0.0
    %3932 = vmatpush2.msra.mxu0 0.0
    %3933 = vmatprep.subr.mxu0 0.0
    %3934 = vmatpush2.msra.mxu0 0.0
    %3935 = vmatprep.subr.mxu0 0.0
    %3936 = vmatpush2.msra.mxu0 0.0
    %3937 = vmatprep.subr.mxu0 0.0
    %3938 = vmatpush2.msra.mxu0 0.0
    %3939 = vmatprep.subr.mxu0 0.0
    %3940 = vmatpush2.msra.mxu0 0.0
    %3941 = vmatprep.subr.mxu0 0.0
    %3942 = vmatpush2.msra.mxu0 0.0
    %3943 = vmatprep.subr.mxu0 0.0
    %3944 = vmatpush2.msra.mxu0 0.0
    %3945 = vmatprep.subr.mxu0 0.0
    %3946 = vmatpush2.msra.mxu0 0.0
    %3947 = vmatprep.subr.mxu0 0.0
    %3948 = vmatpush2.msra.mxu0 0.0
    %3949 = vmatprep.subr.mxu0 0.0
    %3950 = vmatpush2.msra.mxu0 0.0
    %3951 = vmatprep.subr.mxu0 0.0
    %3952 = vmatpush2.msra.mxu0 0.0
    %3953 = vmatprep.subr.mxu0 0.0
    %3954 = vmatpush2.msra.mxu0 0.0
    %3955 = vmatprep.subr.mxu0 0.0
    %3956 = vmatpush2.msra.mxu0 0.0
    %3957 = vmatprep.subr.mxu0 0.0
    %3958 = vmatpush2.msra.mxu0 0.0
    %3959 = vmatprep.subr.mxu0 0.0
    %3960 = vmatpush2.msra.mxu0 0.0
    %3961 = vmatprep.subr.mxu0 0.0
    %3962 = vmatpush2.msra.mxu0 0.0
    %3963 = vmatprep.mubr.f32.mxu0 0.0
    %3964 = vmatmul.mubr.f32.gmra.mxu0 %v3823
    %v3965 = vpop.f32.mrf.mxu0
    %v3966 = vadd.f32 0.0, %v3965
    %v3967 = vpop.f32.mrf.mxu0
    %v3968 = vadd.f32 0.0, %v3967
    %3969 = vdwg.mxu0
    %v3970 = vadd.f32 %v3824, %v3895
    %v3971 = vadd.f32 %v3825, %v3897
    %v3972 = vadd.f32 %v3826, %v3966
    %v3973 = vadd.f32 %v3827, %v3968
    %v3974 = vxor.u32 %v3970, 2147483648
    %v3975 = vmul.f32 %v3974, 1.442695
    %v3976 = vpow.pop %v3975
    %v3977 = vadd.f32 %v3976, 1.0
    %v3978 = vrcp.pop %v3977
    %v3979 = vmul.f32 1.0, %v3978
    %v3980 = vxor.u32 %v3971, 2147483648
    %v3981 = vmul.f32 %v3980, 1.442695
    %v3982 = vpow.pop %v3981
    %v3983 = vadd.f32 %v3982, 1.0
    %v3984 = vrcp.pop %v3983
    %v3985 = vmul.f32 1.0, %v3984
    %v3986 = vtanh.pop %v3972
    %v3987 = vxor.u32 %v3973, 2147483648
    %v3988 = vmul.f32 %v3987, 1.442695
    %v3989 = vpow.pop %v3988
    %v3990 = vadd.f32 %v3989, 1.0
    %v3991 = vrcp.pop %v3990
    %v3992 = vmul.f32 1.0, %v3991
    %v3993 = vmul.f32 %v3985, %v3821
    %v3994 = vmul.f32 %v3979, %v3986
    %v3995 = vadd.f32 %v3993, %v3994
    %v3996 = vtanh.pop %v3995
    %v3997 = vmul.f32 %v3992, %v3996
    %v3998 = vld [vmem:[#allocation3 + $0xe0] sm:$0xff]
    %v3999 = vld [vmem:[#allocation3 + $0xe8] sm:$0xff]
    %v4000 = vld [vmem:[#allocation3 + $0xf0] sm:$0xff]
    %v4001 = vld [vmem:[#allocation3 + $0xf8] sm:$0xff]
    %4002 = vmatprep.subr.mxu0 %v2781
    %4003 = vmatpush1.msra.mxu0 %v2780
    %4004 = vmatprep.subr.mxu0 %v2777
    %4005 = vmatpush1.msra.mxu0 %v2776
    %4006 = vmatprep.subr.mxu0 %v2773
    %4007 = vmatpush1.msra.mxu0 %v2772
    %4008 = vmatprep.subr.mxu0 %v2769
    %4009 = vmatpush1.msra.mxu0 %v2768
    %4010 = vmatprep.subr.mxu0 %v2765
    %4011 = vmatpush1.msra.mxu0 %v2764
    %4012 = vmatprep.subr.mxu0 %v2761
    %4013 = vmatpush1.msra.mxu0 %v2760
    %4014 = vmatprep.subr.mxu0 %v2757
    %4015 = vmatpush1.msra.mxu0 %v2756
    %4016 = vmatprep.subr.mxu0 %v2753
    %4017 = vmatpush1.msra.mxu0 %v2752
    %4018 = vmatprep.subr.mxu0 %v2749
    %4019 = vmatpush1.msra.mxu0 %v2748
    %4020 = vmatprep.subr.mxu0 %v2745
    %4021 = vmatpush1.msra.mxu0 %v2744
    %4022 = vmatprep.subr.mxu0 %v2741
    %4023 = vmatpush1.msra.mxu0 %v2740
    %4024 = vmatprep.subr.mxu0 %v2737
    %4025 = vmatpush1.msra.mxu0 %v2736
    %4026 = vmatprep.subr.mxu0 %v2733
    %4027 = vmatpush1.msra.mxu0 %v2732
    %4028 = vmatprep.subr.mxu0 %v2729
    %4029 = vmatpush1.msra.mxu0 %v2728
    %4030 = vmatprep.subr.mxu0 %v2725
    %4031 = vmatpush1.msra.mxu0 %v2724
    %4032 = vmatprep.subr.mxu0 %v2721
    %4033 = vmatpush1.msra.mxu0 %v2720
    %4034 = vmatprep.subr.mxu0 0.0
    %4035 = vmatpush2.msra.mxu0 0.0
    %4036 = vmatprep.subr.mxu0 0.0
    %4037 = vmatpush2.msra.mxu0 0.0
    %4038 = vmatprep.subr.mxu0 0.0
    %4039 = vmatpush2.msra.mxu0 0.0
    %4040 = vmatprep.subr.mxu0 0.0
    %4041 = vmatpush2.msra.mxu0 0.0
    %4042 = vmatprep.subr.mxu0 0.0
    %4043 = vmatpush2.msra.mxu0 0.0
    %4044 = vmatprep.subr.mxu0 0.0
    %4045 = vmatpush2.msra.mxu0 0.0
    %4046 = vmatprep.subr.mxu0 0.0
    %4047 = vmatpush2.msra.mxu0 0.0
    %4048 = vmatprep.subr.mxu0 0.0
    %4049 = vmatpush2.msra.mxu0 0.0
    %4050 = vmatprep.subr.mxu0 0.0
    %4051 = vmatpush2.msra.mxu0 0.0
    %4052 = vmatprep.subr.mxu0 0.0
    %4053 = vmatpush2.msra.mxu0 0.0
    %4054 = vmatprep.subr.mxu0 0.0
    %4055 = vmatpush2.msra.mxu0 0.0
    %4056 = vmatprep.subr.mxu0 0.0
    %4057 = vmatpush2.msra.mxu0 0.0
    %4058 = vmatprep.subr.mxu0 0.0
    %4059 = vmatpush2.msra.mxu0 0.0
    %4060 = vmatprep.subr.mxu0 0.0
    %4061 = vmatpush2.msra.mxu0 0.0
    %4062 = vmatprep.subr.mxu0 0.0
    %4063 = vmatpush2.msra.mxu0 0.0
    %4064 = vmatprep.subr.mxu0 0.0
    %4065 = vmatpush2.msra.mxu0 0.0
    %4066 = vmatprep.mubr.f32.mxu0 0.0
    %4067 = vmatmul.mubr.f32.gmra.mxu0 %v3997
    %v4068 = vpop.f32.mrf.mxu0
    %v4069 = vadd.f32 0.0, %v4068
    %v4070 = vpop.f32.mrf.mxu0
    %v4071 = vadd.f32 0.0, %v4070
    %4072 = vdwg.mxu0
    %4073 = vmatprep.subr.mxu0 %v2783
    %4074 = vmatpush1.msra.mxu0 %v2782
    %4075 = vmatprep.subr.mxu0 %v2779
    %4076 = vmatpush1.msra.mxu0 %v2778
    %4077 = vmatprep.subr.mxu0 %v2775
    %4078 = vmatpush1.msra.mxu0 %v2774
    %4079 = vmatprep.subr.mxu0 %v2771
    %4080 = vmatpush1.msra.mxu0 %v2770
    %4081 = vmatprep.subr.mxu0 %v2767
    %4082 = vmatpush1.msra.mxu0 %v2766
    %4083 = vmatprep.subr.mxu0 %v2763
    %4084 = vmatpush1.msra.mxu0 %v2762
    %4085 = vmatprep.subr.mxu0 %v2759
    %4086 = vmatpush1.msra.mxu0 %v2758
    %4087 = vmatprep.subr.mxu0 %v2755
    %4088 = vmatpush1.msra.mxu0 %v2754
    %4089 = vmatprep.subr.mxu0 %v2751
    %4090 = vmatpush1.msra.mxu0 %v2750
    %4091 = vmatprep.subr.mxu0 %v2747
    %4092 = vmatpush1.msra.mxu0 %v2746
    %4093 = vmatprep.subr.mxu0 %v2743
    %4094 = vmatpush1.msra.mxu0 %v2742
    %4095 = vmatprep.subr.mxu0 %v2739
    %4096 = vmatpush1.msra.mxu0 %v2738
    %4097 = vmatprep.subr.mxu0 %v2735
    %4098 = vmatpush1.msra.mxu0 %v2734
    %4099 = vmatprep.subr.mxu0 %v2731
    %4100 = vmatpush1.msra.mxu0 %v2730
    %4101 = vmatprep.subr.mxu0 %v2727
    %4102 = vmatpush1.msra.mxu0 %v2726
    %4103 = vmatprep.subr.mxu0 %v2723
    %4104 = vmatpush1.msra.mxu0 %v2722
    %4105 = vmatprep.subr.mxu0 0.0
    %4106 = vmatpush2.msra.mxu0 0.0
    %4107 = vmatprep.subr.mxu0 0.0
    %4108 = vmatpush2.msra.mxu0 0.0
    %4109 = vmatprep.subr.mxu0 0.0
    %4110 = vmatpush2.msra.mxu0 0.0
    %4111 = vmatprep.subr.mxu0 0.0
    %4112 = vmatpush2.msra.mxu0 0.0
    %4113 = vmatprep.subr.mxu0 0.0
    %4114 = vmatpush2.msra.mxu0 0.0
    %4115 = vmatprep.subr.mxu0 0.0
    %4116 = vmatpush2.msra.mxu0 0.0
    %4117 = vmatprep.subr.mxu0 0.0
    %4118 = vmatpush2.msra.mxu0 0.0
    %4119 = vmatprep.subr.mxu0 0.0
    %4120 = vmatpush2.msra.mxu0 0.0
    %4121 = vmatprep.subr.mxu0 0.0
    %4122 = vmatpush2.msra.mxu0 0.0
    %4123 = vmatprep.subr.mxu0 0.0
    %4124 = vmatpush2.msra.mxu0 0.0
    %4125 = vmatprep.subr.mxu0 0.0
    %4126 = vmatpush2.msra.mxu0 0.0
    %4127 = vmatprep.subr.mxu0 0.0
    %4128 = vmatpush2.msra.mxu0 0.0
    %4129 = vmatprep.subr.mxu0 0.0
    %4130 = vmatpush2.msra.mxu0 0.0
    %4131 = vmatprep.subr.mxu0 0.0
    %4132 = vmatpush2.msra.mxu0 0.0
    %4133 = vmatprep.subr.mxu0 0.0
    %4134 = vmatpush2.msra.mxu0 0.0
    %4135 = vmatprep.subr.mxu0 0.0
    %4136 = vmatpush2.msra.mxu0 0.0
    %4137 = vmatprep.mubr.f32.mxu0 0.0
    %4138 = vmatmul.mubr.f32.gmra.mxu0 %v3997
    %v4139 = vpop.f32.mrf.mxu0
    %v4140 = vadd.f32 0.0, %v4139
    %v4141 = vpop.f32.mrf.mxu0
    %v4142 = vadd.f32 0.0, %v4141
    %4143 = vdwg.mxu0
    %v4144 = vadd.f32 %v3998, %v4069
    %v4145 = vadd.f32 %v3999, %v4071
    %v4146 = vadd.f32 %v4000, %v4140
    %v4147 = vadd.f32 %v4001, %v4142
    %v4148 = vxor.u32 %v4144, 2147483648
    %v4149 = vmul.f32 %v4148, 1.442695
    %v4150 = vpow.pop %v4149
    %v4151 = vadd.f32 %v4150, 1.0
    %v4152 = vrcp.pop %v4151
    %v4153 = vmul.f32 1.0, %v4152
    %v4154 = vxor.u32 %v4145, 2147483648
    %v4155 = vmul.f32 %v4154, 1.442695
    %v4156 = vpow.pop %v4155
    %v4157 = vadd.f32 %v4156, 1.0
    %v4158 = vrcp.pop %v4157
    %v4159 = vmul.f32 1.0, %v4158
    %v4160 = vtanh.pop %v4146
    %v4161 = vxor.u32 %v4147, 2147483648
    %v4162 = vmul.f32 %v4161, 1.442695
    %v4163 = vpow.pop %v4162
    %v4164 = vadd.f32 %v4163, 1.0
    %v4165 = vrcp.pop %v4164
    %v4166 = vmul.f32 1.0, %v4165
    %v4167 = vmul.f32 %v4159, %v3995
    %v4168 = vmul.f32 %v4153, %v4160
    %v4169 = vadd.f32 %v4167, %v4168
    %v4170 = vtanh.pop %v4169
    %v4171 = vmul.f32 %v4166, %v4170
    %v4172 = vld [vmem:[#allocation11] sm:$0xff]
    %v4173 = vld [vmem:[#allocation11 + $0x8] sm:$0xff]
    %v4174 = vld [vmem:[#allocation11 + $0x10] sm:$0xff]
    %v4175 = vld [vmem:[#allocation11 + $0x18] sm:$0xff]
    %v4176 = vld [vmem:[#allocation11 + $0x20] sm:$0xff]
    %v4177 = vld [vmem:[#allocation11 + $0x28] sm:$0xff]
    %v4178 = vld [vmem:[#allocation11 + $0x30] sm:$0xff]
    %v4179 = vld [vmem:[#allocation11 + $0x38] sm:$0xff]
    %v4180 = vld [vmem:[#allocation11 + $0x40] sm:$0xff]
    %v4181 = vld [vmem:[#allocation11 + $0x48] sm:$0xff]
    %v4182 = vld [vmem:[#allocation11 + $0x50] sm:$0xff]
    %v4183 = vld [vmem:[#allocation11 + $0x58] sm:$0xff]
    %v4184 = vld [vmem:[#allocation11 + $0x60] sm:$0xff]
    %v4185 = vld [vmem:[#allocation11 + $0x68] sm:$0xff]
    %v4186 = vld [vmem:[#allocation11 + $0x70] sm:$0xff]
    %v4187 = vld [vmem:[#allocation11 + $0x78] sm:$0xff]
    %v4188 = vld [vmem:[%s8] sm:$0x1]
    %v4190 = vlaneseq
    %v4191 = vshrl.u32 %v4190, 7
    %v4192 = vsub.s32 0, %v4191
    %v4193 = vrot.slane %v4188, %v4192
    %4195 = vmatprep.subr.mxu0 0.0
    %4196 = vmatpush1.msra.mxu0 %v4187
    %4197 = vmatprep.subr.mxu0 0.0
    %4198 = vmatpush1.msra.mxu0 %v4186
    %4199 = vmatprep.subr.mxu0 0.0
    %4200 = vmatpush1.msra.mxu0 %v4185
    %4201 = vmatprep.subr.mxu0 0.0
    %4202 = vmatpush1.msra.mxu0 %v4184
    %4203 = vmatprep.subr.mxu0 0.0
    %4204 = vmatpush1.msra.mxu0 %v4183
    %4205 = vmatprep.subr.mxu0 0.0
    %4206 = vmatpush1.msra.mxu0 %v4182
    %4207 = vmatprep.subr.mxu0 0.0
    %4208 = vmatpush1.msra.mxu0 %v4181
    %4209 = vmatprep.subr.mxu0 0.0
    %4210 = vmatpush1.msra.mxu0 %v4180
    %4211 = vmatprep.subr.mxu0 0.0
    %4212 = vmatpush1.msra.mxu0 %v4179
    %4213 = vmatprep.subr.mxu0 0.0
    %4214 = vmatpush1.msra.mxu0 %v4178
    %4215 = vmatprep.subr.mxu0 0.0
    %4216 = vmatpush1.msra.mxu0 %v4177
    %4217 = vmatprep.subr.mxu0 0.0
    %4218 = vmatpush1.msra.mxu0 %v4176
    %4219 = vmatprep.subr.mxu0 0.0
    %4220 = vmatpush1.msra.mxu0 %v4175
    %4221 = vmatprep.subr.mxu0 0.0
    %4222 = vmatpush1.msra.mxu0 %v4174
    %4223 = vmatprep.subr.mxu0 0.0
    %4224 = vmatpush1.msra.mxu0 %v4173
    %4225 = vmatprep.subr.mxu0 0.0
    %4226 = vmatpush1.msra.mxu0 %v4172
    %4227 = vmatprep.subr.mxu0 0.0
    %4228 = vmatpush2.msra.mxu0 0.0
    %4229 = vmatprep.subr.mxu0 0.0
    %4230 = vmatpush2.msra.mxu0 0.0
    %4231 = vmatprep.subr.mxu0 0.0
    %4232 = vmatpush2.msra.mxu0 0.0
    %4233 = vmatprep.subr.mxu0 0.0
    %4234 = vmatpush2.msra.mxu0 0.0
    %4235 = vmatprep.subr.mxu0 0.0
    %4236 = vmatpush2.msra.mxu0 0.0
    %4237 = vmatprep.subr.mxu0 0.0
    %4238 = vmatpush2.msra.mxu0 0.0
    %4239 = vmatprep.subr.mxu0 0.0
    %4240 = vmatpush2.msra.mxu0 0.0
    %4241 = vmatprep.subr.mxu0 0.0
    %4242 = vmatpush2.msra.mxu0 0.0
    %4243 = vmatprep.subr.mxu0 0.0
    %4244 = vmatpush2.msra.mxu0 0.0
    %4245 = vmatprep.subr.mxu0 0.0
    %4246 = vmatpush2.msra.mxu0 0.0
    %4247 = vmatprep.subr.mxu0 0.0
    %4248 = vmatpush2.msra.mxu0 0.0
    %4249 = vmatprep.subr.mxu0 0.0
    %4250 = vmatpush2.msra.mxu0 0.0
    %4251 = vmatprep.subr.mxu0 0.0
    %4252 = vmatpush2.msra.mxu0 0.0
    %4253 = vmatprep.subr.mxu0 0.0
    %4254 = vmatpush2.msra.mxu0 0.0
    %4255 = vmatprep.subr.mxu0 0.0
    %4256 = vmatpush2.msra.mxu0 0.0
    %4257 = vmatprep.subr.mxu0 0.0
    %4258 = vmatpush2.msra.mxu0 0.0
    %4259 = vmatprep.mubr.f32.mxu0 0.0
    %4260 = vmatmul.mubr.f32.gmra.mxu0 %v4171
    %v4261 = vpop.f32.mrf.mxu0
    %v4262 = vadd.f32 %v4193, %v4261
    %v4263 = vpop.f32.mrf.mxu0
    %4264 = vdwg.mxu0
    %4265 = vst [vmem:[%s9] sm:$0xff] %v4262
    // Predicated region
    $region58: #{lstm_forward.1} parent=1 // pred_check
      _
    $region59: #{lstm_forward.1} parent=1 // pred_check_branch
      %4267 = sbr.rel (0) target = $region61
    $region60: #{lstm_forward.1} parent=1 // pred_region
      _
    $region61: #{lstm_forward.1} parent=1 // pred_fallthru
      _
    // Predicated region
    $region62: #{lstm_forward.1} parent=1 // pred_check
      _
    $region63: #{lstm_forward.1} parent=1 // pred_check_branch
      %4269 = sbr.rel (0) target = $region65
    $region64: #{lstm_forward.1} parent=1 // pred_region
      _
    $region65: #{lstm_forward.1} parent=1 // pred_fallthru
      _
    %4270 = vsyncpa [#allocation5], 1
    %4271 = vsyncpa [#allocation7], 1
    %4272 = vsyncpa [#allocation10], 1

</llo_original>
